<compile_context>
chip_gen: v6e
topology: v6e:2x2x1
jax: 0.10.0
libtpu: 0.0.40
codegen_flags: <defaults>
</compile_context>

<pallas_src>
import functools

import jax
import jax.numpy as jnp
from jax.experimental import pallas as pl
from jax.experimental.pallas import tpu as pltpu


def _round_up(x, m):
    return (x + m - 1) // m * m


def _pick_tile_rows(H, W, max_rows=512):
    """Largest divisor TH of H with TH*W <= max_rows and (TH*W) % 8 == 0."""
    best = None
    for th in range(1, H + 1):
        if H % th == 0 and th * W <= max_rows and (th * W) % 8 == 0:
            best = th
    return best if best is not None else H


def scale_pred_kernel(x_ref, w1_ref, s1_ref, c1_ref, w2_ref, b2_ref, out_ref,
                      xpad_ref):
    # x_ref:   (1, H, W, Cin) bf16 — resident for the whole batch element
    # w1_ref:  (9, Cin, C1p)  bf16 — 3x3 conv weights, tap-major (dy*3 + dx)
    # s1_ref:  (1, C1p)  f32  — folded BN scale (zero-padded)
    # c1_ref:  (1, C1p)  f32  — folded BN bias  (zero-padded)
    # w2_ref:  (C1p, C2p) bf16 — 1x1 conv weights (zero-padded)
    # b2_ref:  (1, C2p)  f32  — 1x1 conv bias (zero-padded)
    # out_ref: (1, TM, C2p) f32 — lane-dense output tile, TM = TILE_ROWS * W
    # xpad_ref: VMEM scratch (H+2, W+2, Cin) bf16, persists across grid steps
    H, W, Cin = x_ref.shape[1], x_ref.shape[2], x_ref.shape[3]
    TM = out_ref.shape[1]
    TH = TM // W

    t = pl.program_id(1)

    # Fill the "same"-padded input once per batch element (first tile only).
    @pl.when(t == 0)
    def _():
        xpad_ref[...] = jnp.zeros_like(xpad_ref)
        xpad_ref[1:H + 1, 1:W + 1, :] = x_ref[0]

    r0 = t * TH  # first output row of this tile

    # 3x3 conv as 9 accumulating matmuls; only one (TM, Cin) tap live at once.
    acc = None
    for dy in range(3):
        for dx in range(3):
            tap = xpad_ref[pl.ds(r0 + dy, TH), dx:dx + W, :].reshape(TM, Cin)
            contrib = jnp.dot(tap, w1_ref[dy * 3 + dx],
                              preferred_element_type=jnp.float32)
            acc = contrib if acc is None else acc + contrib

    # Folded BatchNorm (eval / running-stats) + LeakyReLU(0.1), in f32.
    y = acc * s1_ref[0] + c1_ref[0]
    y = jnp.maximum(y, 0.1 * y)

    # 1x1 conv with bias; output lanes already padded to a 128 multiple.
    z = jnp.dot(y.astype(w2_ref.dtype), w2_ref[...],
                preferred_element_type=jnp.float32) + b2_ref[0]

    out_ref[0] = z  # unmasked, lane-dense store


def scale_prediction(x_nchw, w1, bn_scale, bn_bias, w2, b2, num_classes,
                     tile_rows=None):
    """Forward pass of ScalePrediction.

    x_nchw: (B, Cin, H, W) float32 (PyTorch layout).
    Returns (B, 3, H, W, num_classes + 5) matching the PyTorch module.
    """
    B, Cin, H, W = x_nchw.shape
    C1 = w1.shape[-1]
    C2 = w2.shape[-1]
    assert C2 == 3 * (num_classes + 5)

    C1p = _round_up(C1, 128)
    C2p = _round_up(C2, 128)

    TH = tile_rows if tile_rows is not None else _pick_tile_rows(H, W)
    assert H % TH == 0, "tile_rows must divide H"
    TM = TH * W
    assert TM % 8 == 0 or TM == H * W, "tile M dim must be sublane aligned"
    n_tiles = H // TH

    # NHWC activations in bf16 (MXU-native); elementwise params stay f32.
    # TODO(synk): accepting NHWC input directly would remove this transpose pass.
    x = jnp.transpose(x_nchw, (0, 2, 3, 1)).astype(jnp.bfloat16)

    w1p = jnp.pad(w1, ((0, 0), (0, 0), (0, 0), (0, C1p - C1)))
    w1p = w1p.reshape(9, Cin, C1p).astype(jnp.bfloat16)     # tap-major (dy*3+dx)
    s1 = jnp.pad(bn_scale, (0, C1p - C1)).astype(jnp.float32)[None, :]
    c1 = jnp.pad(bn_bias, (0, C1p - C1)).astype(jnp.float32)[None, :]
    w2p = jnp.pad(w2, ((0, C1p - C1), (0, C2p - C2))).astype(jnp.bfloat16)
    b2p = jnp.pad(b2, (0, C2p - C2)).astype(jnp.float32)[None, :]

    flops = 2 * B * H * W * (9 * Cin * C1p + C1p * C2p)
    bytes_accessed = (x.size * 2 + w1p.size * 2 + w2p.size * 2
                      + (s1.size + c1.size + b2p.size) * 4
                      + B * H * W * C2p * 4)

    # VMEM budget: double-buffered activation/output blocks + resident weights
    # + halo scratch + f32 intermediates, 2x headroom, clamped [16, 64] MiB.
    est = (2 * (H * W * Cin * 2 + TM * C2p * 4)
           + 2 * (9 * Cin * C1p * 2 + C1p * C2p * 2 + (2 * C1p + C2p) * 4)
           + (H + 2) * (W + 2) * Cin * 2
           + TM * (2 * C1p + C2p) * 4)
    vmem_limit = int(min(64 * 1024 * 1024, max(16 * 1024 * 1024, 2 * est)))

    out = pl.pallas_call(
        scale_pred_kernel,
        out_shape=jax.ShapeDtypeStruct((B, H * W, C2p), jnp.float32),
        grid=(B, n_tiles),
        in_specs=[
            pl.BlockSpec((1, H, W, Cin), lambda b, t: (b, 0, 0, 0)),
            pl.BlockSpec((9, Cin, C1p), lambda b, t: (0, 0, 0)),
            pl.BlockSpec((1, C1p), lambda b, t: (0, 0)),
            pl.BlockSpec((1, C1p), lambda b, t: (0, 0)),
            pl.BlockSpec((C1p, C2p), lambda b, t: (0, 0)),
            pl.BlockSpec((1, C2p), lambda b, t: (0, 0)),
        ],
        out_specs=pl.BlockSpec((1, TM, C2p), lambda b, t: (b, t, 0)),
        scratch_shapes=[pltpu.VMEM((H + 2, W + 2, Cin), jnp.bfloat16)],
        compiler_params=pltpu.CompilerParams(
            dimension_semantics=("parallel", "arbitrary"),
            vmem_limit_bytes=vmem_limit),
        cost_estimate=pl.CostEstimate(
            flops=flops, transcendentals=0, bytes_accessed=bytes_accessed),
    )(x, w1p, s1, c1, w2p, b2p)

    # (B, H*W, C2p) -> trim pad -> (B, H, W, 3, nc+5) -> (B, 3, H, W, nc+5)
    out = out[:, :, :C2].reshape(B, H, W, 3, num_classes + 5)
    return jnp.transpose(out, (0, 3, 1, 2, 4))


def reference(x_nchw, w1, bn_scale, bn_bias, w2, b2, num_classes):
    """Pure-JAX reference mirroring the kernel's bf16 quantization points."""
    B, Cin, H, W = x_nchw.shape
    x = jnp.transpose(x_nchw, (0, 2, 3, 1)).astype(jnp.bfloat16).astype(jnp.float32)
    w1f = w1.astype(jnp.bfloat16).astype(jnp.float32)
    y = jax.lax.conv_general_dilated(
        x, w1f, window_strides=(1, 1), padding="SAME",
        dimension_numbers=("NHWC", "HWIO", "NHWC"),
        precision=jax.lax.Precision.HIGHEST)
    y = y * bn_scale + bn_bias
    y = jnp.where(y > 0, y, 0.1 * y)
    yb = y.astype(jnp.bfloat16).astype(jnp.float32)
    w2f = w2.astype(jnp.bfloat16).astype(jnp.float32)
    z = jnp.einsum("bhwc,co->bhwo", yb, w2f,
                   precision=jax.lax.Precision.HIGHEST) + b2
    z5 = z.reshape(B, H, W, 3, num_classes + 5)
    return jnp.transpose(z5, (0, 3, 1, 2, 4))


if __name__ == "__main__":
    # Small shapes: B=2, in_channels=8, H=W=16, num_classes=3
    B, Cin, H, W = 2, 8, 16, 16
    num_classes = 3
    C1 = 2 * Cin                       # first CNNBlock output channels
    C2 = 3 * (num_classes + 5)         # second CNNBlock output channels

    key = jax.random.PRNGKey(0)
    ks = jax.random.split(key, 8)

    x = jax.random.normal(ks[0], (B, Cin, H, W), jnp.float32)

    # Conv1: kernel_size=3, padding=1, bias=False (BN follows). HWIO layout.
    w1 = 0.1 * jax.random.normal(ks[1], (3, 3, Cin, C1), jnp.float32)
    # BatchNorm2d params folded to scale/bias (eval / running-stats semantics).
    gamma = 1.0 + 0.1 * jax.random.normal(ks[2], (C1,), jnp.float32)
    beta = 0.1 * jax.random.normal(ks[3], (C1,), jnp.float32)
    run_mean = 0.1 * jax.random.normal(ks[4], (C1,), jnp.float32)
    run_var = 1.0 + 0.1 * jnp.abs(jax.random.normal(ks[5], (C1,), jnp.float32))
    eps = 1e-5
    bn_scale = gamma / jnp.sqrt(run_var + eps)
    bn_bias = beta - run_mean * bn_scale
    # TODO(synk): PyTorch BatchNorm2d in train mode uses batch statistics;
    # inference (running-stats) semantics are implemented here.

    # Conv2: kernel_size=1, bias=True.
    w2 = 0.1 * jax.random.normal(ks[6], (C1, C2), jnp.float32)
    b2 = 0.1 * jax.random.normal(ks[7], (C2,), jnp.float32)

    # tile_rows=8 -> 2 spatial tiles per batch element (exercises the tiled path).
    fwd = jax.jit(functools.partial(scale_prediction, num_classes=num_classes,
                                    tile_rows=8))
    out = jax.block_until_ready(fwd(x, w1, bn_scale, bn_bias, w2, b2))

    ref = reference(x, w1, bn_scale, bn_bias, w2, b2, num_classes)
    assert out.shape == (B, 3, H, W, num_classes + 5), out.shape
    assert jnp.allclose(out, ref, atol=1e-2, rtol=1e-2), (
        "mismatch vs reference, max abs err = %f"
        % float(jnp.max(jnp.abs(out - ref))))

    print("KERNEL_OK")
</pallas_src>

<mosaic_0001>
module attributes {stable_mosaic.version = 11 : i64} {
  func.func @scale_pred_kernel(%arg0: i32, %arg1: i32, %arg2: memref<1x16x16x8xbf16, #tpu.memory_space<vmem>>, %arg3: memref<9x8x128xbf16, #tpu.memory_space<vmem>>, %arg4: memref<1x128xf32, #tpu.memory_space<vmem>>, %arg5: memref<1x128xf32, #tpu.memory_space<vmem>>, %arg6: memref<128x128xbf16, #tpu.memory_space<vmem>>, %arg7: memref<1x128xf32, #tpu.memory_space<vmem>>, %arg8: memref<1x128x128xf32, #tpu.memory_space<vmem>>, %arg9: memref<18x18x8xbf16, #tpu.memory_space<vmem>>) attributes {dimension_semantics = [#tpu.dimension_semantics<parallel>, #tpu.dimension_semantics<arbitrary>], iteration_bounds = array<i64: 2, 2>, scalar_prefetch = 0 : i64, scratch_operands = 1 : i64, tpu.core_type = #tpu.core_type<tc>, window_params = [{transform_indices = @transform_0, window_bounds = array<i64: 1, 16, 16, 8>}, {pipeline_mode = #tpu.pipeline_mode<synchronous>, transform_indices = @transform_1, window_bounds = array<i64: 9, 8, 128>}, {pipeline_mode = #tpu.pipeline_mode<synchronous>, transform_indices = @transform_2, window_bounds = array<i64: 1, 128>}, {pipeline_mode = #tpu.pipeline_mode<synchronous>, transform_indices = @transform_3, window_bounds = array<i64: 1, 128>}, {pipeline_mode = #tpu.pipeline_mode<synchronous>, transform_indices = @transform_4, window_bounds = array<i64: 128, 128>}, {pipeline_mode = #tpu.pipeline_mode<synchronous>, transform_indices = @transform_5, window_bounds = array<i64: 1, 128>}, {transform_indices = @transform_6, window_bounds = array<i64: 1, 128, 128>}]} {
    %c0_i32 = arith.constant 0 : i32
    %0 = arith.cmpi eq, %arg1, %c0_i32 : i32
    %1 = arith.extui %0 : i1 to i32
    %c0_i32_0 = arith.constant 0 : i32
    %2 = arith.cmpi ne, %1, %c0_i32_0 : i32
    scf.if %2 {
      %cst_65 = arith.constant 0.000000e+00 : bf16
      %99 = vector.broadcast %cst_65 : bf16 to vector<18x18x8xbf16>
      %c0_66 = arith.constant 0 : index
      %c0_67 = arith.constant 0 : index
      %c0_68 = arith.constant 0 : index
      %100 = vector.load %arg9[%c0_66, %c0_67, %c0_68] : memref<18x18x8xbf16, #tpu.memory_space<vmem>>, vector<18x18x8xbf16>
      tpu.vector_store %arg9[%c0_66, %c0_67, %c0_68], %99 {strides = array<i32>} : memref<18x18x8xbf16, #tpu.memory_space<vmem>>, vector<18x18x8xbf16>,
      %c0_69 = arith.constant 0 : index
      %c0_70 = arith.constant 0 : index
      %c0_71 = arith.constant 0 : index
      %c0_72 = arith.constant 0 : index
      %101 = vector.load %arg2[%c0_69, %c0_70, %c0_71, %c0_72] : memref<1x16x16x8xbf16, #tpu.memory_space<vmem>>, vector<1x16x16x8xbf16>
      %102 = vector.shape_cast %101 : vector<1x16x16x8xbf16> to vector<16x16x8xbf16>
      %c1_73 = arith.constant 1 : index
      %c1_74 = arith.constant 1 : index
      %c0_75 = arith.constant 0 : index
      %103 = vector.load %arg9[%c1_73, %c1_74, %c0_75] : memref<18x18x8xbf16, #tpu.memory_space<vmem>>, vector<16x16x8xbf16>
      tpu.vector_store %arg9[%c1_73, %c1_74, %c0_75], %102 {strides = array<i32>} : memref<18x18x8xbf16, #tpu.memory_space<vmem>>, vector<16x16x8xbf16>,
    } else {
    }
    %c8_i32 = arith.constant 8 : i32
    %3 = arith.muli %arg1, %c8_i32 : i32
    %c0_i32_1 = arith.constant 0 : i32
    %4 = arith.addi %3, %c0_i32_1 : i32
    %5 = arith.index_cast %4 : i32 to index
    %c0 = arith.constant 0 : index
    %c0_2 = arith.constant 0 : index
    %6 = vector.load %arg9[%5, %c0, %c0_2] : memref<18x18x8xbf16, #tpu.memory_space<vmem>>, vector<8x16x8xbf16>
    %7 = vector.shape_cast %6 : vector<8x16x8xbf16> to vector<128x8xbf16>
    %c0_3 = arith.constant 0 : index
    %c0_4 = arith.constant 0 : index
    %c0_5 = arith.constant 0 : index
    %8 = vector.load %arg3[%c0_3, %c0_4, %c0_5] : memref<9x8x128xbf16, #tpu.memory_space<vmem>>, vector<1x8x128xbf16>
    %9 = vector.shape_cast %8 : vector<1x8x128xbf16> to vector<8x128xbf16>
    %cst = arith.constant dense<0.000000e+00> : vector<128x128xf32>
    %10 = tpu.matmul %7, %9, %cst {dimension_numbers = #tpu.dot_dimension_numbers<[1], [0], [0], [1], [0, 0, 1, 1], [], []>} : vector<128x8xbf16>, vector<8x128xbf16>, vector<128x128xf32> -> vector<128x128xf32>
    %c0_i32_6 = arith.constant 0 : i32
    %11 = arith.addi %3, %c0_i32_6 : i32
    %12 = arith.index_cast %11 : i32 to index
    %c1 = arith.constant 1 : index
    %c0_7 = arith.constant 0 : index
    %13 = vector.load %arg9[%12, %c1, %c0_7] : memref<18x18x8xbf16, #tpu.memory_space<vmem>>, vector<8x16x8xbf16>
    %14 = vector.shape_cast %13 : vector<8x16x8xbf16> to vector<128x8xbf16>
    %c1_8 = arith.constant 1 : index
    %c0_9 = arith.constant 0 : index
    %c0_10 = arith.constant 0 : index
    %15 = vector.load %arg3[%c1_8, %c0_9, %c0_10] : memref<9x8x128xbf16, #tpu.memory_space<vmem>>, vector<1x8x128xbf16>
    %16 = vector.shape_cast %15 : vector<1x8x128xbf16> to vector<8x128xbf16>
    %cst_11 = arith.constant dense<0.000000e+00> : vector<128x128xf32>
    %17 = tpu.matmul %14, %16, %cst_11 {dimension_numbers = #tpu.dot_dimension_numbers<[1], [0], [0], [1], [0, 0, 1, 1], [], []>} : vector<128x8xbf16>, vector<8x128xbf16>, vector<128x128xf32> -> vector<128x128xf32>
    %18 = arith.addf %10, %17 : vector<128x128xf32>
    %c0_i32_12 = arith.constant 0 : i32
    %19 = arith.addi %3, %c0_i32_12 : i32
    %20 = arith.index_cast %19 : i32 to index
    %c2 = arith.constant 2 : index
    %c0_13 = arith.constant 0 : index
    %21 = vector.load %arg9[%20, %c2, %c0_13] : memref<18x18x8xbf16, #tpu.memory_space<vmem>>, vector<8x16x8xbf16>
    %22 = vector.shape_cast %21 : vector<8x16x8xbf16> to vector<128x8xbf16>
    %c2_14 = arith.constant 2 : index
    %c0_15 = arith.constant 0 : index
    %c0_16 = arith.constant 0 : index
    %23 = vector.load %arg3[%c2_14, %c0_15, %c0_16] : memref<9x8x128xbf16, #tpu.memory_space<vmem>>, vector<1x8x128xbf16>
    %24 = vector.shape_cast %23 : vector<1x8x128xbf16> to vector<8x128xbf16>
    %cst_17 = arith.constant dense<0.000000e+00> : vector<128x128xf32>
    %25 = tpu.matmul %22, %24, %cst_17 {dimension_numbers = #tpu.dot_dimension_numbers<[1], [0], [0], [1], [0, 0, 1, 1], [], []>} : vector<128x8xbf16>, vector<8x128xbf16>, vector<128x128xf32> -> vector<128x128xf32>
    %26 = arith.addf %18, %25 : vector<128x128xf32>
    %c1_i32 = arith.constant 1 : i32
    %27 = arith.addi %3, %c1_i32 : i32
    %28 = arith.index_cast %27 : i32 to index
    %c0_18 = arith.constant 0 : index
    %c0_19 = arith.constant 0 : index
    %29 = vector.load %arg9[%28, %c0_18, %c0_19] : memref<18x18x8xbf16, #tpu.memory_space<vmem>>, vector<8x16x8xbf16>
    %30 = vector.shape_cast %29 : vector<8x16x8xbf16> to vector<128x8xbf16>
    %c3 = arith.constant 3 : index
    %c0_20 = arith.constant 0 : index
    %c0_21 = arith.constant 0 : index
    %31 = vector.load %arg3[%c3, %c0_20, %c0_21] : memref<9x8x128xbf16, #tpu.memory_space<vmem>>, vector<1x8x128xbf16>
    %32 = vector.shape_cast %31 : vector<1x8x128xbf16> to vector<8x128xbf16>
    %cst_22 = arith.constant dense<0.000000e+00> : vector<128x128xf32>
    %33 = tpu.matmul %30, %32, %cst_22 {dimension_numbers = #tpu.dot_dimension_numbers<[1], [0], [0], [1], [0, 0, 1, 1], [], []>} : vector<128x8xbf16>, vector<8x128xbf16>, vector<128x128xf32> -> vector<128x128xf32>
    %34 = arith.addf %26, %33 : vector<128x128xf32>
    %c1_i32_23 = arith.constant 1 : i32
    %35 = arith.addi %3, %c1_i32_23 : i32
    %36 = arith.index_cast %35 : i32 to index
    %c1_24 = arith.constant 1 : index
    %c0_25 = arith.constant 0 : index
    %37 = vector.load %arg9[%36, %c1_24, %c0_25] : memref<18x18x8xbf16, #tpu.memory_space<vmem>>, vector<8x16x8xbf16>
    %38 = vector.shape_cast %37 : vector<8x16x8xbf16> to vector<128x8xbf16>
    %c4 = arith.constant 4 : index
    %c0_26 = arith.constant 0 : index
    %c0_27 = arith.constant 0 : index
    %39 = vector.load %arg3[%c4, %c0_26, %c0_27] : memref<9x8x128xbf16, #tpu.memory_space<vmem>>, vector<1x8x128xbf16>
    %40 = vector.shape_cast %39 : vector<1x8x128xbf16> to vector<8x128xbf16>
    %cst_28 = arith.constant dense<0.000000e+00> : vector<128x128xf32>
    %41 = tpu.matmul %38, %40, %cst_28 {dimension_numbers = #tpu.dot_dimension_numbers<[1], [0], [0], [1], [0, 0, 1, 1], [], []>} : vector<128x8xbf16>, vector<8x128xbf16>, vector<128x128xf32> -> vector<128x128xf32>
    %42 = arith.addf %34, %41 : vector<128x128xf32>
    %c1_i32_29 = arith.constant 1 : i32
    %43 = arith.addi %3, %c1_i32_29 : i32
    %44 = arith.index_cast %43 : i32 to index
    %c2_30 = arith.constant 2 : index
    %c0_31 = arith.constant 0 : index
    %45 = vector.load %arg9[%44, %c2_30, %c0_31] : memref<18x18x8xbf16, #tpu.memory_space<vmem>>, vector<8x16x8xbf16>
    %46 = vector.shape_cast %45 : vector<8x16x8xbf16> to vector<128x8xbf16>
    %c5 = arith.constant 5 : index
    %c0_32 = arith.constant 0 : index
    %c0_33 = arith.constant 0 : index
    %47 = vector.load %arg3[%c5, %c0_32, %c0_33] : memref<9x8x128xbf16, #tpu.memory_space<vmem>>, vector<1x8x128xbf16>
    %48 = vector.shape_cast %47 : vector<1x8x128xbf16> to vector<8x128xbf16>
    %cst_34 = arith.constant dense<0.000000e+00> : vector<128x128xf32>
    %49 = tpu.matmul %46, %48, %cst_34 {dimension_numbers = #tpu.dot_dimension_numbers<[1], [0], [0], [1], [0, 0, 1, 1], [], []>} : vector<128x8xbf16>, vector<8x128xbf16>, vector<128x128xf32> -> vector<128x128xf32>
    %50 = arith.addf %42, %49 : vector<128x128xf32>
    %c2_i32 = arith.constant 2 : i32
    %51 = arith.addi %3, %c2_i32 : i32
    %52 = arith.index_cast %51 : i32 to index
    %c0_35 = arith.constant 0 : index
    %c0_36 = arith.constant 0 : index
    %53 = vector.load %arg9[%52, %c0_35, %c0_36] : memref<18x18x8xbf16, #tpu.memory_space<vmem>>, vector<8x16x8xbf16>
    %54 = vector.shape_cast %53 : vector<8x16x8xbf16> to vector<128x8xbf16>
    %c6 = arith.constant 6 : index
    %c0_37 = arith.constant 0 : index
    %c0_38 = arith.constant 0 : index
    %55 = vector.load %arg3[%c6, %c0_37, %c0_38] : memref<9x8x128xbf16, #tpu.memory_space<vmem>>, vector<1x8x128xbf16>
    %56 = vector.shape_cast %55 : vector<1x8x128xbf16> to vector<8x128xbf16>
    %cst_39 = arith.constant dense<0.000000e+00> : vector<128x128xf32>
    %57 = tpu.matmul %54, %56, %cst_39 {dimension_numbers = #tpu.dot_dimension_numbers<[1], [0], [0], [1], [0, 0, 1, 1], [], []>} : vector<128x8xbf16>, vector<8x128xbf16>, vector<128x128xf32> -> vector<128x128xf32>
    %58 = arith.addf %50, %57 : vector<128x128xf32>
    %c2_i32_40 = arith.constant 2 : i32
    %59 = arith.addi %3, %c2_i32_40 : i32
    %60 = arith.index_cast %59 : i32 to index
    %c1_41 = arith.constant 1 : index
    %c0_42 = arith.constant 0 : index
    %61 = vector.load %arg9[%60, %c1_41, %c0_42] : memref<18x18x8xbf16, #tpu.memory_space<vmem>>, vector<8x16x8xbf16>
    %62 = vector.shape_cast %61 : vector<8x16x8xbf16> to vector<128x8xbf16>
    %c7 = arith.constant 7 : index
    %c0_43 = arith.constant 0 : index
    %c0_44 = arith.constant 0 : index
    %63 = vector.load %arg3[%c7, %c0_43, %c0_44] : memref<9x8x128xbf16, #tpu.memory_space<vmem>>, vector<1x8x128xbf16>
    %64 = vector.shape_cast %63 : vector<1x8x128xbf16> to vector<8x128xbf16>
    %cst_45 = arith.constant dense<0.000000e+00> : vector<128x128xf32>
    %65 = tpu.matmul %62, %64, %cst_45 {dimension_numbers = #tpu.dot_dimension_numbers<[1], [0], [0], [1], [0, 0, 1, 1], [], []>} : vector<128x8xbf16>, vector<8x128xbf16>, vector<128x128xf32> -> vector<128x128xf32>
    %66 = arith.addf %58, %65 : vector<128x128xf32>
    %c2_i32_46 = arith.constant 2 : i32
    %67 = arith.addi %3, %c2_i32_46 : i32
    %68 = arith.index_cast %67 : i32 to index
    %c2_47 = arith.constant 2 : index
    %c0_48 = arith.constant 0 : index
    %69 = vector.load %arg9[%68, %c2_47, %c0_48] : memref<18x18x8xbf16, #tpu.memory_space<vmem>>, vector<8x16x8xbf16>
    %70 = vector.shape_cast %69 : vector<8x16x8xbf16> to vector<128x8xbf16>
    %c8 = arith.constant 8 : index
    %c0_49 = arith.constant 0 : index
    %c0_50 = arith.constant 0 : index
    %71 = vector.load %arg3[%c8, %c0_49, %c0_50] : memref<9x8x128xbf16, #tpu.memory_space<vmem>>, vector<1x8x128xbf16>
    %72 = vector.shape_cast %71 : vector<1x8x128xbf16> to vector<8x128xbf16>
    %cst_51 = arith.constant dense<0.000000e+00> : vector<128x128xf32>
    %73 = tpu.matmul %70, %72, %cst_51 {dimension_numbers = #tpu.dot_dimension_numbers<[1], [0], [0], [1], [0, 0, 1, 1], [], []>} : vector<128x8xbf16>, vector<8x128xbf16>, vector<128x128xf32> -> vector<128x128xf32>
    %74 = arith.addf %66, %73 : vector<128x128xf32>
    %c0_52 = arith.constant 0 : index
    %c0_53 = arith.constant 0 : index
    %75 = vector.load %arg4[%c0_52, %c0_53] : memref<1x128xf32, #tpu.memory_space<vmem>>, vector<1x128xf32>
    %76 = vector.shape_cast %75 : vector<1x128xf32> to vector<128xf32>
    %77 = vector.shape_cast %76 : vector<128xf32> to vector<1x128xf32>
    %78 = vector.broadcast %77 : vector<1x128xf32> to vector<128x128xf32>
    %79 = arith.mulf %74, %78 : vector<128x128xf32>
    %c0_54 = arith.constant 0 : index
    %c0_55 = arith.constant 0 : index
    %80 = vector.load %arg5[%c0_54, %c0_55] : memref<1x128xf32, #tpu.memory_space<vmem>>, vector<1x128xf32>
    %81 = vector.shape_cast %80 : vector<1x128xf32> to vector<128xf32>
    %82 = vector.shape_cast %81 : vector<128xf32> to vector<1x128xf32>
    %83 = vector.broadcast %82 : vector<1x128xf32> to vector<128x128xf32>
    %84 = arith.addf %79, %83 : vector<128x128xf32>
    %cst_56 = arith.constant 1.000000e-01 : f32
    %85 = vector.broadcast %cst_56 : f32 to vector<128x128xf32>
    %86 = arith.mulf %85, %84 : vector<128x128xf32>
    %87 = arith.maximumf %84, %86 : vector<128x128xf32>
    %88 = arith.truncf %87 : vector<128x128xf32> to vector<128x128xbf16>
    %c0_57 = arith.constant 0 : index
    %c0_58 = arith.constant 0 : index
    %89 = vector.load %arg6[%c0_57, %c0_58] : memref<128x128xbf16, #tpu.memory_space<vmem>>, vector<128x128xbf16>
    %cst_59 = arith.constant dense<0.000000e+00> : vector<128x128xf32>
    %90 = tpu.matmul %88, %89, %cst_59 {dimension_numbers = #tpu.dot_dimension_numbers<[1], [0], [0], [1], [0, 0, 1, 1], [], []>} : vector<128x128xbf16>, vector<128x128xbf16>, vector<128x128xf32> -> vector<128x128xf32>
    %c0_60 = arith.constant 0 : index
    %c0_61 = arith.constant 0 : index
    %91 = vector.load %arg7[%c0_60, %c0_61] : memref<1x128xf32, #tpu.memory_space<vmem>>, vector<1x128xf32>
    %92 = vector.shape_cast %91 : vector<1x128xf32> to vector<128xf32>
    %93 = vector.shape_cast %92 : vector<128xf32> to vector<1x128xf32>
    %94 = vector.broadcast %93 : vector<1x128xf32> to vector<128x128xf32>
    %95 = arith.addf %90, %94 : vector<128x128xf32>
    %c0_62 = arith.constant 0 : index
    %c0_63 = arith.constant 0 : index
    %c0_64 = arith.constant 0 : index
    %96 = vector.load %arg8[%c0_62, %c0_63, %c0_64] : memref<1x128x128xf32, #tpu.memory_space<vmem>>, vector<1x128x128xf32>
    %97 = vector.shape_cast %96 : vector<1x128x128xf32> to vector<128x128xf32>
    %98 = vector.shape_cast %95 : vector<128x128xf32> to vector<1x128x128xf32>
    tpu.vector_store %arg8[%c0_62, %c0_63, %c0_64], %98 {strides = array<i32>} : memref<1x128x128xf32, #tpu.memory_space<vmem>>, vector<1x128x128xf32>,
    return
  }
  func.func @transform_0(%arg0: i32, %arg1: i32) -> (i32, i32, i32, i32) {
    %c0_i32 = arith.constant 0 : i32
    %c0_i32_0 = arith.constant 0 : i32
    %c0_i32_1 = arith.constant 0 : i32
    %c0_i32_2 = arith.constant 0 : i32
    return %arg0, %c0_i32, %c0_i32_0, %c0_i32_1 : i32, i32, i32, i32
  }
  func.func @transform_1(%arg0: i32, %arg1: i32) -> (i32, i32, i32) {
    %c0_i32 = arith.constant 0 : i32
    %c0_i32_0 = arith.constant 0 : i32
    %c0_i32_1 = arith.constant 0 : i32
    %c0_i32_2 = arith.constant 0 : i32
    return %c0_i32, %c0_i32_0, %c0_i32_1 : i32, i32, i32
  }
  func.func @transform_2(%arg0: i32, %arg1: i32) -> (i32, i32) {
    %c0_i32 = arith.constant 0 : i32
    %c0_i32_0 = arith.constant 0 : i32
    %c0_i32_1 = arith.constant 0 : i32
    return %c0_i32, %c0_i32_0 : i32, i32
  }
  func.func @transform_3(%arg0: i32, %arg1: i32) -> (i32, i32) {
    %c0_i32 = arith.constant 0 : i32
    %c0_i32_0 = arith.constant 0 : i32
    %c0_i32_1 = arith.constant 0 : i32
    return %c0_i32, %c0_i32_0 : i32, i32
  }
  func.func @transform_4(%arg0: i32, %arg1: i32) -> (i32, i32) {
    %c0_i32 = arith.constant 0 : i32
    %c0_i32_0 = arith.constant 0 : i32
    %c0_i32_1 = arith.constant 0 : i32
    return %c0_i32, %c0_i32_0 : i32, i32
  }
  func.func @transform_5(%arg0: i32, %arg1: i32) -> (i32, i32) {
    %c0_i32 = arith.constant 0 : i32
    %c0_i32_0 = arith.constant 0 : i32
    %c0_i32_1 = arith.constant 0 : i32
    return %c0_i32, %c0_i32_0 : i32, i32
  }
  func.func @transform_6(%arg0: i32, %arg1: i32) -> (i32, i32, i32) {
    %c0_i32 = arith.constant 0 : i32
    %c0_i32_0 = arith.constant 0 : i32
    return %arg0, %arg1, %c0_i32 : i32, i32, i32
  }
}

</mosaic_0001>

<llo_original>
// kernel: scale_prediction.1
$region0: #{scale_prediction.1}
  #allocation0 [shape = 'u32[]', space=smem, size = 0x4, offset = 0x4, fixed_abs, tag = 'smem constant byte address 0x4 - core index']
  #allocation1 [shape = 'u32[144,128]{1,0:T(1,128)}', space=vmem, size = 0x12000, scoped, tag = 'internal scratch']
  #allocation2 [shape = 'bf16[18,18,8]{2,1,0:T(8,128)(2,1)}', space=vmem, size = 0x1b000, scoped, tag = 'scratch operand']
  %s0 = inlined_call_operand.vmem [shape: bf16[2,16,16,8], index: 0, kind: input, shape index: {}]
  %s1 = inlined_call_operand.vmem [shape: bf16[9,8,128], index: 1, kind: input, shape index: {}]
  %s2 = inlined_call_operand.vmem [shape: f32[1,128], index: 2, kind: input, shape index: {}]
  %s3 = inlined_call_operand.vmem [shape: f32[1,128], index: 3, kind: input, shape index: {}]
  %s4 = inlined_call_operand.vmem [shape: bf16[128,128], index: 4, kind: input, shape index: {}]
  %s5 = inlined_call_operand.vmem [shape: f32[1,128], index: 5, kind: input, shape index: {}]
  %s6 = inlined_call_operand.vmem [shape: f32[2,256,128], index: 6, kind: output, shape index: {}]
  %s7 = sld [smem:[#allocation0]]
  $region61: #{scale_prediction.1} parent=0
    _
  %s9 = ssub.s32 1, %s7
  %s10 = scalar_select 0, %s9, %s7
  loop: start=0, step=1, limit=6
  $region2: #{scale_prediction.1} parent=0 // loop_pre_header
    _
  $region3: #{scale_prediction.1} parent=0 // loop_header
    %s12 = sphi 0, %s16
    %p13 = scmp.ge.s32.totalorder %s12, 6
    %s19 = sphi 0, %s31
    %s20 = sphi 0, %s27
    %s21 = sphi 0, %s19
    %s22 = sphi 0, %s20
    %s23 = sphi 0, %s21
    %s24 = sphi 0, %s22
    %s34 = sphi 0, %s36
    %s37 = sphi 0, %s34
    %s38 = sphi 0, %s37
    %s54 = sphi 0, %s38
    %s58 = sphi 0, %s58
    %s60 = sphi 0, %s58
    %s61 = sphi 0, %s60
    %s75 = sphi 0, %s61
    %s79 = sphi 0, %s79
    %s81 = sphi 0, %s79
    %s82 = sphi 0, %s81
    %s96 = sphi 0, %s82
    %s100 = sphi 0, %s100
    %s102 = sphi 0, %s100
    %s103 = sphi 0, %s102
    %s117 = sphi 0, %s103
    %s121 = sphi 0, %s121
    %s123 = sphi 0, %s121
    %s124 = sphi 0, %s123
    %s138 = sphi 0, %s124
    %s142 = sphi 0, %s142
    %s144 = sphi 0, %s142
    %s145 = sphi 0, %s144
    %s159 = sphi 0, %s145
    %s167 = sphi 0, %s169
    %s170 = sphi 0, %s167
    %s171 = sphi 0, %s170
    %s187 = sphi 0, %s171
  $region4: #{scale_prediction.1} parent=0 // loop_header_branch
    %15 = sbr.rel (%p13) target = $region8
  $region5: #{scale_prediction.1} parent=0 // loop_body
    %s17 = ssub.s32 %s12, 1
    %s18 = ssub.s32 %s12, 2
    %s25 = sadd.s32 1, %s20
    %p26 = scmp.ge.s32.totalorder %s25, 2
    %s27 = scalar_select %p26, 0, %s25
    %s28 = sadd.s32 1, %s19
    %s29 = scalar_select %p26, %s28, %s19
    %p30 = scmp.ge.s32.totalorder %s29, 2
    %s31 = scalar_select %p30, 0, %s29
    %s32 = ssub.s32 %s19, %s31
    %p33 = scmp.eq.s32.totalorder %s32, 0
    %s35 = sadd.s32 %s34, 1
    %s36 = scalar_select %p33, %s34, %s35
    %p39 = pneg %p33
    %p40 = scmp.eq.s32.totalorder %s12, 3
    %p41 = por %p39, %p40
    %p42 = scmp.ne.s32.totalorder %s34, %s37
    %p43 = scmp.eq.s32.totalorder %s12, 0
    %p44 = por %p42, %p43
    %p45 = scmp.ne.s32.totalorder %s34, %s37
    %p46 = scmp.eq.s32.totalorder %s17, 3
    %p47 = por %p45, %p46
    %p48 = scmp.ne.s32.totalorder %s37, %s38
    %p49 = scmp.eq.s32.totalorder %s17, 0
    %p50 = por %p48, %p49
    %p51 = scmp.ne.s32.totalorder %s37, %s38
    %p52 = scmp.eq.s32.totalorder %s18, 3
    %p53 = por %p51, %p52
    %p55 = scmp.ne.s32.totalorder %s38, %s54
    %p56 = scmp.eq.s32.totalorder %s18, 0
    %p57 = por %p55, %p56
    %s59 = sadd.s32 %s58, 1
    %p62 = scmp.eq.s32.totalorder %s12, 3
    %p63 = scmp.ne.s32.totalorder %s58, %s60
    %p64 = scmp.eq.s32.totalorder %s12, 0
    %p65 = por %p63, %p64
    %p66 = scmp.ne.s32.totalorder %s58, %s60
    %p67 = scmp.eq.s32.totalorder %s17, 3
    %p68 = por %p66, %p67
    %p69 = scmp.ne.s32.totalorder %s60, %s61
    %p70 = scmp.eq.s32.totalorder %s17, 0
    %p71 = por %p69, %p70
    %p72 = scmp.ne.s32.totalorder %s60, %s61
    %p73 = scmp.eq.s32.totalorder %s18, 3
    %p74 = por %p72, %p73
    %p76 = scmp.ne.s32.totalorder %s61, %s75
    %p77 = scmp.eq.s32.totalorder %s18, 0
    %p78 = por %p76, %p77
    %s80 = sadd.s32 %s79, 1
    %p83 = scmp.eq.s32.totalorder %s12, 3
    %p84 = scmp.ne.s32.totalorder %s79, %s81
    %p85 = scmp.eq.s32.totalorder %s12, 0
    %p86 = por %p84, %p85
    %p87 = scmp.ne.s32.totalorder %s79, %s81
    %p88 = scmp.eq.s32.totalorder %s17, 3
    %p89 = por %p87, %p88
    %p90 = scmp.ne.s32.totalorder %s81, %s82
    %p91 = scmp.eq.s32.totalorder %s17, 0
    %p92 = por %p90, %p91
    %p93 = scmp.ne.s32.totalorder %s81, %s82
    %p94 = scmp.eq.s32.totalorder %s18, 3
    %p95 = por %p93, %p94
    %p97 = scmp.ne.s32.totalorder %s82, %s96
    %p98 = scmp.eq.s32.totalorder %s18, 0
    %p99 = por %p97, %p98
    %s101 = sadd.s32 %s100, 1
    %p104 = scmp.eq.s32.totalorder %s12, 3
    %p105 = scmp.ne.s32.totalorder %s100, %s102
    %p106 = scmp.eq.s32.totalorder %s12, 0
    %p107 = por %p105, %p106
    %p108 = scmp.ne.s32.totalorder %s100, %s102
    %p109 = scmp.eq.s32.totalorder %s17, 3
    %p110 = por %p108, %p109
    %p111 = scmp.ne.s32.totalorder %s102, %s103
    %p112 = scmp.eq.s32.totalorder %s17, 0
    %p113 = por %p111, %p112
    %p114 = scmp.ne.s32.totalorder %s102, %s103
    %p115 = scmp.eq.s32.totalorder %s18, 3
    %p116 = por %p114, %p115
    %p118 = scmp.ne.s32.totalorder %s103, %s117
    %p119 = scmp.eq.s32.totalorder %s18, 0
    %p120 = por %p118, %p119
    %s122 = sadd.s32 %s121, 1
    %p125 = scmp.eq.s32.totalorder %s12, 3
    %p126 = scmp.ne.s32.totalorder %s121, %s123
    %p127 = scmp.eq.s32.totalorder %s12, 0
    %p128 = por %p126, %p127
    %p129 = scmp.ne.s32.totalorder %s121, %s123
    %p130 = scmp.eq.s32.totalorder %s17, 3
    %p131 = por %p129, %p130
    %p132 = scmp.ne.s32.totalorder %s123, %s124
    %p133 = scmp.eq.s32.totalorder %s17, 0
    %p134 = por %p132, %p133
    %p135 = scmp.ne.s32.totalorder %s123, %s124
    %p136 = scmp.eq.s32.totalorder %s18, 3
    %p137 = por %p135, %p136
    %p139 = scmp.ne.s32.totalorder %s124, %s138
    %p140 = scmp.eq.s32.totalorder %s18, 0
    %p141 = por %p139, %p140
    %s143 = sadd.s32 %s142, 1
    %p146 = scmp.eq.s32.totalorder %s12, 3
    %p147 = scmp.ne.s32.totalorder %s142, %s144
    %p148 = scmp.eq.s32.totalorder %s12, 0
    %p149 = por %p147, %p148
    %p150 = scmp.ne.s32.totalorder %s142, %s144
    %p151 = scmp.eq.s32.totalorder %s17, 3
    %p152 = por %p150, %p151
    %p153 = scmp.ne.s32.totalorder %s144, %s145
    %p154 = scmp.eq.s32.totalorder %s17, 0
    %p155 = por %p153, %p154
    %p156 = scmp.ne.s32.totalorder %s144, %s145
    %p157 = scmp.eq.s32.totalorder %s18, 3
    %p158 = por %p156, %p157
    %p160 = scmp.ne.s32.totalorder %s145, %s159
    %p161 = scmp.eq.s32.totalorder %s18, 0
    %p162 = por %p160, %p161
    %s163 = ssub.s32 %s19, %s31
    %s164 = ssub.s32 %s20, %s27
    %s165 = sor.u32 %s163, %s164
    %p166 = scmp.eq.s32.totalorder %s165, 0
    %s168 = sadd.s32 %s167, 1
    %s169 = scalar_select %p166, %s167, %s168
    %p172 = pneg %p166
    %p173 = scmp.eq.s32.totalorder %s12, 3
    %p174 = por %p172, %p173
    %p175 = scmp.ne.s32.totalorder %s167, %s170
    %p176 = scmp.eq.s32.totalorder %s12, 0
    %p177 = por %p175, %p176
    %p178 = scmp.ne.s32.totalorder %s167, %s170
    %p179 = scmp.eq.s32.totalorder %s17, 3
    %p180 = por %p178, %p179
    %p181 = scmp.ne.s32.totalorder %s170, %s171
    %p182 = scmp.eq.s32.totalorder %s17, 0
    %p183 = por %p181, %p182
    %p184 = scmp.ne.s32.totalorder %s170, %s171
    %p185 = scmp.eq.s32.totalorder %s18, 3
    %p186 = por %p184, %p185
    %p188 = scmp.ne.s32.totalorder %s171, %s187
    %p189 = scmp.eq.s32.totalorder %s18, 0
    %p190 = por %p188, %p189
    %p191 = scmp.le.s32.totalorder 1, %s12
    %p192 = scmp.lt.s32.totalorder %s12, 5
    %p193 = pnand %p191, %p192
    %p194 = pneg %p193
    // Predicated region
    $region9: #{scale_prediction.1} parent=5 // pred_check
      _
    $region10: #{scale_prediction.1} parent=5 // pred_check_branch
      %196 = sbr.rel (%p193) target = $region12
    $region11: #{scale_prediction.1} parent=5 // pred_region
      %s197 = ssub.s32 %s12, 1
      // Predicated region
      $region13: #{scale_prediction.1} parent=11 // pred_check
        %p198 = pneg %p71
      $region14: #{scale_prediction.1} parent=11 // pred_check_branch
        %200 = sbr.rel (%p198) target = $region16
      $region15: #{scale_prediction.1} parent=11 // pred_region
        _
      $region16: #{scale_prediction.1} parent=11 // pred_fallthru
        _
      // Predicated region
      $region17: #{scale_prediction.1} parent=11 // pred_check
        %p201 = pneg %p92
      $region18: #{scale_prediction.1} parent=11 // pred_check_branch
        %203 = sbr.rel (%p201) target = $region20
      $region19: #{scale_prediction.1} parent=11 // pred_region
        _
      $region20: #{scale_prediction.1} parent=11 // pred_fallthru
        _
      // Predicated region
      $region21: #{scale_prediction.1} parent=11 // pred_check
        %p204 = pneg %p113
      $region22: #{scale_prediction.1} parent=11 // pred_check_branch
        %206 = sbr.rel (%p204) target = $region24
      $region23: #{scale_prediction.1} parent=11 // pred_region
        _
      $region24: #{scale_prediction.1} parent=11 // pred_fallthru
        _
      // Predicated region
      $region25: #{scale_prediction.1} parent=11 // pred_check
        %p207 = pneg %p134
      $region26: #{scale_prediction.1} parent=11 // pred_check_branch
        %209 = sbr.rel (%p207) target = $region28
      $region27: #{scale_prediction.1} parent=11 // pred_region
        _
      $region28: #{scale_prediction.1} parent=11 // pred_fallthru
        _
      // Predicated region
      $region29: #{scale_prediction.1} parent=11 // pred_check
        %p210 = pneg %p155
      $region30: #{scale_prediction.1} parent=11 // pred_check_branch
        %212 = sbr.rel (%p210) target = $region32
      $region31: #{scale_prediction.1} parent=11 // pred_region
        _
      $region32: #{scale_prediction.1} parent=11 // pred_fallthru
        _
    $region12: #{scale_prediction.1} parent=5 // pred_fallthru
      _
    %p213 = scmp.lt.s32.totalorder %s12, 4
    // Predicated region
    $region33: #{scale_prediction.1} parent=5 // pred_check
      %p214 = pneg %p213
    $region34: #{scale_prediction.1} parent=5 // pred_check_branch
      %216 = sbr.rel (%p214) target = $region36
    $region35: #{scale_prediction.1} parent=5 // pred_region
      // Predicated region
      $region37: #{scale_prediction.1} parent=35 // pred_check
        %p217 = pneg %p44
      $region38: #{scale_prediction.1} parent=35 // pred_check_branch
        %219 = sbr.rel (%p217) target = $region40
      $region39: #{scale_prediction.1} parent=35 // pred_region
        %p220 = scmp.lt.s32.totalorder %s19, 1
        %s221 = scalar_select %p220, %s19, 1
        %s222 = smul.addr %s221, 32
        %s223 = smul.addr %s222, 4
        %s224 = scalar_lea.vmem %s0, %s223
      $region40: #{scale_prediction.1} parent=35 // pred_fallthru
        _
    $region36: #{scale_prediction.1} parent=5 // pred_fallthru
      _
    %p225 = scmp.le.s32.totalorder 1, %s12
    %p226 = scmp.lt.s32.totalorder %s12, 5
    %p227 = pnand %p225, %p226
    %p228 = pneg %p227
    // Predicated region
    $region41: #{scale_prediction.1} parent=5 // pred_check
      _
    $region42: #{scale_prediction.1} parent=5 // pred_check_branch
      %230 = sbr.rel (%p227) target = $region44
    $region43: #{scale_prediction.1} parent=5 // pred_region
      %s231 = ssub.s32 %s12, 1
      %p232 = scmp.lt.s32.totalorder %s21, 1
      %s233 = scalar_select %p232, %s21, 1
      %s234 = smul.addr %s233, 32
      %s235 = smul.addr %s234, 4
      %s236 = scalar_lea.vmem %s0, %s235
      %p237 = pneg %p50
      %p238 = pneg %p47
      %p239 = pneg %p71
      %p240 = pneg %p68
      %p241 = pneg %p92
      %p242 = pneg %p89
      %p243 = pneg %p113
      %p244 = pneg %p110
      %p245 = pneg %p134
      %p246 = pneg %p131
      %p247 = pneg %p155
      %p248 = pneg %p152
      %p249 = pneg %p183
      %p250 = pneg %p180
      %s251 = smul.u32 16, %s22
      %p252 = scmp.lt.s32.totalorder %s21, 1
      %s253 = scalar_select %p252, %s21, 1
      %p254 = scmp.lt.s32.totalorder %s251, 31
      %s255 = scalar_select %p254, %s251, 31
      %s256 = smul.addr %s253, 32
      %s257 = sadd.s32 %s255, %s256
      %s258 = smul.addr %s257, 8
      %s259 = scalar_lea.vmem %s6, %s258
      %p260 = scmp.lt.s32.totalorder %s21, 1
      %s261 = scalar_select %p260, %s21, 1
      %s262 = smul.addr %s261, 32
      %s263 = smul.addr %s262, 4
      %s264 = scalar_lea.vmem %s0, %s263
      %s265 = smul.u32 16, %s22
      %p266 = scmp.lt.s32.totalorder %s21, 1
      %s267 = scalar_select %p266, %s21, 1
      %p268 = scmp.lt.s32.totalorder %s265, 31
      %s269 = scalar_select %p268, %s265, 31
      %s270 = smul.addr %s267, 32
      %s271 = sadd.s32 %s269, %s270
      %s272 = smul.addr %s271, 8
      %s273 = scalar_lea.vmem %s6, %s272
      %s274 = smul.u32 16, %s22
      %p276 = scmp.eq.s32.totalorder %s22, 0
      // Predicated region
      $region45: #{scale_prediction.1} parent=43 // pred_check
        %p277 = pneg %p276
      $region46: #{scale_prediction.1} parent=43 // pred_check_branch
        %279 = sbr.rel (%p277) target = $region48
      $region47: #{scale_prediction.1} parent=43 // pred_region
        %vm280 = vcmask 60416
        %281 = vst.msk [vmem:[#allocation2] sm:$0xf] %vm280, 0
        %282 = vst.msk [vmem:[#allocation2 + $0x4] sm:$0xf] %vm280, 0
        %vm283 = vcmask 57344
        %284 = vst.msk [vmem:[#allocation2 + $0x8] sm:$0x1] %vm283, 0
        %285 = vst.msk [vmem:[#allocation2 + $0xc] sm:$0xf] %vm280, 0
        %286 = vst.msk [vmem:[#allocation2 + $0x10] sm:$0xf] %vm280, 0
        %287 = vst.msk [vmem:[#allocation2 + $0x14] sm:$0x1] %vm283, 0
        %288 = vst.msk [vmem:[#allocation2 + $0x18] sm:$0xf] %vm280, 0
        %289 = vst.msk [vmem:[#allocation2 + $0x1c] sm:$0xf] %vm280, 0
        %290 = vst.msk [vmem:[#allocation2 + $0x20] sm:$0x1] %vm283, 0
        %291 = vst.msk [vmem:[#allocation2 + $0x24] sm:$0xf] %vm280, 0
        %292 = vst.msk [vmem:[#allocation2 + $0x28] sm:$0xf] %vm280, 0
        %293 = vst.msk [vmem:[#allocation2 + $0x2c] sm:$0x1] %vm283, 0
        %294 = vst.msk [vmem:[#allocation2 + $0x30] sm:$0xf] %vm280, 0
        %295 = vst.msk [vmem:[#allocation2 + $0x34] sm:$0xf] %vm280, 0
        %296 = vst.msk [vmem:[#allocation2 + $0x38] sm:$0x1] %vm283, 0
        %297 = vst.msk [vmem:[#allocation2 + $0x3c] sm:$0xf] %vm280, 0
        %298 = vst.msk [vmem:[#allocation2 + $0x40] sm:$0xf] %vm280, 0
        %299 = vst.msk [vmem:[#allocation2 + $0x44] sm:$0x1] %vm283, 0
        %300 = vst.msk [vmem:[#allocation2 + $0x48] sm:$0xf] %vm280, 0
        %301 = vst.msk [vmem:[#allocation2 + $0x4c] sm:$0xf] %vm280, 0
        %302 = vst.msk [vmem:[#allocation2 + $0x50] sm:$0x1] %vm283, 0
        %303 = vst.msk [vmem:[#allocation2 + $0x54] sm:$0xf] %vm280, 0
        %304 = vst.msk [vmem:[#allocation2 + $0x58] sm:$0xf] %vm280, 0
        %305 = vst.msk [vmem:[#allocation2 + $0x5c] sm:$0x1] %vm283, 0
        %306 = vst.msk [vmem:[#allocation2 + $0x60] sm:$0xf] %vm280, 0
        %307 = vst.msk [vmem:[#allocation2 + $0x64] sm:$0xf] %vm280, 0
        %308 = vst.msk [vmem:[#allocation2 + $0x68] sm:$0x1] %vm283, 0
        %309 = vst.msk [vmem:[#allocation2 + $0x6c] sm:$0xf] %vm280, 0
        %310 = vst.msk [vmem:[#allocation2 + $0x70] sm:$0xf] %vm280, 0
        %311 = vst.msk [vmem:[#allocation2 + $0x74] sm:$0x1] %vm283, 0
        %312 = vst.msk [vmem:[#allocation2 + $0x78] sm:$0xf] %vm280, 0
        %313 = vst.msk [vmem:[#allocation2 + $0x7c] sm:$0xf] %vm280, 0
        %314 = vst.msk [vmem:[#allocation2 + $0x80] sm:$0x1] %vm283, 0
        %315 = vst.msk [vmem:[#allocation2 + $0x84] sm:$0xf] %vm280, 0
        %316 = vst.msk [vmem:[#allocation2 + $0x88] sm:$0xf] %vm280, 0
        %317 = vst.msk [vmem:[#allocation2 + $0x8c] sm:$0x1] %vm283, 0
        %318 = vst.msk [vmem:[#allocation2 + $0x90] sm:$0xf] %vm280, 0
        %319 = vst.msk [vmem:[#allocation2 + $0x94] sm:$0xf] %vm280, 0
        %320 = vst.msk [vmem:[#allocation2 + $0x98] sm:$0x1] %vm283, 0
        %321 = vst.msk [vmem:[#allocation2 + $0x9c] sm:$0xf] %vm280, 0
        %322 = vst.msk [vmem:[#allocation2 + $0xa0] sm:$0xf] %vm280, 0
        %323 = vst.msk [vmem:[#allocation2 + $0xa4] sm:$0x1] %vm283, 0
        %324 = vst.msk [vmem:[#allocation2 + $0xa8] sm:$0xf] %vm280, 0
        %325 = vst.msk [vmem:[#allocation2 + $0xac] sm:$0xf] %vm280, 0
        %326 = vst.msk [vmem:[#allocation2 + $0xb0] sm:$0x1] %vm283, 0
        %327 = vst.msk [vmem:[#allocation2 + $0xb4] sm:$0xf] %vm280, 0
        %328 = vst.msk [vmem:[#allocation2 + $0xb8] sm:$0xf] %vm280, 0
        %329 = vst.msk [vmem:[#allocation2 + $0xbc] sm:$0x1] %vm283, 0
        %330 = vst.msk [vmem:[#allocation2 + $0xc0] sm:$0xf] %vm280, 0
        %331 = vst.msk [vmem:[#allocation2 + $0xc4] sm:$0xf] %vm280, 0
        %332 = vst.msk [vmem:[#allocation2 + $0xc8] sm:$0x1] %vm283, 0
        %333 = vst.msk [vmem:[#allocation2 + $0xcc] sm:$0xf] %vm280, 0
        %334 = vst.msk [vmem:[#allocation2 + $0xd0] sm:$0xf] %vm280, 0
        %335 = vst.msk [vmem:[#allocation2 + $0xd4] sm:$0x1] %vm283, 0
        %v336 = vld [vmem:[%s264] sm:$0xf]
        %v337 = vld [vmem:[%s264 + $0x4] sm:$0xf]
        %v338 = vld [vmem:[%s264 + $0x8] sm:$0xf]
        %v339 = vld [vmem:[%s264 + $0xc] sm:$0xf]
        %v340 = vld [vmem:[%s264 + $0x10] sm:$0xf]
        %v341 = vld [vmem:[%s264 + $0x14] sm:$0xf]
        %v342 = vld [vmem:[%s264 + $0x18] sm:$0xf]
        %v343 = vld [vmem:[%s264 + $0x1c] sm:$0xf]
        %v344 = vld [vmem:[%s264 + $0x20] sm:$0xf]
        %v345 = vld [vmem:[%s264 + $0x24] sm:$0xf]
        %v346 = vld [vmem:[%s264 + $0x28] sm:$0xf]
        %v347 = vld [vmem:[%s264 + $0x2c] sm:$0xf]
        %v348 = vld [vmem:[%s264 + $0x30] sm:$0xf]
        %v349 = vld [vmem:[%s264 + $0x34] sm:$0xf]
        %v350 = vld [vmem:[%s264 + $0x38] sm:$0xf]
        %v351 = vld [vmem:[%s264 + $0x3c] sm:$0xf]
        %v352 = vld [vmem:[%s264 + $0x40] sm:$0xf]
        %v353 = vld [vmem:[%s264 + $0x44] sm:$0xf]
        %v354 = vld [vmem:[%s264 + $0x48] sm:$0xf]
        %v355 = vld [vmem:[%s264 + $0x4c] sm:$0xf]
        %v356 = vld [vmem:[%s264 + $0x50] sm:$0xf]
        %v357 = vld [vmem:[%s264 + $0x54] sm:$0xf]
        %v358 = vld [vmem:[%s264 + $0x58] sm:$0xf]
        %v359 = vld [vmem:[%s264 + $0x5c] sm:$0xf]
        %v360 = vld [vmem:[%s264 + $0x60] sm:$0xf]
        %v361 = vld [vmem:[%s264 + $0x64] sm:$0xf]
        %v362 = vld [vmem:[%s264 + $0x68] sm:$0xf]
        %v363 = vld [vmem:[%s264 + $0x6c] sm:$0xf]
        %v364 = vld [vmem:[%s264 + $0x70] sm:$0xf]
        %v365 = vld [vmem:[%s264 + $0x74] sm:$0xf]
        %v366 = vld [vmem:[%s264 + $0x78] sm:$0xf]
        %v367 = vld [vmem:[%s264 + $0x7c] sm:$0xf]
        %vm368 = vsmask.f32 256
        %vm369 = vsmask.f32 4368
        %vm370 = vmor %vm368, %vm369
        %v372 = vshrl.u32 %v336, 16
        %v374 = vrot.slane %v372, 7
        %v375 = vshll.u32 %v336, 16
        %v377 = vor.u32 %v374, %v375
        %v378 = vrot.slane %v374, 4
        %v380 = vshrl.u32 %v337, 16
        %v382 = vrot.slane %v380, 7
        %v383 = vshll.u32 %v337, 16
        %v385 = vor.u32 %v382, %v383
        %v386 = vsel %vm370, %v378, %v385
        %v387 = vrot.slane %v382, 4
        %v389 = vshrl.u32 %v338, 16
        %v391 = vrot.slane %v389, 7
        %v392 = vshll.u32 %v338, 16
        %v394 = vor.u32 %v391, %v392
        %v395 = vrot.slane %v391, 4
        %v397 = vshrl.u32 %v339, 16
        %v399 = vrot.slane %v397, 7
        %v400 = vshll.u32 %v339, 16
        %v402 = vor.u32 %v399, %v400
        %v403 = vsel %vm370, %v395, %v402
        %v404 = vrot.slane %v399, 4
        %v406 = vshrl.u32 %v340, 16
        %v408 = vrot.slane %v406, 7
        %v409 = vshll.u32 %v340, 16
        %v411 = vor.u32 %v408, %v409
        %v412 = vrot.slane %v408, 4
        %v414 = vshrl.u32 %v341, 16
        %v416 = vrot.slane %v414, 7
        %v417 = vshll.u32 %v341, 16
        %v419 = vor.u32 %v416, %v417
        %v420 = vsel %vm370, %v412, %v419
        %v421 = vrot.slane %v416, 4
        %v423 = vshrl.u32 %v342, 16
        %v425 = vrot.slane %v423, 7
        %v426 = vshll.u32 %v342, 16
        %v428 = vor.u32 %v425, %v426
        %v429 = vrot.slane %v425, 4
        %v431 = vshrl.u32 %v343, 16
        %v433 = vrot.slane %v431, 7
        %v434 = vshll.u32 %v343, 16
        %v436 = vor.u32 %v433, %v434
        %v437 = vsel %vm370, %v429, %v436
        %v438 = vrot.slane %v433, 4
        %v440 = vshrl.u32 %v344, 16
        %v442 = vrot.slane %v440, 7
        %v443 = vshll.u32 %v344, 16
        %v445 = vor.u32 %v442, %v443
        %v446 = vrot.slane %v442, 4
        %v448 = vshrl.u32 %v345, 16
        %v450 = vrot.slane %v448, 7
        %v451 = vshll.u32 %v345, 16
        %v453 = vor.u32 %v450, %v451
        %v454 = vsel %vm370, %v446, %v453
        %v455 = vrot.slane %v450, 4
        %v457 = vshrl.u32 %v346, 16
        %v459 = vrot.slane %v457, 7
        %v460 = vshll.u32 %v346, 16
        %v462 = vor.u32 %v459, %v460
        %v463 = vrot.slane %v459, 4
        %v465 = vshrl.u32 %v347, 16
        %v467 = vrot.slane %v465, 7
        %v468 = vshll.u32 %v347, 16
        %v470 = vor.u32 %v467, %v468
        %v471 = vsel %vm370, %v463, %v470
        %v472 = vrot.slane %v467, 4
        %v474 = vshrl.u32 %v348, 16
        %v476 = vrot.slane %v474, 7
        %v477 = vshll.u32 %v348, 16
        %v479 = vor.u32 %v476, %v477
        %v480 = vrot.slane %v476, 4
        %v482 = vshrl.u32 %v349, 16
        %v484 = vrot.slane %v482, 7
        %v485 = vshll.u32 %v349, 16
        %v487 = vor.u32 %v484, %v485
        %v488 = vsel %vm370, %v480, %v487
        %v489 = vrot.slane %v484, 4
        %v491 = vshrl.u32 %v350, 16
        %v493 = vrot.slane %v491, 7
        %v494 = vshll.u32 %v350, 16
        %v496 = vor.u32 %v493, %v494
        %v497 = vrot.slane %v493, 4
        %v499 = vshrl.u32 %v351, 16
        %v501 = vrot.slane %v499, 7
        %v502 = vshll.u32 %v351, 16
        %v504 = vor.u32 %v501, %v502
        %v505 = vsel %vm370, %v497, %v504
        %v506 = vrot.slane %v501, 4
        %v508 = vshrl.u32 %v352, 16
        %v510 = vrot.slane %v508, 7
        %v511 = vshll.u32 %v352, 16
        %v513 = vor.u32 %v510, %v511
        %v514 = vrot.slane %v510, 4
        %v516 = vshrl.u32 %v353, 16
        %v518 = vrot.slane %v516, 7
        %v519 = vshll.u32 %v353, 16
        %v521 = vor.u32 %v518, %v519
        %v522 = vsel %vm370, %v514, %v521
        %v523 = vrot.slane %v518, 4
        %v525 = vshrl.u32 %v354, 16
        %v527 = vrot.slane %v525, 7
        %v528 = vshll.u32 %v354, 16
        %v530 = vor.u32 %v527, %v528
        %v531 = vrot.slane %v527, 4
        %v533 = vshrl.u32 %v355, 16
        %v535 = vrot.slane %v533, 7
        %v536 = vshll.u32 %v355, 16
        %v538 = vor.u32 %v535, %v536
        %v539 = vsel %vm370, %v531, %v538
        %v540 = vrot.slane %v535, 4
        %v542 = vshrl.u32 %v356, 16
        %v544 = vrot.slane %v542, 7
        %v545 = vshll.u32 %v356, 16
        %v547 = vor.u32 %v544, %v545
        %v548 = vrot.slane %v544, 4
        %v550 = vshrl.u32 %v357, 16
        %v552 = vrot.slane %v550, 7
        %v553 = vshll.u32 %v357, 16
        %v555 = vor.u32 %v552, %v553
        %v556 = vsel %vm370, %v548, %v555
        %v557 = vrot.slane %v552, 4
        %v559 = vshrl.u32 %v358, 16
        %v561 = vrot.slane %v559, 7
        %v562 = vshll.u32 %v358, 16
        %v564 = vor.u32 %v561, %v562
        %v565 = vrot.slane %v561, 4
        %v567 = vshrl.u32 %v359, 16
        %v569 = vrot.slane %v567, 7
        %v570 = vshll.u32 %v359, 16
        %v572 = vor.u32 %v569, %v570
        %v573 = vsel %vm370, %v565, %v572
        %v574 = vrot.slane %v569, 4
        %v576 = vshrl.u32 %v360, 16
        %v578 = vrot.slane %v576, 7
        %v579 = vshll.u32 %v360, 16
        %v581 = vor.u32 %v578, %v579
        %v582 = vrot.slane %v578, 4
        %v584 = vshrl.u32 %v361, 16
        %v586 = vrot.slane %v584, 7
        %v587 = vshll.u32 %v361, 16
        %v589 = vor.u32 %v586, %v587
        %v590 = vsel %vm370, %v582, %v589
        %v591 = vrot.slane %v586, 4
        %v593 = vshrl.u32 %v362, 16
        %v595 = vrot.slane %v593, 7
        %v596 = vshll.u32 %v362, 16
        %v598 = vor.u32 %v595, %v596
        %v599 = vrot.slane %v595, 4
        %v601 = vshrl.u32 %v363, 16
        %v603 = vrot.slane %v601, 7
        %v604 = vshll.u32 %v363, 16
        %v606 = vor.u32 %v603, %v604
        %v607 = vsel %vm370, %v599, %v606
        %v608 = vrot.slane %v603, 4
        %v610 = vshrl.u32 %v364, 16
        %v612 = vrot.slane %v610, 7
        %v613 = vshll.u32 %v364, 16
        %v615 = vor.u32 %v612, %v613
        %v616 = vrot.slane %v612, 4
        %v618 = vshrl.u32 %v365, 16
        %v620 = vrot.slane %v618, 7
        %v621 = vshll.u32 %v365, 16
        %v623 = vor.u32 %v620, %v621
        %v624 = vsel %vm370, %v616, %v623
        %v625 = vrot.slane %v620, 4
        %v627 = vshrl.u32 %v366, 16
        %v629 = vrot.slane %v627, 7
        %v630 = vshll.u32 %v366, 16
        %v632 = vor.u32 %v629, %v630
        %v633 = vrot.slane %v629, 4
        %v635 = vshrl.u32 %v367, 16
        %v637 = vrot.slane %v635, 7
        %v638 = vshll.u32 %v367, 16
        %v640 = vor.u32 %v637, %v638
        %v641 = vsel %vm370, %v633, %v640
        %v642 = vrot.slane %v637, 4
        %s691 = scalar_lea.vmem [#allocation2], 12
        %vm692 = vcmask 60416
        %vm693 = vsmask.f32 7938
        %vm694 = vmand %vm692, %vm693
        %v695 = vld [vmem:[%s691] sm:$0xf]
        %v696 = vsel %vm694, %v377, %v695
        %697 = vst [vmem:[%s691] sm:$0xf] %v696
        %698 = vst.msk [vmem:[%s691 + $0x4] sm:$0xf] %vm280, %v386
        %vm699 = vcmask 57344
        %vm700 = vmand %vm699, %vm368
        %v701 = vld [vmem:[%s691 + $0x8] sm:$0x1]
        %v702 = vsel %vm700, %v387, %v701
        %703 = vst [vmem:[%s691 + $0x8] sm:$0x1] %v702
        %v704 = vld [vmem:[%s691 + $0xc] sm:$0xf]
        %v705 = vsel %vm694, %v394, %v704
        %706 = vst [vmem:[%s691 + $0xc] sm:$0xf] %v705
        %707 = vst.msk [vmem:[%s691 + $0x10] sm:$0xf] %vm280, %v403
        %v708 = vld [vmem:[%s691 + $0x14] sm:$0x1]
        %v709 = vsel %vm700, %v404, %v708
        %710 = vst [vmem:[%s691 + $0x14] sm:$0x1] %v709
        %v711 = vld [vmem:[%s691 + $0x18] sm:$0xf]
        %v712 = vsel %vm694, %v411, %v711
        %713 = vst [vmem:[%s691 + $0x18] sm:$0xf] %v712
        %714 = vst.msk [vmem:[%s691 + $0x1c] sm:$0xf] %vm280, %v420
        %v715 = vld [vmem:[%s691 + $0x20] sm:$0x1]
        %v716 = vsel %vm700, %v421, %v715
        %717 = vst [vmem:[%s691 + $0x20] sm:$0x1] %v716
        %v718 = vld [vmem:[%s691 + $0x24] sm:$0xf]
        %v719 = vsel %vm694, %v428, %v718
        %720 = vst [vmem:[%s691 + $0x24] sm:$0xf] %v719
        %721 = vst.msk [vmem:[%s691 + $0x28] sm:$0xf] %vm280, %v437
        %v722 = vld [vmem:[%s691 + $0x2c] sm:$0x1]
        %v723 = vsel %vm700, %v438, %v722
        %724 = vst [vmem:[%s691 + $0x2c] sm:$0x1] %v723
        %v725 = vld [vmem:[%s691 + $0x30] sm:$0xf]
        %v726 = vsel %vm694, %v445, %v725
        %727 = vst [vmem:[%s691 + $0x30] sm:$0xf] %v726
        %728 = vst.msk [vmem:[%s691 + $0x34] sm:$0xf] %vm280, %v454
        %v729 = vld [vmem:[%s691 + $0x38] sm:$0x1]
        %v730 = vsel %vm700, %v455, %v729
        %731 = vst [vmem:[%s691 + $0x38] sm:$0x1] %v730
        %v732 = vld [vmem:[%s691 + $0x3c] sm:$0xf]
        %v733 = vsel %vm694, %v462, %v732
        %734 = vst [vmem:[%s691 + $0x3c] sm:$0xf] %v733
        %735 = vst.msk [vmem:[%s691 + $0x40] sm:$0xf] %vm280, %v471
        %v736 = vld [vmem:[%s691 + $0x44] sm:$0x1]
        %v737 = vsel %vm700, %v472, %v736
        %738 = vst [vmem:[%s691 + $0x44] sm:$0x1] %v737
        %v739 = vld [vmem:[%s691 + $0x48] sm:$0xf]
        %v740 = vsel %vm694, %v479, %v739
        %741 = vst [vmem:[%s691 + $0x48] sm:$0xf] %v740
        %742 = vst.msk [vmem:[%s691 + $0x4c] sm:$0xf] %vm280, %v488
        %v743 = vld [vmem:[%s691 + $0x50] sm:$0x1]
        %v744 = vsel %vm700, %v489, %v743
        %745 = vst [vmem:[%s691 + $0x50] sm:$0x1] %v744
        %v746 = vld [vmem:[%s691 + $0x54] sm:$0xf]
        %v747 = vsel %vm694, %v496, %v746
        %748 = vst [vmem:[%s691 + $0x54] sm:$0xf] %v747
        %749 = vst.msk [vmem:[%s691 + $0x58] sm:$0xf] %vm280, %v505
        %v750 = vld [vmem:[%s691 + $0x5c] sm:$0x1]
        %v751 = vsel %vm700, %v506, %v750
        %752 = vst [vmem:[%s691 + $0x5c] sm:$0x1] %v751
        %v753 = vld [vmem:[%s691 + $0x60] sm:$0xf]
        %v754 = vsel %vm694, %v513, %v753
        %755 = vst [vmem:[%s691 + $0x60] sm:$0xf] %v754
        %756 = vst.msk [vmem:[%s691 + $0x64] sm:$0xf] %vm280, %v522
        %v757 = vld [vmem:[%s691 + $0x68] sm:$0x1]
        %v758 = vsel %vm700, %v523, %v757
        %759 = vst [vmem:[%s691 + $0x68] sm:$0x1] %v758
        %v760 = vld [vmem:[%s691 + $0x6c] sm:$0xf]
        %v761 = vsel %vm694, %v530, %v760
        %762 = vst [vmem:[%s691 + $0x6c] sm:$0xf] %v761
        %763 = vst.msk [vmem:[%s691 + $0x70] sm:$0xf] %vm280, %v539
        %v764 = vld [vmem:[%s691 + $0x74] sm:$0x1]
        %v765 = vsel %vm700, %v540, %v764
        %766 = vst [vmem:[%s691 + $0x74] sm:$0x1] %v765
        %v767 = vld [vmem:[%s691 + $0x78] sm:$0xf]
        %v768 = vsel %vm694, %v547, %v767
        %769 = vst [vmem:[%s691 + $0x78] sm:$0xf] %v768
        %770 = vst.msk [vmem:[%s691 + $0x7c] sm:$0xf] %vm280, %v556
        %v771 = vld [vmem:[%s691 + $0x80] sm:$0x1]
        %v772 = vsel %vm700, %v557, %v771
        %773 = vst [vmem:[%s691 + $0x80] sm:$0x1] %v772
        %v774 = vld [vmem:[%s691 + $0x84] sm:$0xf]
        %v775 = vsel %vm694, %v564, %v774
        %776 = vst [vmem:[%s691 + $0x84] sm:$0xf] %v775
        %777 = vst.msk [vmem:[%s691 + $0x88] sm:$0xf] %vm280, %v573
        %v778 = vld [vmem:[%s691 + $0x8c] sm:$0x1]
        %v779 = vsel %vm700, %v574, %v778
        %780 = vst [vmem:[%s691 + $0x8c] sm:$0x1] %v779
        %v781 = vld [vmem:[%s691 + $0x90] sm:$0xf]
        %v782 = vsel %vm694, %v581, %v781
        %783 = vst [vmem:[%s691 + $0x90] sm:$0xf] %v782
        %784 = vst.msk [vmem:[%s691 + $0x94] sm:$0xf] %vm280, %v590
        %v785 = vld [vmem:[%s691 + $0x98] sm:$0x1]
        %v786 = vsel %vm700, %v591, %v785
        %787 = vst [vmem:[%s691 + $0x98] sm:$0x1] %v786
        %v788 = vld [vmem:[%s691 + $0x9c] sm:$0xf]
        %v789 = vsel %vm694, %v598, %v788
        %790 = vst [vmem:[%s691 + $0x9c] sm:$0xf] %v789
        %791 = vst.msk [vmem:[%s691 + $0xa0] sm:$0xf] %vm280, %v607
        %v792 = vld [vmem:[%s691 + $0xa4] sm:$0x1]
        %v793 = vsel %vm700, %v608, %v792
        %794 = vst [vmem:[%s691 + $0xa4] sm:$0x1] %v793
        %v795 = vld [vmem:[%s691 + $0xa8] sm:$0xf]
        %v796 = vsel %vm694, %v615, %v795
        %797 = vst [vmem:[%s691 + $0xa8] sm:$0xf] %v796
        %798 = vst.msk [vmem:[%s691 + $0xac] sm:$0xf] %vm280, %v624
        %v799 = vld [vmem:[%s691 + $0xb0] sm:$0x1]
        %v800 = vsel %vm700, %v625, %v799
        %801 = vst [vmem:[%s691 + $0xb0] sm:$0x1] %v800
        %v802 = vld [vmem:[%s691 + $0xb4] sm:$0xf]
        %v803 = vsel %vm694, %v632, %v802
        %804 = vst [vmem:[%s691 + $0xb4] sm:$0xf] %v803
        %805 = vst.msk [vmem:[%s691 + $0xb8] sm:$0xf] %vm280, %v641
        %v806 = vld [vmem:[%s691 + $0xbc] sm:$0x1]
        %v807 = vsel %vm700, %v642, %v806
        %808 = vst [vmem:[%s691 + $0xbc] sm:$0x1] %v807
      $region48: #{scale_prediction.1} parent=43 // pred_fallthru
        _
      %s809 = smul.u32 %s22, 8
      %s810 = smul.u32 %s809, 3
      %s811 = smul.addr %s810, 4
      %s812 = scalar_lea.vmem [#allocation2], %s811
      %v813 = vld [vmem:[%s812] sm:$0xf]
      %v814 = vld [vmem:[%s812 + $0x4] sm:$0xf]
      %v815 = vld [vmem:[%s812 + $0xc] sm:$0xf]
      %v816 = vld [vmem:[%s812 + $0x10] sm:$0xf]
      %v817 = vld [vmem:[%s812 + $0x18] sm:$0xf]
      %v818 = vld [vmem:[%s812 + $0x1c] sm:$0xf]
      %v819 = vld [vmem:[%s812 + $0x24] sm:$0xf]
      %v820 = vld [vmem:[%s812 + $0x28] sm:$0xf]
      %v821 = vld [vmem:[%s812 + $0x30] sm:$0xf]
      %v822 = vld [vmem:[%s812 + $0x34] sm:$0xf]
      %v823 = vld [vmem:[%s812 + $0x3c] sm:$0xf]
      %v824 = vld [vmem:[%s812 + $0x40] sm:$0xf]
      %v825 = vld [vmem:[%s812 + $0x48] sm:$0xf]
      %v826 = vld [vmem:[%s812 + $0x4c] sm:$0xf]
      %v827 = vld [vmem:[%s812 + $0x54] sm:$0xf]
      %v828 = vld [vmem:[%s812 + $0x58] sm:$0xf]
      %v829 = vld [vmem:[%s1] sm:$0xf]
      %v830 = vld [vmem:[%s812 + $0x8] sm:$0x1]
      %v831 = vld [vmem:[%s812 + $0x14] sm:$0x1]
      %v832 = vld [vmem:[%s812 + $0x20] sm:$0x1]
      %v833 = vld [vmem:[%s812 + $0x2c] sm:$0x1]
      %v834 = vld [vmem:[%s812 + $0x38] sm:$0x1]
      %v835 = vld [vmem:[%s812 + $0x44] sm:$0x1]
      %v836 = vld [vmem:[%s812 + $0x50] sm:$0x1]
      %v837 = vld [vmem:[%s812 + $0x5c] sm:$0x1]
      %vm838 = vsmask.f32 3328
      %vm839 = vsmask.f32 7440
      %vm840 = vmor %vm838, %vm839
      %v842 = vshrl.u32 %v813, 16
      %v844 = vrot.slane %v842, 4
      %v845 = vshll.u32 %v813, 16
      %v847 = vrot.slane %v845, 5
      %v848 = vor.u32 %v844, %v847
      %v849 = vrot.slane %v848, 4
      %v851 = vshll.u32 %v814, 16
      %v853 = vrot.slane %v851, 5
      %v854 = vsel %vm840, %v849, %v853
      %v855 = vshrl.u32 %v814, 16
      %v857 = vrot.slane %v855, 4
      %v858 = vor.u32 %v857, %v853
      %v859 = vrot.slane %v858, 4
      %v861 = vshll.u32 %v830, 16
      %v863 = vrot.slane %v861, 5
      %v864 = vsel %vm840, %v859, %v863
      %v866 = vshrl.u32 %v815, 16
      %v868 = vrot.slane %v866, 4
      %v869 = vshll.u32 %v815, 16
      %v871 = vrot.slane %v869, 5
      %v872 = vor.u32 %v868, %v871
      %v873 = vrot.slane %v872, 4
      %v875 = vshll.u32 %v816, 16
      %v877 = vrot.slane %v875, 5
      %v878 = vsel %vm840, %v873, %v877
      %v879 = vshrl.u32 %v816, 16
      %v881 = vrot.slane %v879, 4
      %v882 = vor.u32 %v881, %v877
      %v883 = vrot.slane %v882, 4
      %v885 = vshll.u32 %v831, 16
      %v887 = vrot.slane %v885, 5
      %v888 = vsel %vm840, %v883, %v887
      %v890 = vshrl.u32 %v817, 16
      %v892 = vrot.slane %v890, 4
      %v893 = vshll.u32 %v817, 16
      %v895 = vrot.slane %v893, 5
      %v896 = vor.u32 %v892, %v895
      %v897 = vrot.slane %v896, 4
      %v899 = vshll.u32 %v818, 16
      %v901 = vrot.slane %v899, 5
      %v902 = vsel %vm840, %v897, %v901
      %v903 = vshrl.u32 %v818, 16
      %v905 = vrot.slane %v903, 4
      %v906 = vor.u32 %v905, %v901
      %v907 = vrot.slane %v906, 4
      %v909 = vshll.u32 %v832, 16
      %v911 = vrot.slane %v909, 5
      %v912 = vsel %vm840, %v907, %v911
      %v914 = vshrl.u32 %v819, 16
      %v916 = vrot.slane %v914, 4
      %v917 = vshll.u32 %v819, 16
      %v919 = vrot.slane %v917, 5
      %v920 = vor.u32 %v916, %v919
      %v921 = vrot.slane %v920, 4
      %v923 = vshll.u32 %v820, 16
      %v925 = vrot.slane %v923, 5
      %v926 = vsel %vm840, %v921, %v925
      %v927 = vshrl.u32 %v820, 16
      %v929 = vrot.slane %v927, 4
      %v930 = vor.u32 %v929, %v925
      %v931 = vrot.slane %v930, 4
      %v933 = vshll.u32 %v833, 16
      %v935 = vrot.slane %v933, 5
      %v936 = vsel %vm840, %v931, %v935
      %v938 = vshrl.u32 %v821, 16
      %v940 = vrot.slane %v938, 4
      %v941 = vshll.u32 %v821, 16
      %v943 = vrot.slane %v941, 5
      %v944 = vor.u32 %v940, %v943
      %v945 = vrot.slane %v944, 4
      %v947 = vshll.u32 %v822, 16
      %v949 = vrot.slane %v947, 5
      %v950 = vsel %vm840, %v945, %v949
      %v951 = vshrl.u32 %v822, 16
      %v953 = vrot.slane %v951, 4
      %v954 = vor.u32 %v953, %v949
      %v955 = vrot.slane %v954, 4
      %v957 = vshll.u32 %v834, 16
      %v959 = vrot.slane %v957, 5
      %v960 = vsel %vm840, %v955, %v959
      %v962 = vshrl.u32 %v823, 16
      %v964 = vrot.slane %v962, 4
      %v965 = vshll.u32 %v823, 16
      %v967 = vrot.slane %v965, 5
      %v968 = vor.u32 %v964, %v967
      %v969 = vrot.slane %v968, 4
      %v971 = vshll.u32 %v824, 16
      %v973 = vrot.slane %v971, 5
      %v974 = vsel %vm840, %v969, %v973
      %v975 = vshrl.u32 %v824, 16
      %v977 = vrot.slane %v975, 4
      %v978 = vor.u32 %v977, %v973
      %v979 = vrot.slane %v978, 4
      %v981 = vshll.u32 %v835, 16
      %v983 = vrot.slane %v981, 5
      %v984 = vsel %vm840, %v979, %v983
      %v986 = vshrl.u32 %v825, 16
      %v988 = vrot.slane %v986, 4
      %v989 = vshll.u32 %v825, 16
      %v991 = vrot.slane %v989, 5
      %v992 = vor.u32 %v988, %v991
      %v993 = vrot.slane %v992, 4
      %v995 = vshll.u32 %v826, 16
      %v997 = vrot.slane %v995, 5
      %v998 = vsel %vm840, %v993, %v997
      %v999 = vshrl.u32 %v826, 16
      %v1001 = vrot.slane %v999, 4
      %v1002 = vor.u32 %v1001, %v997
      %v1003 = vrot.slane %v1002, 4
      %v1005 = vshll.u32 %v836, 16
      %v1007 = vrot.slane %v1005, 5
      %v1008 = vsel %vm840, %v1003, %v1007
      %v1010 = vshrl.u32 %v827, 16
      %v1012 = vrot.slane %v1010, 4
      %v1013 = vshll.u32 %v827, 16
      %v1015 = vrot.slane %v1013, 5
      %v1016 = vor.u32 %v1012, %v1015
      %v1017 = vrot.slane %v1016, 4
      %v1019 = vshll.u32 %v828, 16
      %v1021 = vrot.slane %v1019, 5
      %v1022 = vsel %vm840, %v1017, %v1021
      %v1023 = vshrl.u32 %v828, 16
      %v1025 = vrot.slane %v1023, 4
      %v1026 = vor.u32 %v1025, %v1021
      %v1027 = vrot.slane %v1026, 4
      %v1029 = vshll.u32 %v837, 16
      %v1031 = vrot.slane %v1029, 5
      %v1032 = vsel %vm840, %v1027, %v1031
      %s1033 = scalar_lea.vmem %s1, 4
      %v1034 = vld [vmem:[%s1033] sm:$0xf]
      %v1035 = vunpack.c.l.b16 %v854
      %v1036 = vunpack.c.l.b16 %v864
      %v1037 = vunpack.c.l.b16 %v878
      %v1038 = vunpack.c.l.b16 %v888
      %v1039 = vunpack.c.l.b16 %v902
      %v1040 = vunpack.c.l.b16 %v912
      %v1041 = vunpack.c.l.b16 %v926
      %v1042 = vunpack.c.l.b16 %v936
      %v1043 = vunpack.c.l.b16 %v950
      %v1044 = vunpack.c.l.b16 %v960
      %v1045 = vunpack.c.l.b16 %v974
      %v1046 = vunpack.c.l.b16 %v984
      %v1047 = vunpack.c.l.b16 %v998
      %v1048 = vunpack.c.l.b16 %v1008
      %v1049 = vunpack.c.l.b16 %v1022
      %v1050 = vunpack.c.l.b16 %v1032
      %v1051 = vpack.c.b16 %v1036, %v1035
      %v1052 = vpack.c.b16 %v1038, %v1037
      %v1053 = vpack.c.b16 %v1040, %v1039
      %v1054 = vpack.c.b16 %v1042, %v1041
      %v1055 = vpack.c.b16 %v1044, %v1043
      %v1056 = vpack.c.b16 %v1046, %v1045
      %v1057 = vpack.c.b16 %v1048, %v1047
      %v1058 = vpack.c.b16 %v1050, %v1049
      %vm1059 = vcmask 64512
      %v1061 = vsel %vm1059, %v1051, 0
      %v1064 = vsel %vm1059, %v1052, 0
      %v1067 = vsel %vm1059, %v1053, 0
      %v1070 = vsel %vm1059, %v1054, 0
      %v1073 = vsel %vm1059, %v1055, 0
      %v1076 = vsel %vm1059, %v1056, 0
      %v1079 = vsel %vm1059, %v1057, 0
      %v1082 = vsel %vm1059, %v1058, 0
      %vm1084 = vcmask 1043456
      %v1086 = vsel %vm1084, %v1034, 0
      %1088 = vmatprep.subr.bf16.mxu0 0
      %1089 = vmatpush1.bf16.msra.mxu0 0
      %1090 = vmatprep.subr.bf16.mxu0 0
      %1091 = vmatpush1.bf16.msra.mxu0 0
      %1092 = vmatprep.subr.bf16.mxu0 0
      %1093 = vmatpush1.bf16.msra.mxu0 0
      %1094 = vmatprep.subr.bf16.mxu0 0
      %1095 = vmatpush1.bf16.msra.mxu0 0
      %1096 = vmatprep.subr.bf16.mxu0 0
      %1097 = vmatpush1.bf16.msra.mxu0 0
      %1098 = vmatprep.subr.bf16.mxu0 0
      %1099 = vmatpush1.bf16.msra.mxu0 0
      %1100 = vmatprep.subr.bf16.mxu0 0
      %1101 = vmatpush1.bf16.msra.mxu0 0
      %1102 = vmatprep.subr.bf16.mxu0 0
      %1103 = vmatpush1.bf16.msra.mxu0 %v1086
      %1104 = vmatprep.subr.bf16.mxu0 0
      %1105 = vmatpush2.bf16.msra.mxu0 0
      %1106 = vmatprep.subr.bf16.mxu0 0
      %1107 = vmatpush2.bf16.msra.mxu0 0
      %1108 = vmatprep.subr.bf16.mxu0 0
      %1109 = vmatpush2.bf16.msra.mxu0 0
      %1110 = vmatprep.subr.bf16.mxu0 0
      %1111 = vmatpush2.bf16.msra.mxu0 0
      %1112 = vmatprep.subr.bf16.mxu0 0
      %1113 = vmatpush2.bf16.msra.mxu0 0
      %1114 = vmatprep.subr.bf16.mxu0 0
      %1115 = vmatpush2.bf16.msra.mxu0 0
      %1116 = vmatprep.subr.bf16.mxu0 0
      %1117 = vmatpush2.bf16.msra.mxu0 0
      %1118 = vmatprep.subr.bf16.mxu0 0
      %1119 = vmatpush2.bf16.msra.mxu0 0
      %1120 = vmatprep.mubr.bf16.mxu0 0
      %1121 = vmatmul.mubr.bf16.gmra.mxu0 %v1061
      %v1122 = vpop.f32.mrf.mxu0
      %v1123 = vadd.f32 0.0, %v1122
      %v1124 = vpop.f32.mrf.mxu0
      %v1125 = vpop.f32.mrf.mxu0
      %v1126 = vadd.f32 0.0, %v1125
      %v1127 = vpop.f32.mrf.mxu0
      %1128 = vmatprep.mubr.bf16.mxu0 0
      %1129 = vmatmul.mubr.bf16.gmra.mxu0 %v1064
      %v1130 = vpop.f32.mrf.mxu0
      %v1131 = vadd.f32 0.0, %v1130
      %v1132 = vpop.f32.mrf.mxu0
      %v1133 = vpop.f32.mrf.mxu0
      %v1134 = vadd.f32 0.0, %v1133
      %v1135 = vpop.f32.mrf.mxu0
      %1136 = vmatprep.mubr.bf16.mxu0 0
      %1137 = vmatmul.mubr.bf16.gmra.mxu0 %v1067
      %v1138 = vpop.f32.mrf.mxu0
      %v1139 = vadd.f32 0.0, %v1138
      %v1140 = vpop.f32.mrf.mxu0
      %v1141 = vpop.f32.mrf.mxu0
      %v1142 = vadd.f32 0.0, %v1141
      %v1143 = vpop.f32.mrf.mxu0
      %1144 = vmatprep.mubr.bf16.mxu0 0
      %1145 = vmatmul.mubr.bf16.gmra.mxu0 %v1070
      %v1146 = vpop.f32.mrf.mxu0
      %v1147 = vadd.f32 0.0, %v1146
      %v1148 = vpop.f32.mrf.mxu0
      %v1149 = vpop.f32.mrf.mxu0
      %v1150 = vadd.f32 0.0, %v1149
      %v1151 = vpop.f32.mrf.mxu0
      %1152 = vmatprep.mubr.bf16.mxu0 0
      %1153 = vmatmul.mubr.bf16.gmra.mxu0 %v1073
      %v1154 = vpop.f32.mrf.mxu0
      %v1155 = vadd.f32 0.0, %v1154
      %v1156 = vpop.f32.mrf.mxu0
      %v1157 = vpop.f32.mrf.mxu0
      %v1158 = vadd.f32 0.0, %v1157
      %v1159 = vpop.f32.mrf.mxu0
      %1160 = vmatprep.mubr.bf16.mxu0 0
      %1161 = vmatmul.mubr.bf16.gmra.mxu0 %v1076
      %v1162 = vpop.f32.mrf.mxu0
      %v1163 = vadd.f32 0.0, %v1162
      %v1164 = vpop.f32.mrf.mxu0
      %v1165 = vpop.f32.mrf.mxu0
      %v1166 = vadd.f32 0.0, %v1165
      %v1167 = vpop.f32.mrf.mxu0
      %1168 = vmatprep.mubr.bf16.mxu0 0
      %1169 = vmatmul.mubr.bf16.gmra.mxu0 %v1079
      %v1170 = vpop.f32.mrf.mxu0
      %v1171 = vadd.f32 0.0, %v1170
      %v1172 = vpop.f32.mrf.mxu0
      %v1173 = vpop.f32.mrf.mxu0
      %v1174 = vadd.f32 0.0, %v1173
      %v1175 = vpop.f32.mrf.mxu0
      %1176 = vmatprep.mubr.bf16.mxu0 0
      %1177 = vmatmul.mubr.bf16.gmra.mxu0 %v1082
      %v1178 = vpop.f32.mrf.mxu0
      %v1179 = vadd.f32 0.0, %v1178
      %v1180 = vpop.f32.mrf.mxu0
      %v1181 = vpop.f32.mrf.mxu0
      %v1182 = vadd.f32 0.0, %v1181
      %v1183 = vpop.f32.mrf.mxu0
      %1184 = vdwg.mxu0
      %v1201 = vunpack.c.l.b16 %v813
      %v1202 = vunpack.c.l.b16 %v814
      %v1203 = vunpack.c.l.b16 %v815
      %v1204 = vunpack.c.l.b16 %v816
      %v1205 = vunpack.c.l.b16 %v817
      %v1206 = vunpack.c.l.b16 %v818
      %v1207 = vunpack.c.l.b16 %v819
      %v1208 = vunpack.c.l.b16 %v820
      %v1209 = vunpack.c.l.b16 %v821
      %v1210 = vunpack.c.l.b16 %v822
      %v1211 = vunpack.c.l.b16 %v823
      %v1212 = vunpack.c.l.b16 %v824
      %v1213 = vunpack.c.l.b16 %v825
      %v1214 = vunpack.c.l.b16 %v826
      %v1215 = vunpack.c.l.b16 %v827
      %v1216 = vunpack.c.l.b16 %v828
      %v1217 = vpack.c.b16 %v1202, %v1201
      %v1218 = vpack.c.b16 %v1204, %v1203
      %v1219 = vpack.c.b16 %v1206, %v1205
      %v1220 = vpack.c.b16 %v1208, %v1207
      %v1221 = vpack.c.b16 %v1210, %v1209
      %v1222 = vpack.c.b16 %v1212, %v1211
      %v1223 = vpack.c.b16 %v1214, %v1213
      %v1224 = vpack.c.b16 %v1216, %v1215
      %v1226 = vsel %vm1059, %v1217, 0
      %v1229 = vsel %vm1059, %v1218, 0
      %v1232 = vsel %vm1059, %v1219, 0
      %v1235 = vsel %vm1059, %v1220, 0
      %v1238 = vsel %vm1059, %v1221, 0
      %v1241 = vsel %vm1059, %v1222, 0
      %v1244 = vsel %vm1059, %v1223, 0
      %v1247 = vsel %vm1059, %v1224, 0
      %v1250 = vsel %vm1084, %v829, 0
      %1252 = vmatprep.subr.bf16.mxu0 0
      %1253 = vmatpush1.bf16.msra.mxu0 0
      %1254 = vmatprep.subr.bf16.mxu0 0
      %1255 = vmatpush1.bf16.msra.mxu0 0
      %1256 = vmatprep.subr.bf16.mxu0 0
      %1257 = vmatpush1.bf16.msra.mxu0 0
      %1258 = vmatprep.subr.bf16.mxu0 0
      %1259 = vmatpush1.bf16.msra.mxu0 0
      %1260 = vmatprep.subr.bf16.mxu0 0
      %1261 = vmatpush1.bf16.msra.mxu0 0
      %1262 = vmatprep.subr.bf16.mxu0 0
      %1263 = vmatpush1.bf16.msra.mxu0 0
      %1264 = vmatprep.subr.bf16.mxu0 0
      %1265 = vmatpush1.bf16.msra.mxu0 0
      %1266 = vmatprep.subr.bf16.mxu0 0
      %1267 = vmatpush1.bf16.msra.mxu0 %v1250
      %1268 = vmatprep.subr.bf16.mxu0 0
      %1269 = vmatpush2.bf16.msra.mxu0 0
      %1270 = vmatprep.subr.bf16.mxu0 0
      %1271 = vmatpush2.bf16.msra.mxu0 0
      %1272 = vmatprep.subr.bf16.mxu0 0
      %1273 = vmatpush2.bf16.msra.mxu0 0
      %1274 = vmatprep.subr.bf16.mxu0 0
      %1275 = vmatpush2.bf16.msra.mxu0 0
      %1276 = vmatprep.subr.bf16.mxu0 0
      %1277 = vmatpush2.bf16.msra.mxu0 0
      %1278 = vmatprep.subr.bf16.mxu0 0
      %1279 = vmatpush2.bf16.msra.mxu0 0
      %1280 = vmatprep.subr.bf16.mxu0 0
      %1281 = vmatpush2.bf16.msra.mxu0 0
      %1282 = vmatprep.subr.bf16.mxu0 0
      %1283 = vmatpush2.bf16.msra.mxu0 0
      %1284 = vmatprep.mubr.bf16.mxu0 0
      %1285 = vmatmul.mubr.bf16.gmra.mxu0 %v1226
      %v1286 = vpop.f32.mrf.mxu0
      %v1287 = vadd.f32 %v1123, %v1286
      %v1288 = vpop.f32.mrf.mxu0
      %v1289 = vpop.f32.mrf.mxu0
      %v1290 = vadd.f32 %v1126, %v1289
      %v1291 = vpop.f32.mrf.mxu0
      %1292 = vmatprep.mubr.bf16.mxu0 0
      %1293 = vmatmul.mubr.bf16.gmra.mxu0 %v1229
      %v1294 = vpop.f32.mrf.mxu0
      %v1295 = vadd.f32 %v1131, %v1294
      %v1296 = vpop.f32.mrf.mxu0
      %v1297 = vpop.f32.mrf.mxu0
      %v1298 = vadd.f32 %v1134, %v1297
      %v1299 = vpop.f32.mrf.mxu0
      %1300 = vmatprep.mubr.bf16.mxu0 0
      %1301 = vmatmul.mubr.bf16.gmra.mxu0 %v1232
      %v1302 = vpop.f32.mrf.mxu0
      %v1303 = vadd.f32 %v1139, %v1302
      %v1304 = vpop.f32.mrf.mxu0
      %v1305 = vpop.f32.mrf.mxu0
      %v1306 = vadd.f32 %v1142, %v1305
      %v1307 = vpop.f32.mrf.mxu0
      %1308 = vmatprep.mubr.bf16.mxu0 0
      %1309 = vmatmul.mubr.bf16.gmra.mxu0 %v1235
      %v1310 = vpop.f32.mrf.mxu0
      %v1311 = vadd.f32 %v1147, %v1310
      %v1312 = vpop.f32.mrf.mxu0
      %v1313 = vpop.f32.mrf.mxu0
      %v1314 = vadd.f32 %v1150, %v1313
      %v1315 = vpop.f32.mrf.mxu0
      %1316 = vmatprep.mubr.bf16.mxu0 0
      %1317 = vmatmul.mubr.bf16.gmra.mxu0 %v1238
      %v1318 = vpop.f32.mrf.mxu0
      %v1319 = vadd.f32 %v1155, %v1318
      %v1320 = vpop.f32.mrf.mxu0
      %v1321 = vpop.f32.mrf.mxu0
      %v1322 = vadd.f32 %v1158, %v1321
      %v1323 = vpop.f32.mrf.mxu0
      %1324 = vmatprep.mubr.bf16.mxu0 0
      %1325 = vmatmul.mubr.bf16.gmra.mxu0 %v1241
      %v1326 = vpop.f32.mrf.mxu0
      %v1327 = vadd.f32 %v1163, %v1326
      %v1328 = vpop.f32.mrf.mxu0
      %v1329 = vpop.f32.mrf.mxu0
      %v1330 = vadd.f32 %v1166, %v1329
      %v1331 = vpop.f32.mrf.mxu0
      %1332 = vmatprep.mubr.bf16.mxu0 0
      %1333 = vmatmul.mubr.bf16.gmra.mxu0 %v1244
      %v1334 = vpop.f32.mrf.mxu0
      %v1335 = vadd.f32 %v1171, %v1334
      %v1336 = vpop.f32.mrf.mxu0
      %v1337 = vpop.f32.mrf.mxu0
      %v1338 = vadd.f32 %v1174, %v1337
      %v1339 = vpop.f32.mrf.mxu0
      %1340 = vmatprep.mubr.bf16.mxu0 0
      %1341 = vmatmul.mubr.bf16.gmra.mxu0 %v1247
      %v1342 = vpop.f32.mrf.mxu0
      %v1343 = vadd.f32 %v1179, %v1342
      %v1344 = vpop.f32.mrf.mxu0
      %v1345 = vpop.f32.mrf.mxu0
      %v1346 = vadd.f32 %v1182, %v1345
      %v1347 = vpop.f32.mrf.mxu0
      %1348 = vdwg.mxu0
      %v1349 = vld [vmem:[%s812] sm:$0xe]
      %v1350 = vld [vmem:[%s812 + $0xc] sm:$0xe]
      %v1351 = vld [vmem:[%s812 + $0x18] sm:$0xe]
      %v1352 = vld [vmem:[%s812 + $0x24] sm:$0xe]
      %v1353 = vld [vmem:[%s812 + $0x30] sm:$0xe]
      %v1354 = vld [vmem:[%s812 + $0x3c] sm:$0xe]
      %v1355 = vld [vmem:[%s812 + $0x48] sm:$0xe]
      %v1356 = vld [vmem:[%s812 + $0x54] sm:$0xe]
      %vm1373 = vcmask 1042432
      %vm1374 = vcmask 1046532
      %vm1375 = vmor %vm1373, %vm1374
      %v1376 = vrot.slane %v1349, 5
      %v1377 = vrot.slane %v1376, 4
      %v1378 = vrot.slane %v814, 5
      %v1379 = vsel %vm1375, %v1377, %v1378
      %v1380 = vrot.slane %v1378, 4
      %v1381 = vrot.slane %v830, 5
      %v1382 = vsel %vm1375, %v1380, %v1381
      %v1383 = vrot.slane %v1350, 5
      %v1384 = vrot.slane %v1383, 4
      %v1385 = vrot.slane %v816, 5
      %v1386 = vsel %vm1375, %v1384, %v1385
      %v1387 = vrot.slane %v1385, 4
      %v1388 = vrot.slane %v831, 5
      %v1389 = vsel %vm1375, %v1387, %v1388
      %v1390 = vrot.slane %v1351, 5
      %v1391 = vrot.slane %v1390, 4
      %v1392 = vrot.slane %v818, 5
      %v1393 = vsel %vm1375, %v1391, %v1392
      %v1394 = vrot.slane %v1392, 4
      %v1395 = vrot.slane %v832, 5
      %v1396 = vsel %vm1375, %v1394, %v1395
      %v1397 = vrot.slane %v1352, 5
      %v1398 = vrot.slane %v1397, 4
      %v1399 = vrot.slane %v820, 5
      %v1400 = vsel %vm1375, %v1398, %v1399
      %v1401 = vrot.slane %v1399, 4
      %v1402 = vrot.slane %v833, 5
      %v1403 = vsel %vm1375, %v1401, %v1402
      %v1404 = vrot.slane %v1353, 5
      %v1405 = vrot.slane %v1404, 4
      %v1406 = vrot.slane %v822, 5
      %v1407 = vsel %vm1375, %v1405, %v1406
      %v1408 = vrot.slane %v1406, 4
      %v1409 = vrot.slane %v834, 5
      %v1410 = vsel %vm1375, %v1408, %v1409
      %v1411 = vrot.slane %v1354, 5
      %v1412 = vrot.slane %v1411, 4
      %v1413 = vrot.slane %v824, 5
      %v1414 = vsel %vm1375, %v1412, %v1413
      %v1415 = vrot.slane %v1413, 4
      %v1416 = vrot.slane %v835, 5
      %v1417 = vsel %vm1375, %v1415, %v1416
      %v1418 = vrot.slane %v1355, 5
      %v1419 = vrot.slane %v1418, 4
      %v1420 = vrot.slane %v826, 5
      %v1421 = vsel %vm1375, %v1419, %v1420
      %v1422 = vrot.slane %v1420, 4
      %v1423 = vrot.slane %v836, 5
      %v1424 = vsel %vm1375, %v1422, %v1423
      %v1425 = vrot.slane %v1356, 5
      %v1426 = vrot.slane %v1425, 4
      %v1427 = vrot.slane %v828, 5
      %v1428 = vsel %vm1375, %v1426, %v1427
      %v1429 = vrot.slane %v1427, 4
      %v1430 = vrot.slane %v837, 5
      %v1431 = vsel %vm1375, %v1429, %v1430
      %s1432 = scalar_lea.vmem %s1, 8
      %v1433 = vld [vmem:[%s1432] sm:$0xf]
      %v1434 = vunpack.c.l.b16 %v1379
      %v1435 = vunpack.c.l.b16 %v1382
      %v1436 = vunpack.c.l.b16 %v1386
      %v1437 = vunpack.c.l.b16 %v1389
      %v1438 = vunpack.c.l.b16 %v1393
      %v1439 = vunpack.c.l.b16 %v1396
      %v1440 = vunpack.c.l.b16 %v1400
      %v1441 = vunpack.c.l.b16 %v1403
      %v1442 = vunpack.c.l.b16 %v1407
      %v1443 = vunpack.c.l.b16 %v1410
      %v1444 = vunpack.c.l.b16 %v1414
      %v1445 = vunpack.c.l.b16 %v1417
      %v1446 = vunpack.c.l.b16 %v1421
      %v1447 = vunpack.c.l.b16 %v1424
      %v1448 = vunpack.c.l.b16 %v1428
      %v1449 = vunpack.c.l.b16 %v1431
      %v1450 = vpack.c.b16 %v1435, %v1434
      %v1451 = vpack.c.b16 %v1437, %v1436
      %v1452 = vpack.c.b16 %v1439, %v1438
      %v1453 = vpack.c.b16 %v1441, %v1440
      %v1454 = vpack.c.b16 %v1443, %v1442
      %v1455 = vpack.c.b16 %v1445, %v1444
      %v1456 = vpack.c.b16 %v1447, %v1446
      %v1457 = vpack.c.b16 %v1449, %v1448
      %v1459 = vsel %vm1059, %v1450, 0
      %v1462 = vsel %vm1059, %v1451, 0
      %v1465 = vsel %vm1059, %v1452, 0
      %v1468 = vsel %vm1059, %v1453, 0
      %v1471 = vsel %vm1059, %v1454, 0
      %v1474 = vsel %vm1059, %v1455, 0
      %v1477 = vsel %vm1059, %v1456, 0
      %v1480 = vsel %vm1059, %v1457, 0
      %v1483 = vsel %vm1084, %v1433, 0
      %1485 = vmatprep.subr.bf16.mxu0 0
      %1486 = vmatpush1.bf16.msra.mxu0 0
      %1487 = vmatprep.subr.bf16.mxu0 0
      %1488 = vmatpush1.bf16.msra.mxu0 0
      %1489 = vmatprep.subr.bf16.mxu0 0
      %1490 = vmatpush1.bf16.msra.mxu0 0
      %1491 = vmatprep.subr.bf16.mxu0 0
      %1492 = vmatpush1.bf16.msra.mxu0 0
      %1493 = vmatprep.subr.bf16.mxu0 0
      %1494 = vmatpush1.bf16.msra.mxu0 0
      %1495 = vmatprep.subr.bf16.mxu0 0
      %1496 = vmatpush1.bf16.msra.mxu0 0
      %1497 = vmatprep.subr.bf16.mxu0 0
      %1498 = vmatpush1.bf16.msra.mxu0 0
      %1499 = vmatprep.subr.bf16.mxu0 0
      %1500 = vmatpush1.bf16.msra.mxu0 %v1483
      %1501 = vmatprep.subr.bf16.mxu0 0
      %1502 = vmatpush2.bf16.msra.mxu0 0
      %1503 = vmatprep.subr.bf16.mxu0 0
      %1504 = vmatpush2.bf16.msra.mxu0 0
      %1505 = vmatprep.subr.bf16.mxu0 0
      %1506 = vmatpush2.bf16.msra.mxu0 0
      %1507 = vmatprep.subr.bf16.mxu0 0
      %1508 = vmatpush2.bf16.msra.mxu0 0
      %1509 = vmatprep.subr.bf16.mxu0 0
      %1510 = vmatpush2.bf16.msra.mxu0 0
      %1511 = vmatprep.subr.bf16.mxu0 0
      %1512 = vmatpush2.bf16.msra.mxu0 0
      %1513 = vmatprep.subr.bf16.mxu0 0
      %1514 = vmatpush2.bf16.msra.mxu0 0
      %1515 = vmatprep.subr.bf16.mxu0 0
      %1516 = vmatpush2.bf16.msra.mxu0 0
      %1517 = vmatprep.mubr.bf16.mxu0 0
      %1518 = vmatmul.mubr.bf16.gmra.mxu0 %v1459
      %v1519 = vpop.f32.mrf.mxu0
      %v1520 = vadd.f32 0.0, %v1519
      %v1521 = vpop.f32.mrf.mxu0
      %v1522 = vpop.f32.mrf.mxu0
      %v1523 = vadd.f32 0.0, %v1522
      %v1524 = vpop.f32.mrf.mxu0
      %1525 = vmatprep.mubr.bf16.mxu0 0
      %1526 = vmatmul.mubr.bf16.gmra.mxu0 %v1462
      %v1527 = vpop.f32.mrf.mxu0
      %v1528 = vadd.f32 0.0, %v1527
      %v1529 = vpop.f32.mrf.mxu0
      %v1530 = vpop.f32.mrf.mxu0
      %v1531 = vadd.f32 0.0, %v1530
      %v1532 = vpop.f32.mrf.mxu0
      %1533 = vmatprep.mubr.bf16.mxu0 0
      %1534 = vmatmul.mubr.bf16.gmra.mxu0 %v1465
      %v1535 = vpop.f32.mrf.mxu0
      %v1536 = vadd.f32 0.0, %v1535
      %v1537 = vpop.f32.mrf.mxu0
      %v1538 = vpop.f32.mrf.mxu0
      %v1539 = vadd.f32 0.0, %v1538
      %v1540 = vpop.f32.mrf.mxu0
      %1541 = vmatprep.mubr.bf16.mxu0 0
      %1542 = vmatmul.mubr.bf16.gmra.mxu0 %v1468
      %v1543 = vpop.f32.mrf.mxu0
      %v1544 = vadd.f32 0.0, %v1543
      %v1545 = vpop.f32.mrf.mxu0
      %v1546 = vpop.f32.mrf.mxu0
      %v1547 = vadd.f32 0.0, %v1546
      %v1548 = vpop.f32.mrf.mxu0
      %1549 = vmatprep.mubr.bf16.mxu0 0
      %1550 = vmatmul.mubr.bf16.gmra.mxu0 %v1471
      %v1551 = vpop.f32.mrf.mxu0
      %v1552 = vadd.f32 0.0, %v1551
      %v1553 = vpop.f32.mrf.mxu0
      %v1554 = vpop.f32.mrf.mxu0
      %v1555 = vadd.f32 0.0, %v1554
      %v1556 = vpop.f32.mrf.mxu0
      %1557 = vmatprep.mubr.bf16.mxu0 0
      %1558 = vmatmul.mubr.bf16.gmra.mxu0 %v1474
      %v1559 = vpop.f32.mrf.mxu0
      %v1560 = vadd.f32 0.0, %v1559
      %v1561 = vpop.f32.mrf.mxu0
      %v1562 = vpop.f32.mrf.mxu0
      %v1563 = vadd.f32 0.0, %v1562
      %v1564 = vpop.f32.mrf.mxu0
      %1565 = vmatprep.mubr.bf16.mxu0 0
      %1566 = vmatmul.mubr.bf16.gmra.mxu0 %v1477
      %v1567 = vpop.f32.mrf.mxu0
      %v1568 = vadd.f32 0.0, %v1567
      %v1569 = vpop.f32.mrf.mxu0
      %v1570 = vpop.f32.mrf.mxu0
      %v1571 = vadd.f32 0.0, %v1570
      %v1572 = vpop.f32.mrf.mxu0
      %1573 = vmatprep.mubr.bf16.mxu0 0
      %1574 = vmatmul.mubr.bf16.gmra.mxu0 %v1480
      %v1575 = vpop.f32.mrf.mxu0
      %v1576 = vadd.f32 0.0, %v1575
      %v1577 = vpop.f32.mrf.mxu0
      %v1578 = vpop.f32.mrf.mxu0
      %v1579 = vadd.f32 0.0, %v1578
      %v1580 = vpop.f32.mrf.mxu0
      %1581 = vdwg.mxu0
      %v1582 = vadd.f32 %v1287, %v1520
      %v1583 = vadd.f32 %v1290, %v1523
      %v1584 = vadd.f32 %v1295, %v1528
      %v1585 = vadd.f32 %v1298, %v1531
      %v1586 = vadd.f32 %v1303, %v1536
      %v1587 = vadd.f32 %v1306, %v1539
      %v1588 = vadd.f32 %v1311, %v1544
      %v1589 = vadd.f32 %v1314, %v1547
      %v1590 = vadd.f32 %v1319, %v1552
      %v1591 = vadd.f32 %v1322, %v1555
      %v1592 = vadd.f32 %v1327, %v1560
      %v1593 = vadd.f32 %v1330, %v1563
      %v1594 = vadd.f32 %v1335, %v1568
      %v1595 = vadd.f32 %v1338, %v1571
      %v1596 = vadd.f32 %v1343, %v1576
      %v1597 = vadd.f32 %v1346, %v1579
      %s1598 = sadd.s32 %s809, 1
      %s1599 = smul.u32 %s1598, 3
      %s1600 = smul.addr %s1599, 4
      %s1601 = scalar_lea.vmem [#allocation2], %s1600
      %v1602 = vld [vmem:[%s1601] sm:$0xf]
      %v1603 = vld [vmem:[%s1601 + $0x4] sm:$0xf]
      %v1604 = vld [vmem:[%s1601 + $0xc] sm:$0xf]
      %v1605 = vld [vmem:[%s1601 + $0x10] sm:$0xf]
      %v1606 = vld [vmem:[%s1601 + $0x18] sm:$0xf]
      %v1607 = vld [vmem:[%s1601 + $0x1c] sm:$0xf]
      %v1608 = vld [vmem:[%s1601 + $0x24] sm:$0xf]
      %v1609 = vld [vmem:[%s1601 + $0x28] sm:$0xf]
      %v1610 = vld [vmem:[%s1601 + $0x30] sm:$0xf]
      %v1611 = vld [vmem:[%s1601 + $0x34] sm:$0xf]
      %v1612 = vld [vmem:[%s1601 + $0x3c] sm:$0xf]
      %v1613 = vld [vmem:[%s1601 + $0x40] sm:$0xf]
      %v1614 = vld [vmem:[%s1601 + $0x48] sm:$0xf]
      %v1615 = vld [vmem:[%s1601 + $0x4c] sm:$0xf]
      %v1616 = vld [vmem:[%s1601 + $0x54] sm:$0xf]
      %v1617 = vld [vmem:[%s1601 + $0x58] sm:$0xf]
      %s1618 = scalar_lea.vmem %s1, 12
      %v1619 = vld [vmem:[%s1618] sm:$0xf]
      %v1636 = vunpack.c.l.b16 %v1602
      %v1637 = vunpack.c.l.b16 %v1603
      %v1638 = vunpack.c.l.b16 %v1604
      %v1639 = vunpack.c.l.b16 %v1605
      %v1640 = vunpack.c.l.b16 %v1606
      %v1641 = vunpack.c.l.b16 %v1607
      %v1642 = vunpack.c.l.b16 %v1608
      %v1643 = vunpack.c.l.b16 %v1609
      %v1644 = vunpack.c.l.b16 %v1610
      %v1645 = vunpack.c.l.b16 %v1611
      %v1646 = vunpack.c.l.b16 %v1612
      %v1647 = vunpack.c.l.b16 %v1613
      %v1648 = vunpack.c.l.b16 %v1614
      %v1649 = vunpack.c.l.b16 %v1615
      %v1650 = vunpack.c.l.b16 %v1616
      %v1651 = vunpack.c.l.b16 %v1617
      %v1652 = vpack.c.b16 %v1637, %v1636
      %v1653 = vpack.c.b16 %v1639, %v1638
      %v1654 = vpack.c.b16 %v1641, %v1640
      %v1655 = vpack.c.b16 %v1643, %v1642
      %v1656 = vpack.c.b16 %v1645, %v1644
      %v1657 = vpack.c.b16 %v1647, %v1646
      %v1658 = vpack.c.b16 %v1649, %v1648
      %v1659 = vpack.c.b16 %v1651, %v1650
      %v1661 = vsel %vm1059, %v1652, 0
      %v1664 = vsel %vm1059, %v1653, 0
      %v1667 = vsel %vm1059, %v1654, 0
      %v1670 = vsel %vm1059, %v1655, 0
      %v1673 = vsel %vm1059, %v1656, 0
      %v1676 = vsel %vm1059, %v1657, 0
      %v1679 = vsel %vm1059, %v1658, 0
      %v1682 = vsel %vm1059, %v1659, 0
      %v1685 = vsel %vm1084, %v1619, 0
      %1687 = vmatprep.subr.bf16.mxu0 0
      %1688 = vmatpush1.bf16.msra.mxu0 0
      %1689 = vmatprep.subr.bf16.mxu0 0
      %1690 = vmatpush1.bf16.msra.mxu0 0
      %1691 = vmatprep.subr.bf16.mxu0 0
      %1692 = vmatpush1.bf16.msra.mxu0 0
      %1693 = vmatprep.subr.bf16.mxu0 0
      %1694 = vmatpush1.bf16.msra.mxu0 0
      %1695 = vmatprep.subr.bf16.mxu0 0
      %1696 = vmatpush1.bf16.msra.mxu0 0
      %1697 = vmatprep.subr.bf16.mxu0 0
      %1698 = vmatpush1.bf16.msra.mxu0 0
      %1699 = vmatprep.subr.bf16.mxu0 0
      %1700 = vmatpush1.bf16.msra.mxu0 0
      %1701 = vmatprep.subr.bf16.mxu0 0
      %1702 = vmatpush1.bf16.msra.mxu0 %v1685
      %1703 = vmatprep.subr.bf16.mxu0 0
      %1704 = vmatpush2.bf16.msra.mxu0 0
      %1705 = vmatprep.subr.bf16.mxu0 0
      %1706 = vmatpush2.bf16.msra.mxu0 0
      %1707 = vmatprep.subr.bf16.mxu0 0
      %1708 = vmatpush2.bf16.msra.mxu0 0
      %1709 = vmatprep.subr.bf16.mxu0 0
      %1710 = vmatpush2.bf16.msra.mxu0 0
      %1711 = vmatprep.subr.bf16.mxu0 0
      %1712 = vmatpush2.bf16.msra.mxu0 0
      %1713 = vmatprep.subr.bf16.mxu0 0
      %1714 = vmatpush2.bf16.msra.mxu0 0
      %1715 = vmatprep.subr.bf16.mxu0 0
      %1716 = vmatpush2.bf16.msra.mxu0 0
      %1717 = vmatprep.subr.bf16.mxu0 0
      %1718 = vmatpush2.bf16.msra.mxu0 0
      %1719 = vmatprep.mubr.bf16.mxu0 0
      %1720 = vmatmul.mubr.bf16.gmra.mxu0 %v1661
      %v1721 = vpop.f32.mrf.mxu0
      %v1722 = vadd.f32 0.0, %v1721
      %v1723 = vpop.f32.mrf.mxu0
      %v1724 = vpop.f32.mrf.mxu0
      %v1725 = vadd.f32 0.0, %v1724
      %v1726 = vpop.f32.mrf.mxu0
      %1727 = vmatprep.mubr.bf16.mxu0 0
      %1728 = vmatmul.mubr.bf16.gmra.mxu0 %v1664
      %v1729 = vpop.f32.mrf.mxu0
      %v1730 = vadd.f32 0.0, %v1729
      %v1731 = vpop.f32.mrf.mxu0
      %v1732 = vpop.f32.mrf.mxu0
      %v1733 = vadd.f32 0.0, %v1732
      %v1734 = vpop.f32.mrf.mxu0
      %1735 = vmatprep.mubr.bf16.mxu0 0
      %1736 = vmatmul.mubr.bf16.gmra.mxu0 %v1667
      %v1737 = vpop.f32.mrf.mxu0
      %v1738 = vadd.f32 0.0, %v1737
      %v1739 = vpop.f32.mrf.mxu0
      %v1740 = vpop.f32.mrf.mxu0
      %v1741 = vadd.f32 0.0, %v1740
      %v1742 = vpop.f32.mrf.mxu0
      %1743 = vmatprep.mubr.bf16.mxu0 0
      %1744 = vmatmul.mubr.bf16.gmra.mxu0 %v1670
      %v1745 = vpop.f32.mrf.mxu0
      %v1746 = vadd.f32 0.0, %v1745
      %v1747 = vpop.f32.mrf.mxu0
      %v1748 = vpop.f32.mrf.mxu0
      %v1749 = vadd.f32 0.0, %v1748
      %v1750 = vpop.f32.mrf.mxu0
      %1751 = vmatprep.mubr.bf16.mxu0 0
      %1752 = vmatmul.mubr.bf16.gmra.mxu0 %v1673
      %v1753 = vpop.f32.mrf.mxu0
      %v1754 = vadd.f32 0.0, %v1753
      %v1755 = vpop.f32.mrf.mxu0
      %v1756 = vpop.f32.mrf.mxu0
      %v1757 = vadd.f32 0.0, %v1756
      %v1758 = vpop.f32.mrf.mxu0
      %1759 = vmatprep.mubr.bf16.mxu0 0
      %1760 = vmatmul.mubr.bf16.gmra.mxu0 %v1676
      %v1761 = vpop.f32.mrf.mxu0
      %v1762 = vadd.f32 0.0, %v1761
      %v1763 = vpop.f32.mrf.mxu0
      %v1764 = vpop.f32.mrf.mxu0
      %v1765 = vadd.f32 0.0, %v1764
      %v1766 = vpop.f32.mrf.mxu0
      %1767 = vmatprep.mubr.bf16.mxu0 0
      %1768 = vmatmul.mubr.bf16.gmra.mxu0 %v1679
      %v1769 = vpop.f32.mrf.mxu0
      %v1770 = vadd.f32 0.0, %v1769
      %v1771 = vpop.f32.mrf.mxu0
      %v1772 = vpop.f32.mrf.mxu0
      %v1773 = vadd.f32 0.0, %v1772
      %v1774 = vpop.f32.mrf.mxu0
      %1775 = vmatprep.mubr.bf16.mxu0 0
      %1776 = vmatmul.mubr.bf16.gmra.mxu0 %v1682
      %v1777 = vpop.f32.mrf.mxu0
      %v1778 = vadd.f32 0.0, %v1777
      %v1779 = vpop.f32.mrf.mxu0
      %v1780 = vpop.f32.mrf.mxu0
      %v1781 = vadd.f32 0.0, %v1780
      %v1782 = vpop.f32.mrf.mxu0
      %1783 = vdwg.mxu0
      %v1784 = vadd.f32 %v1582, %v1722
      %v1785 = vadd.f32 %v1583, %v1725
      %v1786 = vadd.f32 %v1584, %v1730
      %v1787 = vadd.f32 %v1585, %v1733
      %v1788 = vadd.f32 %v1586, %v1738
      %v1789 = vadd.f32 %v1587, %v1741
      %v1790 = vadd.f32 %v1588, %v1746
      %v1791 = vadd.f32 %v1589, %v1749
      %v1792 = vadd.f32 %v1590, %v1754
      %v1793 = vadd.f32 %v1591, %v1757
      %v1794 = vadd.f32 %v1592, %v1762
      %v1795 = vadd.f32 %v1593, %v1765
      %v1796 = vadd.f32 %v1594, %v1770
      %v1797 = vadd.f32 %v1595, %v1773
      %v1798 = vadd.f32 %v1596, %v1778
      %v1799 = vadd.f32 %v1597, %v1781
      %v1800 = vld [vmem:[%s1601] sm:$0xf]
      %v1801 = vld [vmem:[%s1601 + $0x4] sm:$0xf]
      %v1802 = vld [vmem:[%s1601 + $0x8] sm:$0x1]
      %v1803 = vld [vmem:[%s1601 + $0xc] sm:$0xf]
      %v1804 = vld [vmem:[%s1601 + $0x10] sm:$0xf]
      %v1805 = vld [vmem:[%s1601 + $0x14] sm:$0x1]
      %v1806 = vld [vmem:[%s1601 + $0x18] sm:$0xf]
      %v1807 = vld [vmem:[%s1601 + $0x1c] sm:$0xf]
      %v1808 = vld [vmem:[%s1601 + $0x20] sm:$0x1]
      %v1809 = vld [vmem:[%s1601 + $0x24] sm:$0xf]
      %v1810 = vld [vmem:[%s1601 + $0x28] sm:$0xf]
      %v1811 = vld [vmem:[%s1601 + $0x2c] sm:$0x1]
      %v1812 = vld [vmem:[%s1601 + $0x30] sm:$0xf]
      %v1813 = vld [vmem:[%s1601 + $0x34] sm:$0xf]
      %v1814 = vld [vmem:[%s1601 + $0x38] sm:$0x1]
      %v1815 = vld [vmem:[%s1601 + $0x3c] sm:$0xf]
      %v1816 = vld [vmem:[%s1601 + $0x40] sm:$0xf]
      %v1817 = vld [vmem:[%s1601 + $0x44] sm:$0x1]
      %v1818 = vld [vmem:[%s1601 + $0x48] sm:$0xf]
      %v1819 = vld [vmem:[%s1601 + $0x4c] sm:$0xf]
      %v1820 = vld [vmem:[%s1601 + $0x50] sm:$0x1]
      %v1821 = vld [vmem:[%s1601 + $0x54] sm:$0xf]
      %v1822 = vld [vmem:[%s1601 + $0x58] sm:$0xf]
      %v1823 = vld [vmem:[%s1601 + $0x5c] sm:$0x1]
      %v1825 = vshrl.u32 %v1800, 16
      %v1827 = vrot.slane %v1825, 4
      %v1828 = vshll.u32 %v1800, 16
      %v1830 = vrot.slane %v1828, 5
      %v1831 = vor.u32 %v1827, %v1830
      %v1832 = vrot.slane %v1831, 4
      %v1834 = vshll.u32 %v1801, 16
      %v1836 = vrot.slane %v1834, 5
      %v1837 = vsel %vm840, %v1832, %v1836
      %v1838 = vshrl.u32 %v1801, 16
      %v1840 = vrot.slane %v1838, 4
      %v1841 = vor.u32 %v1840, %v1836
      %v1842 = vrot.slane %v1841, 4
      %v1844 = vshll.u32 %v1802, 16
      %v1846 = vrot.slane %v1844, 5
      %v1847 = vsel %vm840, %v1842, %v1846
      %v1849 = vshrl.u32 %v1803, 16
      %v1851 = vrot.slane %v1849, 4
      %v1852 = vshll.u32 %v1803, 16
      %v1854 = vrot.slane %v1852, 5
      %v1855 = vor.u32 %v1851, %v1854
      %v1856 = vrot.slane %v1855, 4
      %v1858 = vshll.u32 %v1804, 16
      %v1860 = vrot.slane %v1858, 5
      %v1861 = vsel %vm840, %v1856, %v1860
      %v1862 = vshrl.u32 %v1804, 16
      %v1864 = vrot.slane %v1862, 4
      %v1865 = vor.u32 %v1864, %v1860
      %v1866 = vrot.slane %v1865, 4
      %v1868 = vshll.u32 %v1805, 16
      %v1870 = vrot.slane %v1868, 5
      %v1871 = vsel %vm840, %v1866, %v1870
      %v1873 = vshrl.u32 %v1806, 16
      %v1875 = vrot.slane %v1873, 4
      %v1876 = vshll.u32 %v1806, 16
      %v1878 = vrot.slane %v1876, 5
      %v1879 = vor.u32 %v1875, %v1878
      %v1880 = vrot.slane %v1879, 4
      %v1882 = vshll.u32 %v1807, 16
      %v1884 = vrot.slane %v1882, 5
      %v1885 = vsel %vm840, %v1880, %v1884
      %v1886 = vshrl.u32 %v1807, 16
      %v1888 = vrot.slane %v1886, 4
      %v1889 = vor.u32 %v1888, %v1884
      %v1890 = vrot.slane %v1889, 4
      %v1892 = vshll.u32 %v1808, 16
      %v1894 = vrot.slane %v1892, 5
      %v1895 = vsel %vm840, %v1890, %v1894
      %v1897 = vshrl.u32 %v1809, 16
      %v1899 = vrot.slane %v1897, 4
      %v1900 = vshll.u32 %v1809, 16
      %v1902 = vrot.slane %v1900, 5
      %v1903 = vor.u32 %v1899, %v1902
      %v1904 = vrot.slane %v1903, 4
      %v1906 = vshll.u32 %v1810, 16
      %v1908 = vrot.slane %v1906, 5
      %v1909 = vsel %vm840, %v1904, %v1908
      %v1910 = vshrl.u32 %v1810, 16
      %v1912 = vrot.slane %v1910, 4
      %v1913 = vor.u32 %v1912, %v1908
      %v1914 = vrot.slane %v1913, 4
      %v1916 = vshll.u32 %v1811, 16
      %v1918 = vrot.slane %v1916, 5
      %v1919 = vsel %vm840, %v1914, %v1918
      %v1921 = vshrl.u32 %v1812, 16
      %v1923 = vrot.slane %v1921, 4
      %v1924 = vshll.u32 %v1812, 16
      %v1926 = vrot.slane %v1924, 5
      %v1927 = vor.u32 %v1923, %v1926
      %v1928 = vrot.slane %v1927, 4
      %v1930 = vshll.u32 %v1813, 16
      %v1932 = vrot.slane %v1930, 5
      %v1933 = vsel %vm840, %v1928, %v1932
      %v1934 = vshrl.u32 %v1813, 16
      %v1936 = vrot.slane %v1934, 4
      %v1937 = vor.u32 %v1936, %v1932
      %v1938 = vrot.slane %v1937, 4
      %v1940 = vshll.u32 %v1814, 16
      %v1942 = vrot.slane %v1940, 5
      %v1943 = vsel %vm840, %v1938, %v1942
      %v1945 = vshrl.u32 %v1815, 16
      %v1947 = vrot.slane %v1945, 4
      %v1948 = vshll.u32 %v1815, 16
      %v1950 = vrot.slane %v1948, 5
      %v1951 = vor.u32 %v1947, %v1950
      %v1952 = vrot.slane %v1951, 4
      %v1954 = vshll.u32 %v1816, 16
      %v1956 = vrot.slane %v1954, 5
      %v1957 = vsel %vm840, %v1952, %v1956
      %v1958 = vshrl.u32 %v1816, 16
      %v1960 = vrot.slane %v1958, 4
      %v1961 = vor.u32 %v1960, %v1956
      %v1962 = vrot.slane %v1961, 4
      %v1964 = vshll.u32 %v1817, 16
      %v1966 = vrot.slane %v1964, 5
      %v1967 = vsel %vm840, %v1962, %v1966
      %v1969 = vshrl.u32 %v1818, 16
      %v1971 = vrot.slane %v1969, 4
      %v1972 = vshll.u32 %v1818, 16
      %v1974 = vrot.slane %v1972, 5
      %v1975 = vor.u32 %v1971, %v1974
      %v1976 = vrot.slane %v1975, 4
      %v1978 = vshll.u32 %v1819, 16
      %v1980 = vrot.slane %v1978, 5
      %v1981 = vsel %vm840, %v1976, %v1980
      %v1982 = vshrl.u32 %v1819, 16
      %v1984 = vrot.slane %v1982, 4
      %v1985 = vor.u32 %v1984, %v1980
      %v1986 = vrot.slane %v1985, 4
      %v1988 = vshll.u32 %v1820, 16
      %v1990 = vrot.slane %v1988, 5
      %v1991 = vsel %vm840, %v1986, %v1990
      %v1993 = vshrl.u32 %v1821, 16
      %v1995 = vrot.slane %v1993, 4
      %v1996 = vshll.u32 %v1821, 16
      %v1998 = vrot.slane %v1996, 5
      %v1999 = vor.u32 %v1995, %v1998
      %v2000 = vrot.slane %v1999, 4
      %v2002 = vshll.u32 %v1822, 16
      %v2004 = vrot.slane %v2002, 5
      %v2005 = vsel %vm840, %v2000, %v2004
      %v2006 = vshrl.u32 %v1822, 16
      %v2008 = vrot.slane %v2006, 4
      %v2009 = vor.u32 %v2008, %v2004
      %v2010 = vrot.slane %v2009, 4
      %v2012 = vshll.u32 %v1823, 16
      %v2014 = vrot.slane %v2012, 5
      %v2015 = vsel %vm840, %v2010, %v2014
      %s2016 = scalar_lea.vmem %s1, 16
      %v2017 = vld [vmem:[%s2016] sm:$0xf]
      %v2018 = vunpack.c.l.b16 %v1837
      %v2019 = vunpack.c.l.b16 %v1847
      %v2020 = vunpack.c.l.b16 %v1861
      %v2021 = vunpack.c.l.b16 %v1871
      %v2022 = vunpack.c.l.b16 %v1885
      %v2023 = vunpack.c.l.b16 %v1895
      %v2024 = vunpack.c.l.b16 %v1909
      %v2025 = vunpack.c.l.b16 %v1919
      %v2026 = vunpack.c.l.b16 %v1933
      %v2027 = vunpack.c.l.b16 %v1943
      %v2028 = vunpack.c.l.b16 %v1957
      %v2029 = vunpack.c.l.b16 %v1967
      %v2030 = vunpack.c.l.b16 %v1981
      %v2031 = vunpack.c.l.b16 %v1991
      %v2032 = vunpack.c.l.b16 %v2005
      %v2033 = vunpack.c.l.b16 %v2015
      %v2034 = vpack.c.b16 %v2019, %v2018
      %v2035 = vpack.c.b16 %v2021, %v2020
      %v2036 = vpack.c.b16 %v2023, %v2022
      %v2037 = vpack.c.b16 %v2025, %v2024
      %v2038 = vpack.c.b16 %v2027, %v2026
      %v2039 = vpack.c.b16 %v2029, %v2028
      %v2040 = vpack.c.b16 %v2031, %v2030
      %v2041 = vpack.c.b16 %v2033, %v2032
      %v2043 = vsel %vm1059, %v2034, 0
      %v2046 = vsel %vm1059, %v2035, 0
      %v2049 = vsel %vm1059, %v2036, 0
      %v2052 = vsel %vm1059, %v2037, 0
      %v2055 = vsel %vm1059, %v2038, 0
      %v2058 = vsel %vm1059, %v2039, 0
      %v2061 = vsel %vm1059, %v2040, 0
      %v2064 = vsel %vm1059, %v2041, 0
      %v2067 = vsel %vm1084, %v2017, 0
      %2069 = vmatprep.subr.bf16.mxu0 0
      %2070 = vmatpush1.bf16.msra.mxu0 0
      %2071 = vmatprep.subr.bf16.mxu0 0
      %2072 = vmatpush1.bf16.msra.mxu0 0
      %2073 = vmatprep.subr.bf16.mxu0 0
      %2074 = vmatpush1.bf16.msra.mxu0 0
      %2075 = vmatprep.subr.bf16.mxu0 0
      %2076 = vmatpush1.bf16.msra.mxu0 0
      %2077 = vmatprep.subr.bf16.mxu0 0
      %2078 = vmatpush1.bf16.msra.mxu0 0
      %2079 = vmatprep.subr.bf16.mxu0 0
      %2080 = vmatpush1.bf16.msra.mxu0 0
      %2081 = vmatprep.subr.bf16.mxu0 0
      %2082 = vmatpush1.bf16.msra.mxu0 0
      %2083 = vmatprep.subr.bf16.mxu0 0
      %2084 = vmatpush1.bf16.msra.mxu0 %v2067
      %2085 = vmatprep.subr.bf16.mxu0 0
      %2086 = vmatpush2.bf16.msra.mxu0 0
      %2087 = vmatprep.subr.bf16.mxu0 0
      %2088 = vmatpush2.bf16.msra.mxu0 0
      %2089 = vmatprep.subr.bf16.mxu0 0
      %2090 = vmatpush2.bf16.msra.mxu0 0
      %2091 = vmatprep.subr.bf16.mxu0 0
      %2092 = vmatpush2.bf16.msra.mxu0 0
      %2093 = vmatprep.subr.bf16.mxu0 0
      %2094 = vmatpush2.bf16.msra.mxu0 0
      %2095 = vmatprep.subr.bf16.mxu0 0
      %2096 = vmatpush2.bf16.msra.mxu0 0
      %2097 = vmatprep.subr.bf16.mxu0 0
      %2098 = vmatpush2.bf16.msra.mxu0 0
      %2099 = vmatprep.subr.bf16.mxu0 0
      %2100 = vmatpush2.bf16.msra.mxu0 0
      %2101 = vmatprep.mubr.bf16.mxu0 0
      %2102 = vmatmul.mubr.bf16.gmra.mxu0 %v2043
      %v2103 = vpop.f32.mrf.mxu0
      %v2104 = vadd.f32 0.0, %v2103
      %v2105 = vpop.f32.mrf.mxu0
      %v2106 = vpop.f32.mrf.mxu0
      %v2107 = vadd.f32 0.0, %v2106
      %v2108 = vpop.f32.mrf.mxu0
      %2109 = vmatprep.mubr.bf16.mxu0 0
      %2110 = vmatmul.mubr.bf16.gmra.mxu0 %v2046
      %v2111 = vpop.f32.mrf.mxu0
      %v2112 = vadd.f32 0.0, %v2111
      %v2113 = vpop.f32.mrf.mxu0
      %v2114 = vpop.f32.mrf.mxu0
      %v2115 = vadd.f32 0.0, %v2114
      %v2116 = vpop.f32.mrf.mxu0
      %2117 = vmatprep.mubr.bf16.mxu0 0
      %2118 = vmatmul.mubr.bf16.gmra.mxu0 %v2049
      %v2119 = vpop.f32.mrf.mxu0
      %v2120 = vadd.f32 0.0, %v2119
      %v2121 = vpop.f32.mrf.mxu0
      %v2122 = vpop.f32.mrf.mxu0
      %v2123 = vadd.f32 0.0, %v2122
      %v2124 = vpop.f32.mrf.mxu0
      %2125 = vmatprep.mubr.bf16.mxu0 0
      %2126 = vmatmul.mubr.bf16.gmra.mxu0 %v2052
      %v2127 = vpop.f32.mrf.mxu0
      %v2128 = vadd.f32 0.0, %v2127
      %v2129 = vpop.f32.mrf.mxu0
      %v2130 = vpop.f32.mrf.mxu0
      %v2131 = vadd.f32 0.0, %v2130
      %v2132 = vpop.f32.mrf.mxu0
      %2133 = vmatprep.mubr.bf16.mxu0 0
      %2134 = vmatmul.mubr.bf16.gmra.mxu0 %v2055
      %v2135 = vpop.f32.mrf.mxu0
      %v2136 = vadd.f32 0.0, %v2135
      %v2137 = vpop.f32.mrf.mxu0
      %v2138 = vpop.f32.mrf.mxu0
      %v2139 = vadd.f32 0.0, %v2138
      %v2140 = vpop.f32.mrf.mxu0
      %2141 = vmatprep.mubr.bf16.mxu0 0
      %2142 = vmatmul.mubr.bf16.gmra.mxu0 %v2058
      %v2143 = vpop.f32.mrf.mxu0
      %v2144 = vadd.f32 0.0, %v2143
      %v2145 = vpop.f32.mrf.mxu0
      %v2146 = vpop.f32.mrf.mxu0
      %v2147 = vadd.f32 0.0, %v2146
      %v2148 = vpop.f32.mrf.mxu0
      %2149 = vmatprep.mubr.bf16.mxu0 0
      %2150 = vmatmul.mubr.bf16.gmra.mxu0 %v2061
      %v2151 = vpop.f32.mrf.mxu0
      %v2152 = vadd.f32 0.0, %v2151
      %v2153 = vpop.f32.mrf.mxu0
      %v2154 = vpop.f32.mrf.mxu0
      %v2155 = vadd.f32 0.0, %v2154
      %v2156 = vpop.f32.mrf.mxu0
      %2157 = vmatprep.mubr.bf16.mxu0 0
      %2158 = vmatmul.mubr.bf16.gmra.mxu0 %v2064
      %v2159 = vpop.f32.mrf.mxu0
      %v2160 = vadd.f32 0.0, %v2159
      %v2161 = vpop.f32.mrf.mxu0
      %v2162 = vpop.f32.mrf.mxu0
      %v2163 = vadd.f32 0.0, %v2162
      %v2164 = vpop.f32.mrf.mxu0
      %2165 = vdwg.mxu0
      %v2166 = vadd.f32 %v1784, %v2104
      %v2167 = vadd.f32 %v1785, %v2107
      %v2168 = vadd.f32 %v1786, %v2112
      %v2169 = vadd.f32 %v1787, %v2115
      %v2170 = vadd.f32 %v1788, %v2120
      %v2171 = vadd.f32 %v1789, %v2123
      %v2172 = vadd.f32 %v1790, %v2128
      %v2173 = vadd.f32 %v1791, %v2131
      %v2174 = vadd.f32 %v1792, %v2136
      %v2175 = vadd.f32 %v1793, %v2139
      %v2176 = vadd.f32 %v1794, %v2144
      %v2177 = vadd.f32 %v1795, %v2147
      %v2178 = vadd.f32 %v1796, %v2152
      %v2179 = vadd.f32 %v1797, %v2155
      %v2180 = vadd.f32 %v1798, %v2160
      %v2181 = vadd.f32 %v1799, %v2163
      %v2182 = vld [vmem:[%s1601] sm:$0xe]
      %v2183 = vld [vmem:[%s1601 + $0xc] sm:$0xe]
      %v2184 = vld [vmem:[%s1601 + $0x18] sm:$0xe]
      %v2185 = vld [vmem:[%s1601 + $0x24] sm:$0xe]
      %v2186 = vld [vmem:[%s1601 + $0x30] sm:$0xe]
      %v2187 = vld [vmem:[%s1601 + $0x3c] sm:$0xe]
      %v2188 = vld [vmem:[%s1601 + $0x48] sm:$0xe]
      %v2189 = vld [vmem:[%s1601 + $0x54] sm:$0xe]
      %v2214 = vrot.slane %v2182, 5
      %v2215 = vrot.slane %v2214, 4
      %v2216 = vrot.slane %v1801, 5
      %v2217 = vsel %vm1375, %v2215, %v2216
      %v2218 = vrot.slane %v2216, 4
      %v2219 = vrot.slane %v1802, 5
      %v2220 = vsel %vm1375, %v2218, %v2219
      %v2221 = vrot.slane %v2183, 5
      %v2222 = vrot.slane %v2221, 4
      %v2223 = vrot.slane %v1804, 5
      %v2224 = vsel %vm1375, %v2222, %v2223
      %v2225 = vrot.slane %v2223, 4
      %v2226 = vrot.slane %v1805, 5
      %v2227 = vsel %vm1375, %v2225, %v2226
      %v2228 = vrot.slane %v2184, 5
      %v2229 = vrot.slane %v2228, 4
      %v2230 = vrot.slane %v1807, 5
      %v2231 = vsel %vm1375, %v2229, %v2230
      %v2232 = vrot.slane %v2230, 4
      %v2233 = vrot.slane %v1808, 5
      %v2234 = vsel %vm1375, %v2232, %v2233
      %v2235 = vrot.slane %v2185, 5
      %v2236 = vrot.slane %v2235, 4
      %v2237 = vrot.slane %v1810, 5
      %v2238 = vsel %vm1375, %v2236, %v2237
      %v2239 = vrot.slane %v2237, 4
      %v2240 = vrot.slane %v1811, 5
      %v2241 = vsel %vm1375, %v2239, %v2240
      %v2242 = vrot.slane %v2186, 5
      %v2243 = vrot.slane %v2242, 4
      %v2244 = vrot.slane %v1813, 5
      %v2245 = vsel %vm1375, %v2243, %v2244
      %v2246 = vrot.slane %v2244, 4
      %v2247 = vrot.slane %v1814, 5
      %v2248 = vsel %vm1375, %v2246, %v2247
      %v2249 = vrot.slane %v2187, 5
      %v2250 = vrot.slane %v2249, 4
      %v2251 = vrot.slane %v1816, 5
      %v2252 = vsel %vm1375, %v2250, %v2251
      %v2253 = vrot.slane %v2251, 4
      %v2254 = vrot.slane %v1817, 5
      %v2255 = vsel %vm1375, %v2253, %v2254
      %v2256 = vrot.slane %v2188, 5
      %v2257 = vrot.slane %v2256, 4
      %v2258 = vrot.slane %v1819, 5
      %v2259 = vsel %vm1375, %v2257, %v2258
      %v2260 = vrot.slane %v2258, 4
      %v2261 = vrot.slane %v1820, 5
      %v2262 = vsel %vm1375, %v2260, %v2261
      %v2263 = vrot.slane %v2189, 5
      %v2264 = vrot.slane %v2263, 4
      %v2265 = vrot.slane %v1822, 5
      %v2266 = vsel %vm1375, %v2264, %v2265
      %v2267 = vrot.slane %v2265, 4
      %v2268 = vrot.slane %v1823, 5
      %v2269 = vsel %vm1375, %v2267, %v2268
      %s2270 = scalar_lea.vmem %s1, 20
      %v2271 = vld [vmem:[%s2270] sm:$0xf]
      %v2272 = vunpack.c.l.b16 %v2217
      %v2273 = vunpack.c.l.b16 %v2220
      %v2274 = vunpack.c.l.b16 %v2224
      %v2275 = vunpack.c.l.b16 %v2227
      %v2276 = vunpack.c.l.b16 %v2231
      %v2277 = vunpack.c.l.b16 %v2234
      %v2278 = vunpack.c.l.b16 %v2238
      %v2279 = vunpack.c.l.b16 %v2241
      %v2280 = vunpack.c.l.b16 %v2245
      %v2281 = vunpack.c.l.b16 %v2248
      %v2282 = vunpack.c.l.b16 %v2252
      %v2283 = vunpack.c.l.b16 %v2255
      %v2284 = vunpack.c.l.b16 %v2259
      %v2285 = vunpack.c.l.b16 %v2262
      %v2286 = vunpack.c.l.b16 %v2266
      %v2287 = vunpack.c.l.b16 %v2269
      %v2288 = vpack.c.b16 %v2273, %v2272
      %v2289 = vpack.c.b16 %v2275, %v2274
      %v2290 = vpack.c.b16 %v2277, %v2276
      %v2291 = vpack.c.b16 %v2279, %v2278
      %v2292 = vpack.c.b16 %v2281, %v2280
      %v2293 = vpack.c.b16 %v2283, %v2282
      %v2294 = vpack.c.b16 %v2285, %v2284
      %v2295 = vpack.c.b16 %v2287, %v2286
      %v2297 = vsel %vm1059, %v2288, 0
      %v2300 = vsel %vm1059, %v2289, 0
      %v2303 = vsel %vm1059, %v2290, 0
      %v2306 = vsel %vm1059, %v2291, 0
      %v2309 = vsel %vm1059, %v2292, 0
      %v2312 = vsel %vm1059, %v2293, 0
      %v2315 = vsel %vm1059, %v2294, 0
      %v2318 = vsel %vm1059, %v2295, 0
      %v2321 = vsel %vm1084, %v2271, 0
      %2323 = vmatprep.subr.bf16.mxu0 0
      %2324 = vmatpush1.bf16.msra.mxu0 0
      %2325 = vmatprep.subr.bf16.mxu0 0
      %2326 = vmatpush1.bf16.msra.mxu0 0
      %2327 = vmatprep.subr.bf16.mxu0 0
      %2328 = vmatpush1.bf16.msra.mxu0 0
      %2329 = vmatprep.subr.bf16.mxu0 0
      %2330 = vmatpush1.bf16.msra.mxu0 0
      %2331 = vmatprep.subr.bf16.mxu0 0
      %2332 = vmatpush1.bf16.msra.mxu0 0
      %2333 = vmatprep.subr.bf16.mxu0 0
      %2334 = vmatpush1.bf16.msra.mxu0 0
      %2335 = vmatprep.subr.bf16.mxu0 0
      %2336 = vmatpush1.bf16.msra.mxu0 0
      %2337 = vmatprep.subr.bf16.mxu0 0
      %2338 = vmatpush1.bf16.msra.mxu0 %v2321
      %2339 = vmatprep.subr.bf16.mxu0 0
      %2340 = vmatpush2.bf16.msra.mxu0 0
      %2341 = vmatprep.subr.bf16.mxu0 0
      %2342 = vmatpush2.bf16.msra.mxu0 0
      %2343 = vmatprep.subr.bf16.mxu0 0
      %2344 = vmatpush2.bf16.msra.mxu0 0
      %2345 = vmatprep.subr.bf16.mxu0 0
      %2346 = vmatpush2.bf16.msra.mxu0 0
      %2347 = vmatprep.subr.bf16.mxu0 0
      %2348 = vmatpush2.bf16.msra.mxu0 0
      %2349 = vmatprep.subr.bf16.mxu0 0
      %2350 = vmatpush2.bf16.msra.mxu0 0
      %2351 = vmatprep.subr.bf16.mxu0 0
      %2352 = vmatpush2.bf16.msra.mxu0 0
      %2353 = vmatprep.subr.bf16.mxu0 0
      %2354 = vmatpush2.bf16.msra.mxu0 0
      %2355 = vmatprep.mubr.bf16.mxu0 0
      %2356 = vmatmul.mubr.bf16.gmra.mxu0 %v2297
      %v2357 = vpop.f32.mrf.mxu0
      %v2358 = vadd.f32 0.0, %v2357
      %v2359 = vpop.f32.mrf.mxu0
      %v2360 = vpop.f32.mrf.mxu0
      %v2361 = vadd.f32 0.0, %v2360
      %v2362 = vpop.f32.mrf.mxu0
      %2363 = vmatprep.mubr.bf16.mxu0 0
      %2364 = vmatmul.mubr.bf16.gmra.mxu0 %v2300
      %v2365 = vpop.f32.mrf.mxu0
      %v2366 = vadd.f32 0.0, %v2365
      %v2367 = vpop.f32.mrf.mxu0
      %v2368 = vpop.f32.mrf.mxu0
      %v2369 = vadd.f32 0.0, %v2368
      %v2370 = vpop.f32.mrf.mxu0
      %2371 = vmatprep.mubr.bf16.mxu0 0
      %2372 = vmatmul.mubr.bf16.gmra.mxu0 %v2303
      %v2373 = vpop.f32.mrf.mxu0
      %v2374 = vadd.f32 0.0, %v2373
      %v2375 = vpop.f32.mrf.mxu0
      %v2376 = vpop.f32.mrf.mxu0
      %v2377 = vadd.f32 0.0, %v2376
      %v2378 = vpop.f32.mrf.mxu0
      %2379 = vmatprep.mubr.bf16.mxu0 0
      %2380 = vmatmul.mubr.bf16.gmra.mxu0 %v2306
      %v2381 = vpop.f32.mrf.mxu0
      %v2382 = vadd.f32 0.0, %v2381
      %v2383 = vpop.f32.mrf.mxu0
      %v2384 = vpop.f32.mrf.mxu0
      %v2385 = vadd.f32 0.0, %v2384
      %v2386 = vpop.f32.mrf.mxu0
      %2387 = vmatprep.mubr.bf16.mxu0 0
      %2388 = vmatmul.mubr.bf16.gmra.mxu0 %v2309
      %v2389 = vpop.f32.mrf.mxu0
      %v2390 = vadd.f32 0.0, %v2389
      %v2391 = vpop.f32.mrf.mxu0
      %v2392 = vpop.f32.mrf.mxu0
      %v2393 = vadd.f32 0.0, %v2392
      %v2394 = vpop.f32.mrf.mxu0
      %2395 = vmatprep.mubr.bf16.mxu0 0
      %2396 = vmatmul.mubr.bf16.gmra.mxu0 %v2312
      %v2397 = vpop.f32.mrf.mxu0
      %v2398 = vadd.f32 0.0, %v2397
      %v2399 = vpop.f32.mrf.mxu0
      %v2400 = vpop.f32.mrf.mxu0
      %v2401 = vadd.f32 0.0, %v2400
      %v2402 = vpop.f32.mrf.mxu0
      %2403 = vmatprep.mubr.bf16.mxu0 0
      %2404 = vmatmul.mubr.bf16.gmra.mxu0 %v2315
      %v2405 = vpop.f32.mrf.mxu0
      %v2406 = vadd.f32 0.0, %v2405
      %v2407 = vpop.f32.mrf.mxu0
      %v2408 = vpop.f32.mrf.mxu0
      %v2409 = vadd.f32 0.0, %v2408
      %v2410 = vpop.f32.mrf.mxu0
      %2411 = vmatprep.mubr.bf16.mxu0 0
      %2412 = vmatmul.mubr.bf16.gmra.mxu0 %v2318
      %v2413 = vpop.f32.mrf.mxu0
      %v2414 = vadd.f32 0.0, %v2413
      %v2415 = vpop.f32.mrf.mxu0
      %v2416 = vpop.f32.mrf.mxu0
      %v2417 = vadd.f32 0.0, %v2416
      %v2418 = vpop.f32.mrf.mxu0
      %2419 = vdwg.mxu0
      %v2420 = vadd.f32 %v2166, %v2358
      %v2421 = vadd.f32 %v2167, %v2361
      %v2422 = vadd.f32 %v2168, %v2366
      %v2423 = vadd.f32 %v2169, %v2369
      %v2424 = vadd.f32 %v2170, %v2374
      %v2425 = vadd.f32 %v2171, %v2377
      %v2426 = vadd.f32 %v2172, %v2382
      %v2427 = vadd.f32 %v2173, %v2385
      %v2428 = vadd.f32 %v2174, %v2390
      %v2429 = vadd.f32 %v2175, %v2393
      %v2430 = vadd.f32 %v2176, %v2398
      %v2431 = vadd.f32 %v2177, %v2401
      %v2432 = vadd.f32 %v2178, %v2406
      %v2433 = vadd.f32 %v2179, %v2409
      %v2434 = vadd.f32 %v2180, %v2414
      %v2435 = vadd.f32 %v2181, %v2417
      %s2436 = sadd.s32 %s809, 2
      %s2437 = smul.u32 %s2436, 3
      %s2438 = smul.addr %s2437, 4
      %s2439 = scalar_lea.vmem [#allocation2], %s2438
      %v2440 = vld [vmem:[%s2439] sm:$0xf]
      %v2441 = vld [vmem:[%s2439 + $0x4] sm:$0xf]
      %v2442 = vld [vmem:[%s2439 + $0xc] sm:$0xf]
      %v2443 = vld [vmem:[%s2439 + $0x10] sm:$0xf]
      %v2444 = vld [vmem:[%s2439 + $0x18] sm:$0xf]
      %v2445 = vld [vmem:[%s2439 + $0x1c] sm:$0xf]
      %v2446 = vld [vmem:[%s2439 + $0x24] sm:$0xf]
      %v2447 = vld [vmem:[%s2439 + $0x28] sm:$0xf]
      %v2448 = vld [vmem:[%s2439 + $0x30] sm:$0xf]
      %v2449 = vld [vmem:[%s2439 + $0x34] sm:$0xf]
      %v2450 = vld [vmem:[%s2439 + $0x3c] sm:$0xf]
      %v2451 = vld [vmem:[%s2439 + $0x40] sm:$0xf]
      %v2452 = vld [vmem:[%s2439 + $0x48] sm:$0xf]
      %v2453 = vld [vmem:[%s2439 + $0x4c] sm:$0xf]
      %v2454 = vld [vmem:[%s2439 + $0x54] sm:$0xf]
      %v2455 = vld [vmem:[%s2439 + $0x58] sm:$0xf]
      %s2456 = scalar_lea.vmem %s1, 24
      %v2457 = vld [vmem:[%s2456] sm:$0xf]
      %v2474 = vunpack.c.l.b16 %v2440
      %v2475 = vunpack.c.l.b16 %v2441
      %v2476 = vunpack.c.l.b16 %v2442
      %v2477 = vunpack.c.l.b16 %v2443
      %v2478 = vunpack.c.l.b16 %v2444
      %v2479 = vunpack.c.l.b16 %v2445
      %v2480 = vunpack.c.l.b16 %v2446
      %v2481 = vunpack.c.l.b16 %v2447
      %v2482 = vunpack.c.l.b16 %v2448
      %v2483 = vunpack.c.l.b16 %v2449
      %v2484 = vunpack.c.l.b16 %v2450
      %v2485 = vunpack.c.l.b16 %v2451
      %v2486 = vunpack.c.l.b16 %v2452
      %v2487 = vunpack.c.l.b16 %v2453
      %v2488 = vunpack.c.l.b16 %v2454
      %v2489 = vunpack.c.l.b16 %v2455
      %v2490 = vpack.c.b16 %v2475, %v2474
      %v2491 = vpack.c.b16 %v2477, %v2476
      %v2492 = vpack.c.b16 %v2479, %v2478
      %v2493 = vpack.c.b16 %v2481, %v2480
      %v2494 = vpack.c.b16 %v2483, %v2482
      %v2495 = vpack.c.b16 %v2485, %v2484
      %v2496 = vpack.c.b16 %v2487, %v2486
      %v2497 = vpack.c.b16 %v2489, %v2488
      %v2499 = vsel %vm1059, %v2490, 0
      %v2502 = vsel %vm1059, %v2491, 0
      %v2505 = vsel %vm1059, %v2492, 0
      %v2508 = vsel %vm1059, %v2493, 0
      %v2511 = vsel %vm1059, %v2494, 0
      %v2514 = vsel %vm1059, %v2495, 0
      %v2517 = vsel %vm1059, %v2496, 0
      %v2520 = vsel %vm1059, %v2497, 0
      %v2523 = vsel %vm1084, %v2457, 0
      %2525 = vmatprep.subr.bf16.mxu0 0
      %2526 = vmatpush1.bf16.msra.mxu0 0
      %2527 = vmatprep.subr.bf16.mxu0 0
      %2528 = vmatpush1.bf16.msra.mxu0 0
      %2529 = vmatprep.subr.bf16.mxu0 0
      %2530 = vmatpush1.bf16.msra.mxu0 0
      %2531 = vmatprep.subr.bf16.mxu0 0
      %2532 = vmatpush1.bf16.msra.mxu0 0
      %2533 = vmatprep.subr.bf16.mxu0 0
      %2534 = vmatpush1.bf16.msra.mxu0 0
      %2535 = vmatprep.subr.bf16.mxu0 0
      %2536 = vmatpush1.bf16.msra.mxu0 0
      %2537 = vmatprep.subr.bf16.mxu0 0
      %2538 = vmatpush1.bf16.msra.mxu0 0
      %2539 = vmatprep.subr.bf16.mxu0 0
      %2540 = vmatpush1.bf16.msra.mxu0 %v2523
      %2541 = vmatprep.subr.bf16.mxu0 0
      %2542 = vmatpush2.bf16.msra.mxu0 0
      %2543 = vmatprep.subr.bf16.mxu0 0
      %2544 = vmatpush2.bf16.msra.mxu0 0
      %2545 = vmatprep.subr.bf16.mxu0 0
      %2546 = vmatpush2.bf16.msra.mxu0 0
      %2547 = vmatprep.subr.bf16.mxu0 0
      %2548 = vmatpush2.bf16.msra.mxu0 0
      %2549 = vmatprep.subr.bf16.mxu0 0
      %2550 = vmatpush2.bf16.msra.mxu0 0
      %2551 = vmatprep.subr.bf16.mxu0 0
      %2552 = vmatpush2.bf16.msra.mxu0 0
      %2553 = vmatprep.subr.bf16.mxu0 0
      %2554 = vmatpush2.bf16.msra.mxu0 0
      %2555 = vmatprep.subr.bf16.mxu0 0
      %2556 = vmatpush2.bf16.msra.mxu0 0
      %2557 = vmatprep.mubr.bf16.mxu0 0
      %2558 = vmatmul.mubr.bf16.gmra.mxu0 %v2499
      %v2559 = vpop.f32.mrf.mxu0
      %v2560 = vadd.f32 0.0, %v2559
      %v2561 = vpop.f32.mrf.mxu0
      %v2562 = vpop.f32.mrf.mxu0
      %v2563 = vadd.f32 0.0, %v2562
      %v2564 = vpop.f32.mrf.mxu0
      %2565 = vmatprep.mubr.bf16.mxu0 0
      %2566 = vmatmul.mubr.bf16.gmra.mxu0 %v2502
      %v2567 = vpop.f32.mrf.mxu0
      %v2568 = vadd.f32 0.0, %v2567
      %v2569 = vpop.f32.mrf.mxu0
      %v2570 = vpop.f32.mrf.mxu0
      %v2571 = vadd.f32 0.0, %v2570
      %v2572 = vpop.f32.mrf.mxu0
      %2573 = vmatprep.mubr.bf16.mxu0 0
      %2574 = vmatmul.mubr.bf16.gmra.mxu0 %v2505
      %v2575 = vpop.f32.mrf.mxu0
      %v2576 = vadd.f32 0.0, %v2575
      %v2577 = vpop.f32.mrf.mxu0
      %v2578 = vpop.f32.mrf.mxu0
      %v2579 = vadd.f32 0.0, %v2578
      %v2580 = vpop.f32.mrf.mxu0
      %2581 = vmatprep.mubr.bf16.mxu0 0
      %2582 = vmatmul.mubr.bf16.gmra.mxu0 %v2508
      %v2583 = vpop.f32.mrf.mxu0
      %v2584 = vadd.f32 0.0, %v2583
      %v2585 = vpop.f32.mrf.mxu0
      %v2586 = vpop.f32.mrf.mxu0
      %v2587 = vadd.f32 0.0, %v2586
      %v2588 = vpop.f32.mrf.mxu0
      %2589 = vmatprep.mubr.bf16.mxu0 0
      %2590 = vmatmul.mubr.bf16.gmra.mxu0 %v2511
      %v2591 = vpop.f32.mrf.mxu0
      %v2592 = vadd.f32 0.0, %v2591
      %v2593 = vpop.f32.mrf.mxu0
      %v2594 = vpop.f32.mrf.mxu0
      %v2595 = vadd.f32 0.0, %v2594
      %v2596 = vpop.f32.mrf.mxu0
      %2597 = vmatprep.mubr.bf16.mxu0 0
      %2598 = vmatmul.mubr.bf16.gmra.mxu0 %v2514
      %v2599 = vpop.f32.mrf.mxu0
      %v2600 = vadd.f32 0.0, %v2599
      %v2601 = vpop.f32.mrf.mxu0
      %v2602 = vpop.f32.mrf.mxu0
      %v2603 = vadd.f32 0.0, %v2602
      %v2604 = vpop.f32.mrf.mxu0
      %2605 = vmatprep.mubr.bf16.mxu0 0
      %2606 = vmatmul.mubr.bf16.gmra.mxu0 %v2517
      %v2607 = vpop.f32.mrf.mxu0
      %v2608 = vadd.f32 0.0, %v2607
      %v2609 = vpop.f32.mrf.mxu0
      %v2610 = vpop.f32.mrf.mxu0
      %v2611 = vadd.f32 0.0, %v2610
      %v2612 = vpop.f32.mrf.mxu0
      %2613 = vmatprep.mubr.bf16.mxu0 0
      %2614 = vmatmul.mubr.bf16.gmra.mxu0 %v2520
      %v2615 = vpop.f32.mrf.mxu0
      %v2616 = vadd.f32 0.0, %v2615
      %v2617 = vpop.f32.mrf.mxu0
      %v2618 = vpop.f32.mrf.mxu0
      %v2619 = vadd.f32 0.0, %v2618
      %v2620 = vpop.f32.mrf.mxu0
      %2621 = vdwg.mxu0
      %v2622 = vadd.f32 %v2420, %v2560
      %v2623 = vadd.f32 %v2421, %v2563
      %v2624 = vadd.f32 %v2422, %v2568
      %v2625 = vadd.f32 %v2423, %v2571
      %v2626 = vadd.f32 %v2424, %v2576
      %v2627 = vadd.f32 %v2425, %v2579
      %v2628 = vadd.f32 %v2426, %v2584
      %v2629 = vadd.f32 %v2427, %v2587
      %v2630 = vadd.f32 %v2428, %v2592
      %v2631 = vadd.f32 %v2429, %v2595
      %v2632 = vadd.f32 %v2430, %v2600
      %v2633 = vadd.f32 %v2431, %v2603
      %v2634 = vadd.f32 %v2432, %v2608
      %v2635 = vadd.f32 %v2433, %v2611
      %v2636 = vadd.f32 %v2434, %v2616
      %v2637 = vadd.f32 %v2435, %v2619
      %v2638 = vld [vmem:[%s2439] sm:$0xf]
      %v2639 = vld [vmem:[%s2439 + $0x4] sm:$0xf]
      %v2640 = vld [vmem:[%s2439 + $0x8] sm:$0x1]
      %v2641 = vld [vmem:[%s2439 + $0xc] sm:$0xf]
      %v2642 = vld [vmem:[%s2439 + $0x10] sm:$0xf]
      %v2643 = vld [vmem:[%s2439 + $0x14] sm:$0x1]
      %v2644 = vld [vmem:[%s2439 + $0x18] sm:$0xf]
      %v2645 = vld [vmem:[%s2439 + $0x1c] sm:$0xf]
      %v2646 = vld [vmem:[%s2439 + $0x20] sm:$0x1]
      %v2647 = vld [vmem:[%s2439 + $0x24] sm:$0xf]
      %v2648 = vld [vmem:[%s2439 + $0x28] sm:$0xf]
      %v2649 = vld [vmem:[%s2439 + $0x2c] sm:$0x1]
      %v2650 = vld [vmem:[%s2439 + $0x30] sm:$0xf]
      %v2651 = vld [vmem:[%s2439 + $0x34] sm:$0xf]
      %v2652 = vld [vmem:[%s2439 + $0x38] sm:$0x1]
      %v2653 = vld [vmem:[%s2439 + $0x3c] sm:$0xf]
      %v2654 = vld [vmem:[%s2439 + $0x40] sm:$0xf]
      %v2655 = vld [vmem:[%s2439 + $0x44] sm:$0x1]
      %v2656 = vld [vmem:[%s2439 + $0x48] sm:$0xf]
      %v2657 = vld [vmem:[%s2439 + $0x4c] sm:$0xf]
      %v2658 = vld [vmem:[%s2439 + $0x50] sm:$0x1]
      %v2659 = vld [vmem:[%s2439 + $0x54] sm:$0xf]
      %v2660 = vld [vmem:[%s2439 + $0x58] sm:$0xf]
      %v2661 = vld [vmem:[%s2439 + $0x5c] sm:$0x1]
      %v2663 = vshrl.u32 %v2638, 16
      %v2665 = vrot.slane %v2663, 4
      %v2666 = vshll.u32 %v2638, 16
      %v2668 = vrot.slane %v2666, 5
      %v2669 = vor.u32 %v2665, %v2668
      %v2670 = vrot.slane %v2669, 4
      %v2672 = vshll.u32 %v2639, 16
      %v2674 = vrot.slane %v2672, 5
      %v2675 = vsel %vm840, %v2670, %v2674
      %v2676 = vshrl.u32 %v2639, 16
      %v2678 = vrot.slane %v2676, 4
      %v2679 = vor.u32 %v2678, %v2674
      %v2680 = vrot.slane %v2679, 4
      %v2682 = vshll.u32 %v2640, 16
      %v2684 = vrot.slane %v2682, 5
      %v2685 = vsel %vm840, %v2680, %v2684
      %v2687 = vshrl.u32 %v2641, 16
      %v2689 = vrot.slane %v2687, 4
      %v2690 = vshll.u32 %v2641, 16
      %v2692 = vrot.slane %v2690, 5
      %v2693 = vor.u32 %v2689, %v2692
      %v2694 = vrot.slane %v2693, 4
      %v2696 = vshll.u32 %v2642, 16
      %v2698 = vrot.slane %v2696, 5
      %v2699 = vsel %vm840, %v2694, %v2698
      %v2700 = vshrl.u32 %v2642, 16
      %v2702 = vrot.slane %v2700, 4
      %v2703 = vor.u32 %v2702, %v2698
      %v2704 = vrot.slane %v2703, 4
      %v2706 = vshll.u32 %v2643, 16
      %v2708 = vrot.slane %v2706, 5
      %v2709 = vsel %vm840, %v2704, %v2708
      %v2711 = vshrl.u32 %v2644, 16
      %v2713 = vrot.slane %v2711, 4
      %v2714 = vshll.u32 %v2644, 16
      %v2716 = vrot.slane %v2714, 5
      %v2717 = vor.u32 %v2713, %v2716
      %v2718 = vrot.slane %v2717, 4
      %v2720 = vshll.u32 %v2645, 16
      %v2722 = vrot.slane %v2720, 5
      %v2723 = vsel %vm840, %v2718, %v2722
      %v2724 = vshrl.u32 %v2645, 16
      %v2726 = vrot.slane %v2724, 4
      %v2727 = vor.u32 %v2726, %v2722
      %v2728 = vrot.slane %v2727, 4
      %v2730 = vshll.u32 %v2646, 16
      %v2732 = vrot.slane %v2730, 5
      %v2733 = vsel %vm840, %v2728, %v2732
      %v2735 = vshrl.u32 %v2647, 16
      %v2737 = vrot.slane %v2735, 4
      %v2738 = vshll.u32 %v2647, 16
      %v2740 = vrot.slane %v2738, 5
      %v2741 = vor.u32 %v2737, %v2740
      %v2742 = vrot.slane %v2741, 4
      %v2744 = vshll.u32 %v2648, 16
      %v2746 = vrot.slane %v2744, 5
      %v2747 = vsel %vm840, %v2742, %v2746
      %v2748 = vshrl.u32 %v2648, 16
      %v2750 = vrot.slane %v2748, 4
      %v2751 = vor.u32 %v2750, %v2746
      %v2752 = vrot.slane %v2751, 4
      %v2754 = vshll.u32 %v2649, 16
      %v2756 = vrot.slane %v2754, 5
      %v2757 = vsel %vm840, %v2752, %v2756
      %v2759 = vshrl.u32 %v2650, 16
      %v2761 = vrot.slane %v2759, 4
      %v2762 = vshll.u32 %v2650, 16
      %v2764 = vrot.slane %v2762, 5
      %v2765 = vor.u32 %v2761, %v2764
      %v2766 = vrot.slane %v2765, 4
      %v2768 = vshll.u32 %v2651, 16
      %v2770 = vrot.slane %v2768, 5
      %v2771 = vsel %vm840, %v2766, %v2770
      %v2772 = vshrl.u32 %v2651, 16
      %v2774 = vrot.slane %v2772, 4
      %v2775 = vor.u32 %v2774, %v2770
      %v2776 = vrot.slane %v2775, 4
      %v2778 = vshll.u32 %v2652, 16
      %v2780 = vrot.slane %v2778, 5
      %v2781 = vsel %vm840, %v2776, %v2780
      %v2783 = vshrl.u32 %v2653, 16
      %v2785 = vrot.slane %v2783, 4
      %v2786 = vshll.u32 %v2653, 16
      %v2788 = vrot.slane %v2786, 5
      %v2789 = vor.u32 %v2785, %v2788
      %v2790 = vrot.slane %v2789, 4
      %v2792 = vshll.u32 %v2654, 16
      %v2794 = vrot.slane %v2792, 5
      %v2795 = vsel %vm840, %v2790, %v2794
      %v2796 = vshrl.u32 %v2654, 16
      %v2798 = vrot.slane %v2796, 4
      %v2799 = vor.u32 %v2798, %v2794
      %v2800 = vrot.slane %v2799, 4
      %v2802 = vshll.u32 %v2655, 16
      %v2804 = vrot.slane %v2802, 5
      %v2805 = vsel %vm840, %v2800, %v2804
      %v2807 = vshrl.u32 %v2656, 16
      %v2809 = vrot.slane %v2807, 4
      %v2810 = vshll.u32 %v2656, 16
      %v2812 = vrot.slane %v2810, 5
      %v2813 = vor.u32 %v2809, %v2812
      %v2814 = vrot.slane %v2813, 4
      %v2816 = vshll.u32 %v2657, 16
      %v2818 = vrot.slane %v2816, 5
      %v2819 = vsel %vm840, %v2814, %v2818
      %v2820 = vshrl.u32 %v2657, 16
      %v2822 = vrot.slane %v2820, 4
      %v2823 = vor.u32 %v2822, %v2818
      %v2824 = vrot.slane %v2823, 4
      %v2826 = vshll.u32 %v2658, 16
      %v2828 = vrot.slane %v2826, 5
      %v2829 = vsel %vm840, %v2824, %v2828
      %v2831 = vshrl.u32 %v2659, 16
      %v2833 = vrot.slane %v2831, 4
      %v2834 = vshll.u32 %v2659, 16
      %v2836 = vrot.slane %v2834, 5
      %v2837 = vor.u32 %v2833, %v2836
      %v2838 = vrot.slane %v2837, 4
      %v2840 = vshll.u32 %v2660, 16
      %v2842 = vrot.slane %v2840, 5
      %v2843 = vsel %vm840, %v2838, %v2842
      %v2844 = vshrl.u32 %v2660, 16
      %v2846 = vrot.slane %v2844, 4
      %v2847 = vor.u32 %v2846, %v2842
      %v2848 = vrot.slane %v2847, 4
      %v2850 = vshll.u32 %v2661, 16
      %v2852 = vrot.slane %v2850, 5
      %v2853 = vsel %vm840, %v2848, %v2852
      %s2854 = scalar_lea.vmem %s1, 28
      %v2855 = vld [vmem:[%s2854] sm:$0xf]
      %v2856 = vunpack.c.l.b16 %v2675
      %v2857 = vunpack.c.l.b16 %v2685
      %v2858 = vunpack.c.l.b16 %v2699
      %v2859 = vunpack.c.l.b16 %v2709
      %v2860 = vunpack.c.l.b16 %v2723
      %v2861 = vunpack.c.l.b16 %v2733
      %v2862 = vunpack.c.l.b16 %v2747
      %v2863 = vunpack.c.l.b16 %v2757
      %v2864 = vunpack.c.l.b16 %v2771
      %v2865 = vunpack.c.l.b16 %v2781
      %v2866 = vunpack.c.l.b16 %v2795
      %v2867 = vunpack.c.l.b16 %v2805
      %v2868 = vunpack.c.l.b16 %v2819
      %v2869 = vunpack.c.l.b16 %v2829
      %v2870 = vunpack.c.l.b16 %v2843
      %v2871 = vunpack.c.l.b16 %v2853
      %v2872 = vpack.c.b16 %v2857, %v2856
      %v2873 = vpack.c.b16 %v2859, %v2858
      %v2874 = vpack.c.b16 %v2861, %v2860
      %v2875 = vpack.c.b16 %v2863, %v2862
      %v2876 = vpack.c.b16 %v2865, %v2864
      %v2877 = vpack.c.b16 %v2867, %v2866
      %v2878 = vpack.c.b16 %v2869, %v2868
      %v2879 = vpack.c.b16 %v2871, %v2870
      %v2881 = vsel %vm1059, %v2872, 0
      %v2884 = vsel %vm1059, %v2873, 0
      %v2887 = vsel %vm1059, %v2874, 0
      %v2890 = vsel %vm1059, %v2875, 0
      %v2893 = vsel %vm1059, %v2876, 0
      %v2896 = vsel %vm1059, %v2877, 0
      %v2899 = vsel %vm1059, %v2878, 0
      %v2902 = vsel %vm1059, %v2879, 0
      %v2905 = vsel %vm1084, %v2855, 0
      %2907 = vmatprep.subr.bf16.mxu0 0
      %2908 = vmatpush1.bf16.msra.mxu0 0
      %2909 = vmatprep.subr.bf16.mxu0 0
      %2910 = vmatpush1.bf16.msra.mxu0 0
      %2911 = vmatprep.subr.bf16.mxu0 0
      %2912 = vmatpush1.bf16.msra.mxu0 0
      %2913 = vmatprep.subr.bf16.mxu0 0
      %2914 = vmatpush1.bf16.msra.mxu0 0
      %2915 = vmatprep.subr.bf16.mxu0 0
      %2916 = vmatpush1.bf16.msra.mxu0 0
      %2917 = vmatprep.subr.bf16.mxu0 0
      %2918 = vmatpush1.bf16.msra.mxu0 0
      %2919 = vmatprep.subr.bf16.mxu0 0
      %2920 = vmatpush1.bf16.msra.mxu0 0
      %2921 = vmatprep.subr.bf16.mxu0 0
      %2922 = vmatpush1.bf16.msra.mxu0 %v2905
      %2923 = vmatprep.subr.bf16.mxu0 0
      %2924 = vmatpush2.bf16.msra.mxu0 0
      %2925 = vmatprep.subr.bf16.mxu0 0
      %2926 = vmatpush2.bf16.msra.mxu0 0
      %2927 = vmatprep.subr.bf16.mxu0 0
      %2928 = vmatpush2.bf16.msra.mxu0 0
      %2929 = vmatprep.subr.bf16.mxu0 0
      %2930 = vmatpush2.bf16.msra.mxu0 0
      %2931 = vmatprep.subr.bf16.mxu0 0
      %2932 = vmatpush2.bf16.msra.mxu0 0
      %2933 = vmatprep.subr.bf16.mxu0 0
      %2934 = vmatpush2.bf16.msra.mxu0 0
      %2935 = vmatprep.subr.bf16.mxu0 0
      %2936 = vmatpush2.bf16.msra.mxu0 0
      %2937 = vmatprep.subr.bf16.mxu0 0
      %2938 = vmatpush2.bf16.msra.mxu0 0
      %2939 = vmatprep.mubr.bf16.mxu0 0
      %2940 = vmatmul.mubr.bf16.gmra.mxu0 %v2881
      %v2941 = vpop.f32.mrf.mxu0
      %v2942 = vadd.f32 0.0, %v2941
      %v2943 = vpop.f32.mrf.mxu0
      %v2944 = vpop.f32.mrf.mxu0
      %v2945 = vadd.f32 0.0, %v2944
      %v2946 = vpop.f32.mrf.mxu0
      %2947 = vmatprep.mubr.bf16.mxu0 0
      %2948 = vmatmul.mubr.bf16.gmra.mxu0 %v2884
      %v2949 = vpop.f32.mrf.mxu0
      %v2950 = vadd.f32 0.0, %v2949
      %v2951 = vpop.f32.mrf.mxu0
      %v2952 = vpop.f32.mrf.mxu0
      %v2953 = vadd.f32 0.0, %v2952
      %v2954 = vpop.f32.mrf.mxu0
      %2955 = vmatprep.mubr.bf16.mxu0 0
      %2956 = vmatmul.mubr.bf16.gmra.mxu0 %v2887
      %v2957 = vpop.f32.mrf.mxu0
      %v2958 = vadd.f32 0.0, %v2957
      %v2959 = vpop.f32.mrf.mxu0
      %v2960 = vpop.f32.mrf.mxu0
      %v2961 = vadd.f32 0.0, %v2960
      %v2962 = vpop.f32.mrf.mxu0
      %2963 = vmatprep.mubr.bf16.mxu0 0
      %2964 = vmatmul.mubr.bf16.gmra.mxu0 %v2890
      %v2965 = vpop.f32.mrf.mxu0
      %v2966 = vadd.f32 0.0, %v2965
      %v2967 = vpop.f32.mrf.mxu0
      %v2968 = vpop.f32.mrf.mxu0
      %v2969 = vadd.f32 0.0, %v2968
      %v2970 = vpop.f32.mrf.mxu0
      %2971 = vmatprep.mubr.bf16.mxu0 0
      %2972 = vmatmul.mubr.bf16.gmra.mxu0 %v2893
      %v2973 = vpop.f32.mrf.mxu0
      %v2974 = vadd.f32 0.0, %v2973
      %v2975 = vpop.f32.mrf.mxu0
      %v2976 = vpop.f32.mrf.mxu0
      %v2977 = vadd.f32 0.0, %v2976
      %v2978 = vpop.f32.mrf.mxu0
      %2979 = vmatprep.mubr.bf16.mxu0 0
      %2980 = vmatmul.mubr.bf16.gmra.mxu0 %v2896
      %v2981 = vpop.f32.mrf.mxu0
      %v2982 = vadd.f32 0.0, %v2981
      %v2983 = vpop.f32.mrf.mxu0
      %v2984 = vpop.f32.mrf.mxu0
      %v2985 = vadd.f32 0.0, %v2984
      %v2986 = vpop.f32.mrf.mxu0
      %2987 = vmatprep.mubr.bf16.mxu0 0
      %2988 = vmatmul.mubr.bf16.gmra.mxu0 %v2899
      %v2989 = vpop.f32.mrf.mxu0
      %v2990 = vadd.f32 0.0, %v2989
      %v2991 = vpop.f32.mrf.mxu0
      %v2992 = vpop.f32.mrf.mxu0
      %v2993 = vadd.f32 0.0, %v2992
      %v2994 = vpop.f32.mrf.mxu0
      %2995 = vmatprep.mubr.bf16.mxu0 0
      %2996 = vmatmul.mubr.bf16.gmra.mxu0 %v2902
      %v2997 = vpop.f32.mrf.mxu0
      %v2998 = vadd.f32 0.0, %v2997
      %v2999 = vpop.f32.mrf.mxu0
      %v3000 = vpop.f32.mrf.mxu0
      %v3001 = vadd.f32 0.0, %v3000
      %v3002 = vpop.f32.mrf.mxu0
      %3003 = vdwg.mxu0
      %v3004 = vadd.f32 %v2622, %v2942
      %v3005 = vadd.f32 %v2623, %v2945
      %v3006 = vadd.f32 %v2624, %v2950
      %v3007 = vadd.f32 %v2625, %v2953
      %v3008 = vadd.f32 %v2626, %v2958
      %v3009 = vadd.f32 %v2627, %v2961
      %v3010 = vadd.f32 %v2628, %v2966
      %v3011 = vadd.f32 %v2629, %v2969
      %v3012 = vadd.f32 %v2630, %v2974
      %v3013 = vadd.f32 %v2631, %v2977
      %v3014 = vadd.f32 %v2632, %v2982
      %v3015 = vadd.f32 %v2633, %v2985
      %v3016 = vadd.f32 %v2634, %v2990
      %v3017 = vadd.f32 %v2635, %v2993
      %v3018 = vadd.f32 %v2636, %v2998
      %v3019 = vadd.f32 %v2637, %v3001
      %v3020 = vld [vmem:[%s2439] sm:$0xe]
      %v3021 = vld [vmem:[%s2439 + $0xc] sm:$0xe]
      %v3022 = vld [vmem:[%s2439 + $0x18] sm:$0xe]
      %v3023 = vld [vmem:[%s2439 + $0x24] sm:$0xe]
      %v3024 = vld [vmem:[%s2439 + $0x30] sm:$0xe]
      %v3025 = vld [vmem:[%s2439 + $0x3c] sm:$0xe]
      %v3026 = vld [vmem:[%s2439 + $0x48] sm:$0xe]
      %v3027 = vld [vmem:[%s2439 + $0x54] sm:$0xe]
      %v3052 = vrot.slane %v3020, 5
      %v3053 = vrot.slane %v3052, 4
      %v3054 = vrot.slane %v2639, 5
      %v3055 = vsel %vm1375, %v3053, %v3054
      %v3056 = vrot.slane %v3054, 4
      %v3057 = vrot.slane %v2640, 5
      %v3058 = vsel %vm1375, %v3056, %v3057
      %v3059 = vrot.slane %v3021, 5
      %v3060 = vrot.slane %v3059, 4
      %v3061 = vrot.slane %v2642, 5
      %v3062 = vsel %vm1375, %v3060, %v3061
      %v3063 = vrot.slane %v3061, 4
      %v3064 = vrot.slane %v2643, 5
      %v3065 = vsel %vm1375, %v3063, %v3064
      %v3066 = vrot.slane %v3022, 5
      %v3067 = vrot.slane %v3066, 4
      %v3068 = vrot.slane %v2645, 5
      %v3069 = vsel %vm1375, %v3067, %v3068
      %v3070 = vrot.slane %v3068, 4
      %v3071 = vrot.slane %v2646, 5
      %v3072 = vsel %vm1375, %v3070, %v3071
      %v3073 = vrot.slane %v3023, 5
      %v3074 = vrot.slane %v3073, 4
      %v3075 = vrot.slane %v2648, 5
      %v3076 = vsel %vm1375, %v3074, %v3075
      %v3077 = vrot.slane %v3075, 4
      %v3078 = vrot.slane %v2649, 5
      %v3079 = vsel %vm1375, %v3077, %v3078
      %v3080 = vrot.slane %v3024, 5
      %v3081 = vrot.slane %v3080, 4
      %v3082 = vrot.slane %v2651, 5
      %v3083 = vsel %vm1375, %v3081, %v3082
      %v3084 = vrot.slane %v3082, 4
      %v3085 = vrot.slane %v2652, 5
      %v3086 = vsel %vm1375, %v3084, %v3085
      %v3087 = vrot.slane %v3025, 5
      %v3088 = vrot.slane %v3087, 4
      %v3089 = vrot.slane %v2654, 5
      %v3090 = vsel %vm1375, %v3088, %v3089
      %v3091 = vrot.slane %v3089, 4
      %v3092 = vrot.slane %v2655, 5
      %v3093 = vsel %vm1375, %v3091, %v3092
      %v3094 = vrot.slane %v3026, 5
      %v3095 = vrot.slane %v3094, 4
      %v3096 = vrot.slane %v2657, 5
      %v3097 = vsel %vm1375, %v3095, %v3096
      %v3098 = vrot.slane %v3096, 4
      %v3099 = vrot.slane %v2658, 5
      %v3100 = vsel %vm1375, %v3098, %v3099
      %v3101 = vrot.slane %v3027, 5
      %v3102 = vrot.slane %v3101, 4
      %v3103 = vrot.slane %v2660, 5
      %v3104 = vsel %vm1375, %v3102, %v3103
      %v3105 = vrot.slane %v3103, 4
      %v3106 = vrot.slane %v2661, 5
      %v3107 = vsel %vm1375, %v3105, %v3106
      %s3108 = scalar_lea.vmem %s1, 32
      %v3109 = vld [vmem:[%s3108] sm:$0xf]
      %v3110 = vunpack.c.l.b16 %v3055
      %v3111 = vunpack.c.l.b16 %v3058
      %v3112 = vunpack.c.l.b16 %v3062
      %v3113 = vunpack.c.l.b16 %v3065
      %v3114 = vunpack.c.l.b16 %v3069
      %v3115 = vunpack.c.l.b16 %v3072
      %v3116 = vunpack.c.l.b16 %v3076
      %v3117 = vunpack.c.l.b16 %v3079
      %v3118 = vunpack.c.l.b16 %v3083
      %v3119 = vunpack.c.l.b16 %v3086
      %v3120 = vunpack.c.l.b16 %v3090
      %v3121 = vunpack.c.l.b16 %v3093
      %v3122 = vunpack.c.l.b16 %v3097
      %v3123 = vunpack.c.l.b16 %v3100
      %v3124 = vunpack.c.l.b16 %v3104
      %v3125 = vunpack.c.l.b16 %v3107
      %v3126 = vpack.c.b16 %v3111, %v3110
      %v3127 = vpack.c.b16 %v3113, %v3112
      %v3128 = vpack.c.b16 %v3115, %v3114
      %v3129 = vpack.c.b16 %v3117, %v3116
      %v3130 = vpack.c.b16 %v3119, %v3118
      %v3131 = vpack.c.b16 %v3121, %v3120
      %v3132 = vpack.c.b16 %v3123, %v3122
      %v3133 = vpack.c.b16 %v3125, %v3124
      %v3135 = vsel %vm1059, %v3126, 0
      %v3138 = vsel %vm1059, %v3127, 0
      %v3141 = vsel %vm1059, %v3128, 0
      %v3144 = vsel %vm1059, %v3129, 0
      %v3147 = vsel %vm1059, %v3130, 0
      %v3150 = vsel %vm1059, %v3131, 0
      %v3153 = vsel %vm1059, %v3132, 0
      %v3156 = vsel %vm1059, %v3133, 0
      %v3159 = vsel %vm1084, %v3109, 0
      %3161 = vmatprep.subr.bf16.mxu0 0
      %3162 = vmatpush1.bf16.msra.mxu0 0
      %3163 = vmatprep.subr.bf16.mxu0 0
      %3164 = vmatpush1.bf16.msra.mxu0 0
      %3165 = vmatprep.subr.bf16.mxu0 0
      %3166 = vmatpush1.bf16.msra.mxu0 0
      %3167 = vmatprep.subr.bf16.mxu0 0
      %3168 = vmatpush1.bf16.msra.mxu0 0
      %3169 = vmatprep.subr.bf16.mxu0 0
      %3170 = vmatpush1.bf16.msra.mxu0 0
      %3171 = vmatprep.subr.bf16.mxu0 0
      %3172 = vmatpush1.bf16.msra.mxu0 0
      %3173 = vmatprep.subr.bf16.mxu0 0
      %3174 = vmatpush1.bf16.msra.mxu0 0
      %3175 = vmatprep.subr.bf16.mxu0 0
      %3176 = vmatpush1.bf16.msra.mxu0 %v3159
      %3177 = vmatprep.subr.bf16.mxu0 0
      %3178 = vmatpush2.bf16.msra.mxu0 0
      %3179 = vmatprep.subr.bf16.mxu0 0
      %3180 = vmatpush2.bf16.msra.mxu0 0
      %3181 = vmatprep.subr.bf16.mxu0 0
      %3182 = vmatpush2.bf16.msra.mxu0 0
      %3183 = vmatprep.subr.bf16.mxu0 0
      %3184 = vmatpush2.bf16.msra.mxu0 0
      %3185 = vmatprep.subr.bf16.mxu0 0
      %3186 = vmatpush2.bf16.msra.mxu0 0
      %3187 = vmatprep.subr.bf16.mxu0 0
      %3188 = vmatpush2.bf16.msra.mxu0 0
      %3189 = vmatprep.subr.bf16.mxu0 0
      %3190 = vmatpush2.bf16.msra.mxu0 0
      %3191 = vmatprep.subr.bf16.mxu0 0
      %3192 = vmatpush2.bf16.msra.mxu0 0
      %3193 = vmatprep.mubr.bf16.mxu0 0
      %3194 = vmatmul.mubr.bf16.gmra.mxu0 %v3135
      %v3195 = vpop.f32.mrf.mxu0
      %v3196 = vadd.f32 0.0, %v3195
      %v3197 = vpop.f32.mrf.mxu0
      %v3198 = vpop.f32.mrf.mxu0
      %v3199 = vadd.f32 0.0, %v3198
      %v3200 = vpop.f32.mrf.mxu0
      %3201 = vmatprep.mubr.bf16.mxu0 0
      %3202 = vmatmul.mubr.bf16.gmra.mxu0 %v3138
      %v3203 = vpop.f32.mrf.mxu0
      %v3204 = vadd.f32 0.0, %v3203
      %v3205 = vpop.f32.mrf.mxu0
      %v3206 = vpop.f32.mrf.mxu0
      %v3207 = vadd.f32 0.0, %v3206
      %v3208 = vpop.f32.mrf.mxu0
      %3209 = vmatprep.mubr.bf16.mxu0 0
      %3210 = vmatmul.mubr.bf16.gmra.mxu0 %v3141
      %v3211 = vpop.f32.mrf.mxu0
      %v3212 = vadd.f32 0.0, %v3211
      %v3213 = vpop.f32.mrf.mxu0
      %v3214 = vpop.f32.mrf.mxu0
      %v3215 = vadd.f32 0.0, %v3214
      %v3216 = vpop.f32.mrf.mxu0
      %3217 = vmatprep.mubr.bf16.mxu0 0
      %3218 = vmatmul.mubr.bf16.gmra.mxu0 %v3144
      %v3219 = vpop.f32.mrf.mxu0
      %v3220 = vadd.f32 0.0, %v3219
      %v3221 = vpop.f32.mrf.mxu0
      %v3222 = vpop.f32.mrf.mxu0
      %v3223 = vadd.f32 0.0, %v3222
      %v3224 = vpop.f32.mrf.mxu0
      %3225 = vmatprep.mubr.bf16.mxu0 0
      %3226 = vmatmul.mubr.bf16.gmra.mxu0 %v3147
      %v3227 = vpop.f32.mrf.mxu0
      %v3228 = vadd.f32 0.0, %v3227
      %v3229 = vpop.f32.mrf.mxu0
      %v3230 = vpop.f32.mrf.mxu0
      %v3231 = vadd.f32 0.0, %v3230
      %v3232 = vpop.f32.mrf.mxu0
      %3233 = vmatprep.mubr.bf16.mxu0 0
      %3234 = vmatmul.mubr.bf16.gmra.mxu0 %v3150
      %v3235 = vpop.f32.mrf.mxu0
      %v3236 = vadd.f32 0.0, %v3235
      %v3237 = vpop.f32.mrf.mxu0
      %v3238 = vpop.f32.mrf.mxu0
      %v3239 = vadd.f32 0.0, %v3238
      %v3240 = vpop.f32.mrf.mxu0
      %3241 = vmatprep.mubr.bf16.mxu0 0
      %3242 = vmatmul.mubr.bf16.gmra.mxu0 %v3153
      %v3243 = vpop.f32.mrf.mxu0
      %v3244 = vadd.f32 0.0, %v3243
      %v3245 = vpop.f32.mrf.mxu0
      %v3246 = vpop.f32.mrf.mxu0
      %v3247 = vadd.f32 0.0, %v3246
      %v3248 = vpop.f32.mrf.mxu0
      %3249 = vmatprep.mubr.bf16.mxu0 0
      %3250 = vmatmul.mubr.bf16.gmra.mxu0 %v3156
      %v3251 = vpop.f32.mrf.mxu0
      %v3252 = vadd.f32 0.0, %v3251
      %v3253 = vpop.f32.mrf.mxu0
      %v3254 = vpop.f32.mrf.mxu0
      %v3255 = vadd.f32 0.0, %v3254
      %v3256 = vpop.f32.mrf.mxu0
      %3257 = vdwg.mxu0
      %v3258 = vadd.f32 %v3004, %v3196
      %v3259 = vadd.f32 %v3005, %v3199
      %v3260 = vadd.f32 %v3006, %v3204
      %v3261 = vadd.f32 %v3007, %v3207
      %v3262 = vadd.f32 %v3008, %v3212
      %v3263 = vadd.f32 %v3009, %v3215
      %v3264 = vadd.f32 %v3010, %v3220
      %v3265 = vadd.f32 %v3011, %v3223
      %v3266 = vadd.f32 %v3012, %v3228
      %v3267 = vadd.f32 %v3013, %v3231
      %v3268 = vadd.f32 %v3014, %v3236
      %v3269 = vadd.f32 %v3015, %v3239
      %v3270 = vadd.f32 %v3016, %v3244
      %v3271 = vadd.f32 %v3017, %v3247
      %v3272 = vadd.f32 %v3018, %v3252
      %v3273 = vadd.f32 %v3019, %v3255
      %v3274 = vld [vmem:[%s2] sm:$0x1]
      %v3276 = vlaneseq
      %v3277 = vshrl.u32 %v3276, 7
      %v3278 = vsub.s32 0, %v3277
      %v3279 = vrot.slane %v3274, %v3278
      %v3281 = vmul.f32 %v3258, %v3279
      %v3282 = vmul.f32 %v3259, %v3279
      %v3283 = vmul.f32 %v3260, %v3279
      %v3284 = vmul.f32 %v3261, %v3279
      %v3285 = vmul.f32 %v3262, %v3279
      %v3286 = vmul.f32 %v3263, %v3279
      %v3287 = vmul.f32 %v3264, %v3279
      %v3288 = vmul.f32 %v3265, %v3279
      %v3289 = vmul.f32 %v3266, %v3279
      %v3290 = vmul.f32 %v3267, %v3279
      %v3291 = vmul.f32 %v3268, %v3279
      %v3292 = vmul.f32 %v3269, %v3279
      %v3293 = vmul.f32 %v3270, %v3279
      %v3294 = vmul.f32 %v3271, %v3279
      %v3295 = vmul.f32 %v3272, %v3279
      %v3296 = vmul.f32 %v3273, %v3279
      %v3297 = vld [vmem:[%s3] sm:$0x1]
      %v3299 = vlaneseq
      %v3300 = vshrl.u32 %v3299, 7
      %v3301 = vsub.s32 0, %v3300
      %v3302 = vrot.slane %v3297, %v3301
      %v3304 = vadd.f32 %v3281, %v3302
      %v3305 = vadd.f32 %v3282, %v3302
      %v3306 = vadd.f32 %v3283, %v3302
      %v3307 = vadd.f32 %v3284, %v3302
      %v3308 = vadd.f32 %v3285, %v3302
      %v3309 = vadd.f32 %v3286, %v3302
      %v3310 = vadd.f32 %v3287, %v3302
      %v3311 = vadd.f32 %v3288, %v3302
      %v3312 = vadd.f32 %v3289, %v3302
      %v3313 = vadd.f32 %v3290, %v3302
      %v3314 = vadd.f32 %v3291, %v3302
      %v3315 = vadd.f32 %v3292, %v3302
      %v3316 = vadd.f32 %v3293, %v3302
      %v3317 = vadd.f32 %v3294, %v3302
      %v3318 = vadd.f32 %v3295, %v3302
      %v3319 = vadd.f32 %v3296, %v3302
      %v3320 = vmul.f32 %v3304, 0.1
      %v3321 = vmul.f32 %v3305, 0.1
      %v3322 = vmul.f32 %v3306, 0.1
      %v3323 = vmul.f32 %v3307, 0.1
      %v3324 = vmul.f32 %v3308, 0.1
      %v3325 = vmul.f32 %v3309, 0.1
      %v3326 = vmul.f32 %v3310, 0.1
      %v3327 = vmul.f32 %v3311, 0.1
      %v3328 = vmul.f32 %v3312, 0.1
      %v3329 = vmul.f32 %v3313, 0.1
      %v3330 = vmul.f32 %v3314, 0.1
      %v3331 = vmul.f32 %v3315, 0.1
      %v3332 = vmul.f32 %v3316, 0.1
      %v3333 = vmul.f32 %v3317, 0.1
      %v3334 = vmul.f32 %v3318, 0.1
      %v3335 = vmul.f32 %v3319, 0.1
      %v3336 = vmax.f32 %v3304, %v3320
      %v3337 = vmax.f32 %v3305, %v3321
      %v3338 = vmax.f32 %v3306, %v3322
      %v3339 = vmax.f32 %v3307, %v3323
      %v3340 = vmax.f32 %v3308, %v3324
      %v3341 = vmax.f32 %v3309, %v3325
      %v3342 = vmax.f32 %v3310, %v3326
      %v3343 = vmax.f32 %v3311, %v3327
      %v3344 = vmax.f32 %v3312, %v3328
      %v3345 = vmax.f32 %v3313, %v3329
      %v3346 = vmax.f32 %v3314, %v3330
      %v3347 = vmax.f32 %v3315, %v3331
      %v3348 = vmax.f32 %v3316, %v3332
      %v3349 = vmax.f32 %v3317, %v3333
      %v3350 = vmax.f32 %v3318, %v3334
      %v3351 = vmax.f32 %v3319, %v3335
      %v3352 = vpack.c.bf16 %v3337, %v3336
      %v3353 = vpack.c.bf16 %v3339, %v3338
      %v3354 = vpack.c.bf16 %v3341, %v3340
      %v3355 = vpack.c.bf16 %v3343, %v3342
      %v3356 = vpack.c.bf16 %v3345, %v3344
      %v3357 = vpack.c.bf16 %v3347, %v3346
      %v3358 = vpack.c.bf16 %v3349, %v3348
      %v3359 = vpack.c.bf16 %v3351, %v3350
      %v3360 = vld [vmem:[%s4] sm:$0xf]
      %v3361 = vld [vmem:[%s4 + $0x4] sm:$0xf]
      %v3362 = vld [vmem:[%s4 + $0x8] sm:$0xf]
      %v3363 = vld [vmem:[%s4 + $0xc] sm:$0xf]
      %v3364 = vld [vmem:[%s4 + $0x10] sm:$0xf]
      %v3365 = vld [vmem:[%s4 + $0x14] sm:$0xf]
      %v3366 = vld [vmem:[%s4 + $0x18] sm:$0xf]
      %v3367 = vld [vmem:[%s4 + $0x1c] sm:$0xf]
      %v3368 = vld [vmem:[%s4 + $0x20] sm:$0xf]
      %v3369 = vld [vmem:[%s4 + $0x24] sm:$0xf]
      %v3370 = vld [vmem:[%s4 + $0x28] sm:$0xf]
      %v3371 = vld [vmem:[%s4 + $0x2c] sm:$0xf]
      %v3372 = vld [vmem:[%s4 + $0x30] sm:$0xf]
      %v3373 = vld [vmem:[%s4 + $0x34] sm:$0xf]
      %v3374 = vld [vmem:[%s4 + $0x38] sm:$0xf]
      %v3375 = vld [vmem:[%s4 + $0x3c] sm:$0xf]
      %v3376 = vld [vmem:[%s5] sm:$0x1]
      %v3378 = vlaneseq
      %v3379 = vshrl.u32 %v3378, 7
      %v3380 = vsub.s32 0, %v3379
      %v3381 = vrot.slane %v3376, %v3380
      %v3399 = vunpack.c.l.b16 %v3360
      %v3400 = vunpack.c.l.b16 %v3361
      %v3401 = vunpack.c.l.b16 %v3362
      %v3402 = vunpack.c.l.b16 %v3363
      %v3403 = vunpack.c.l.b16 %v3364
      %v3404 = vunpack.c.l.b16 %v3365
      %v3405 = vunpack.c.l.b16 %v3366
      %v3406 = vunpack.c.l.b16 %v3367
      %v3407 = vunpack.c.l.b16 %v3368
      %v3408 = vunpack.c.l.b16 %v3369
      %v3409 = vunpack.c.l.b16 %v3370
      %v3410 = vunpack.c.l.b16 %v3371
      %v3411 = vunpack.c.l.b16 %v3372
      %v3412 = vunpack.c.l.b16 %v3373
      %v3413 = vunpack.c.l.b16 %v3374
      %v3414 = vunpack.c.l.b16 %v3375
      %v3415 = vpack.c.b16 %v3400, %v3399
      %v3416 = vpack.c.b16 %v3402, %v3401
      %v3417 = vpack.c.b16 %v3404, %v3403
      %v3418 = vpack.c.b16 %v3406, %v3405
      %v3419 = vpack.c.b16 %v3408, %v3407
      %v3420 = vpack.c.b16 %v3410, %v3409
      %v3421 = vpack.c.b16 %v3412, %v3411
      %v3422 = vpack.c.b16 %v3414, %v3413
      %3431 = vmatprep.subr.bf16.mxu0 0
      %3432 = vmatpush1.bf16.msra.mxu0 %v3422
      %3433 = vmatprep.subr.bf16.mxu0 0
      %3434 = vmatpush1.bf16.msra.mxu0 %v3421
      %3435 = vmatprep.subr.bf16.mxu0 0
      %3436 = vmatpush1.bf16.msra.mxu0 %v3420
      %3437 = vmatprep.subr.bf16.mxu0 0
      %3438 = vmatpush1.bf16.msra.mxu0 %v3419
      %3439 = vmatprep.subr.bf16.mxu0 0
      %3440 = vmatpush1.bf16.msra.mxu0 %v3418
      %3441 = vmatprep.subr.bf16.mxu0 0
      %3442 = vmatpush1.bf16.msra.mxu0 %v3417
      %3443 = vmatprep.subr.bf16.mxu0 0
      %3444 = vmatpush1.bf16.msra.mxu0 %v3416
      %3445 = vmatprep.subr.bf16.mxu0 0
      %3446 = vmatpush1.bf16.msra.mxu0 %v3415
      %3447 = vmatprep.subr.bf16.mxu0 0
      %3448 = vmatpush2.bf16.msra.mxu0 0
      %3449 = vmatprep.subr.bf16.mxu0 0
      %3450 = vmatpush2.bf16.msra.mxu0 0
      %3451 = vmatprep.subr.bf16.mxu0 0
      %3452 = vmatpush2.bf16.msra.mxu0 0
      %3453 = vmatprep.subr.bf16.mxu0 0
      %3454 = vmatpush2.bf16.msra.mxu0 0
      %3455 = vmatprep.subr.bf16.mxu0 0
      %3456 = vmatpush2.bf16.msra.mxu0 0
      %3457 = vmatprep.subr.bf16.mxu0 0
      %3458 = vmatpush2.bf16.msra.mxu0 0
      %3459 = vmatprep.subr.bf16.mxu0 0
      %3460 = vmatpush2.bf16.msra.mxu0 0
      %3461 = vmatprep.subr.bf16.mxu0 0
      %3462 = vmatpush2.bf16.msra.mxu0 0
      %3463 = vmatprep.mubr.bf16.mxu0 0
      %3464 = vmatmul.mubr.bf16.gmra.mxu0 %v3352
      %v3465 = vpop.f32.mrf.mxu0
      %v3466 = vadd.f32 %v3381, %v3465
      %v3467 = vpop.f32.mrf.mxu0
      %v3468 = vpop.f32.mrf.mxu0
      %v3469 = vadd.f32 %v3381, %v3468
      %v3470 = vpop.f32.mrf.mxu0
      %3471 = vmatprep.mubr.bf16.mxu0 0
      %3472 = vmatmul.mubr.bf16.gmra.mxu0 %v3353
      %v3473 = vpop.f32.mrf.mxu0
      %v3474 = vadd.f32 %v3381, %v3473
      %v3475 = vpop.f32.mrf.mxu0
      %v3476 = vpop.f32.mrf.mxu0
      %v3477 = vadd.f32 %v3381, %v3476
      %v3478 = vpop.f32.mrf.mxu0
      %3479 = vmatprep.mubr.bf16.mxu0 0
      %3480 = vmatmul.mubr.bf16.gmra.mxu0 %v3354
      %v3481 = vpop.f32.mrf.mxu0
      %v3482 = vadd.f32 %v3381, %v3481
      %v3483 = vpop.f32.mrf.mxu0
      %v3484 = vpop.f32.mrf.mxu0
      %v3485 = vadd.f32 %v3381, %v3484
      %v3486 = vpop.f32.mrf.mxu0
      %3487 = vmatprep.mubr.bf16.mxu0 0
      %3488 = vmatmul.mubr.bf16.gmra.mxu0 %v3355
      %v3489 = vpop.f32.mrf.mxu0
      %v3490 = vadd.f32 %v3381, %v3489
      %v3491 = vpop.f32.mrf.mxu0
      %v3492 = vpop.f32.mrf.mxu0
      %v3493 = vadd.f32 %v3381, %v3492
      %v3494 = vpop.f32.mrf.mxu0
      %3495 = vmatprep.mubr.bf16.mxu0 0
      %3496 = vmatmul.mubr.bf16.gmra.mxu0 %v3356
      %v3497 = vpop.f32.mrf.mxu0
      %v3498 = vadd.f32 %v3381, %v3497
      %v3499 = vpop.f32.mrf.mxu0
      %v3500 = vpop.f32.mrf.mxu0
      %v3501 = vadd.f32 %v3381, %v3500
      %v3502 = vpop.f32.mrf.mxu0
      %3503 = vmatprep.mubr.bf16.mxu0 0
      %3504 = vmatmul.mubr.bf16.gmra.mxu0 %v3357
      %v3505 = vpop.f32.mrf.mxu0
      %v3506 = vadd.f32 %v3381, %v3505
      %v3507 = vpop.f32.mrf.mxu0
      %v3508 = vpop.f32.mrf.mxu0
      %v3509 = vadd.f32 %v3381, %v3508
      %v3510 = vpop.f32.mrf.mxu0
      %3511 = vmatprep.mubr.bf16.mxu0 0
      %3512 = vmatmul.mubr.bf16.gmra.mxu0 %v3358
      %v3513 = vpop.f32.mrf.mxu0
      %v3514 = vadd.f32 %v3381, %v3513
      %v3515 = vpop.f32.mrf.mxu0
      %v3516 = vpop.f32.mrf.mxu0
      %v3517 = vadd.f32 %v3381, %v3516
      %v3518 = vpop.f32.mrf.mxu0
      %3519 = vmatprep.mubr.bf16.mxu0 0
      %3520 = vmatmul.mubr.bf16.gmra.mxu0 %v3359
      %v3521 = vpop.f32.mrf.mxu0
      %v3522 = vadd.f32 %v3381, %v3521
      %v3523 = vpop.f32.mrf.mxu0
      %v3524 = vpop.f32.mrf.mxu0
      %v3525 = vadd.f32 %v3381, %v3524
      %v3526 = vpop.f32.mrf.mxu0
      %3527 = vdwg.mxu0
      %3528 = vst [vmem:[%s273] sm:$0xff] %v3466
      %3529 = vst [vmem:[%s273 + $0x8] sm:$0xff] %v3469
      %3530 = vst [vmem:[%s273 + $0x10] sm:$0xff] %v3474
      %3531 = vst [vmem:[%s273 + $0x18] sm:$0xff] %v3477
      %3532 = vst [vmem:[%s273 + $0x20] sm:$0xff] %v3482
      %3533 = vst [vmem:[%s273 + $0x28] sm:$0xff] %v3485
      %3534 = vst [vmem:[%s273 + $0x30] sm:$0xff] %v3490
      %3535 = vst [vmem:[%s273 + $0x38] sm:$0xff] %v3493
      %3536 = vst [vmem:[%s273 + $0x40] sm:$0xff] %v3498
      %3537 = vst [vmem:[%s273 + $0x48] sm:$0xff] %v3501
      %3538 = vst [vmem:[%s273 + $0x50] sm:$0xff] %v3506
      %3539 = vst [vmem:[%s273 + $0x58] sm:$0xff] %v3509
      %3540 = vst [vmem:[%s273 + $0x60] sm:$0xff] %v3514
      %3541 = vst [vmem:[%s273 + $0x68] sm:$0xff] %v3517
      %3542 = vst [vmem:[%s273 + $0x70] sm:$0xff] %v3522
      %3543 = vst [vmem:[%s273 + $0x78] sm:$0xff] %v3525
      %s3544 = smul.u32 16, %s22
      %p3545 = scmp.lt.s32.totalorder %s21, 1
      %s3546 = scalar_select %p3545, %s21, 1
      %p3547 = scmp.lt.s32.totalorder %s3544, 31
      %s3548 = scalar_select %p3547, %s3544, 31
      %s3549 = smul.addr %s3546, 32
      %s3550 = sadd.s32 %s3548, %s3549
      %s3551 = smul.addr %s3550, 8
      %s3552 = scalar_lea.vmem %s6, %s3551
      // Predicated region
      $region49: #{scale_prediction.1} parent=43 // pred_check
        %p3553 = pneg %p180
      $region50: #{scale_prediction.1} parent=43 // pred_check_branch
        %3555 = sbr.rel (%p3553) target = $region52
      $region51: #{scale_prediction.1} parent=43 // pred_region
        %s3556 = smul.u32 16, %s22
      $region52: #{scale_prediction.1} parent=43 // pred_fallthru
        _
    $region44: #{scale_prediction.1} parent=5 // pred_fallthru
      _
    %p3557 = scmp.le.s32.totalorder 2, %s12
    // Predicated region
    $region53: #{scale_prediction.1} parent=5 // pred_check
      %p3558 = pneg %p3557
    $region54: #{scale_prediction.1} parent=5 // pred_check_branch
      %3560 = sbr.rel (%p3558) target = $region56
    $region55: #{scale_prediction.1} parent=5 // pred_region
      %s3561 = ssub.s32 %s12, 2
      // Predicated region
      $region57: #{scale_prediction.1} parent=55 // pred_check
        %p3562 = pneg %p186
      $region58: #{scale_prediction.1} parent=55 // pred_check_branch
        %3564 = sbr.rel (%p3562) target = $region60
      $region59: #{scale_prediction.1} parent=55 // pred_region
        %s3565 = smul.u32 16, %s24
        %p3566 = scmp.lt.s32.totalorder %s23, 1
        %s3567 = scalar_select %p3566, %s23, 1
        %p3568 = scmp.lt.s32.totalorder %s3565, 31
        %s3569 = scalar_select %p3568, %s3565, 31
        %s3570 = smul.addr %s3567, 32
        %s3571 = sadd.s32 %s3569, %s3570
        %s3572 = smul.addr %s3571, 8
        %s3573 = scalar_lea.vmem %s6, %s3572
      $region60: #{scale_prediction.1} parent=55 // pred_fallthru
        _
    $region56: #{scale_prediction.1} parent=5 // pred_fallthru
      _
  $region6: #{scale_prediction.1} parent=0 // loop_footer
    %s16 = sadd.s32 1, %s12
  $region7: #{scale_prediction.1} parent=0 // loop_footer_branch
    %11 = sbr.rel target = $region3
  $region8: #{scale_prediction.1} parent=0 // loop_exit
    _

</llo_original>
